<compile_context>
chip_gen: v5e
topology: v5e:2x2
jax: 0.10.0
libtpu: 0.0.40
codegen_flags: <defaults>
</compile_context>

<pallas_src>
import functools

import jax
import jax.numpy as jnp
from jax.experimental import pallas as pl
from jax.experimental.pallas import tpu as pltpu  # noqa: F401  (TPU backend)


def _bimgru_kernel(
    vals_ref, masks_ref, d2_ref, m2_ref,
    wd_ref, bd_ref, wm_ref, bm_ref, wbg_ref,
    wout_ref, bout_ref, wz_ref, bz_ref,
    wic_ref, whh_ref, bhh_ref,
    losses_ref, bic_ref, bii_ref,
    *, seq_len, batch, input_size, hidden_size,
):
    T, B, D, H = seq_len, batch, input_size, hidden_size
    f32 = jnp.float32

    vals = vals_ref[...]      # (T, B, D)  time-major
    masks = masks_ref[...]    # (T, B, D)
    d_all = d2_ref[...]       # (T*B, D)   time-major flattened delta
    m_all = m2_ref[...]       # (T*B, D)   time-major flattened masks

    # ----------------- hoisted, hidden-state-independent pre-pass -----------
    # Per-time-step masked-L1 denominators, vectorized; fold 1/denom into the
    # mask so the recurrence has no divides and no cross-lane reductions.
    den = jnp.sum(jnp.sum(masks, axis=2, keepdims=True),
                  axis=1, keepdims=True) + 1e-5                      # (T,1,1)
    m_scaled = masks * (1.0 / den)                                   # (T,B,D)

    # TemporalDecay (gamma_x, gamma_h) for BOTH directions in one matmul.
    gam = jnp.exp(-jnp.maximum(
        jnp.dot(d_all, wd_ref[...], preferred_element_type=f32)
        + bd_ref[...], 0.0))                                         # (T*B, 2(D+H))
    gx = [gam[:, 0:D], gam[:, D + H:2 * D + H]]                      # (T*B, D)
    gdec = [gam[:, D:D + H].reshape(T, B, H),
            gam[:, 2 * D + H:2 * D + 2 * H].reshape(T, B, H)]        # (T, B, H)

    # Mask-dependent half of beta + GRU input gates (+ biases), per direction.
    beta, gim = [], []
    for di in range(2):
        pre_m = (jnp.dot(m_all, wm_ref[di], preferred_element_type=f32)
                 + bm_ref[di])                                       # (T*B, D+3H)
        b_di = (jnp.dot(gx[di], wbg_ref[di], preferred_element_type=f32)
                + pre_m[:, :D])                                      # (T*B, D)
        beta.append(b_di.reshape(T, B, D))
        gim.append(pre_m[:, D:].reshape(T, B, 3 * H))                # (T, B, 3H)

    # Hoist weight loads out of the unrolled recurrence.
    wout = [wout_ref[0], wout_ref[1]]
    bout = [bout_ref[0], bout_ref[1]]
    wz = [wz_ref[0], wz_ref[1]]
    bz = [bz_ref[0], bz_ref[1]]
    wic = [wic_ref[0], wic_ref[1]]
    whh = [whh_ref[0], whh_ref[1]]
    bhh = [bhh_ref[0], bhh_ref[1]]

    # ------------------------------- recurrence ------------------------------
    def mgru_step(t, di, hid, lvec):
        v, m, ms = vals[t], masks[t], m_scaled[t]
        hid = hid * gdec[di][t]
        x_hat = jnp.dot(hid, wout[di], preferred_element_type=f32) + bout[di]
        mv = m * v
        om = 1.0 - m
        x_c = mv + om * x_hat
        z_hat = jnp.dot(x_c, wz[di], preferred_element_type=f32) + bz[di]
        bt = beta[di][t]
        c_hat = bt * z_hat + (1.0 - bt) * x_hat
        c_c = mv + om * c_hat
        # Masked-L1 losses accumulate as a (B, D) vreg accumulator (VPU only).
        lvec = lvec + (jnp.abs(v - x_hat) + jnp.abs(v - z_hat)
                       + jnp.abs(v - c_hat)) * ms
        # GRUCell(concat([c_c, m]), hid): mask half + b_ih hoisted into gim.
        gi = jnp.dot(c_c, wic[di], preferred_element_type=f32) + gim[di][t]
        gh = jnp.dot(hid, whh[di], preferred_element_type=f32) + bhh[di]
        r = jax.nn.sigmoid(gi[:, 0:H] + gh[:, 0:H])
        z = jax.nn.sigmoid(gi[:, H:2 * H] + gh[:, H:2 * H])
        n = jnp.tanh(gi[:, 2 * H:] + r * gh[:, 2 * H:])
        hid = (1.0 - z) * n + z * hid
        return hid, lvec, c_hat, c_c

    hid = [jnp.zeros((B, H), f32), jnp.zeros((B, H), f32)]
    lvec = [jnp.zeros((B, D), f32), jnp.zeros((B, D), f32)]
    chat = [[None] * T, [None] * T]
    ccs = [[None] * T, [None] * T]

    for s in range(T):
        for di in range(2):           # 0 = forward, 1 = backward (reversed walk)
            # Backward direction consumes original time index T-1-s and its
            # result is stored at that index (= backdirect_imputation align).
            t = s if di == 0 else (T - 1 - s)
            hid[di], lvec[di], ch, cc = mgru_step(t, di, hid[di], lvec[di])
            chat[di][t] = ch
            ccs[di][t] = cc

    # ------------------------- combine & single stores -----------------------
    chf = jnp.concatenate(chat[0], axis=1)      # (B, T*D) lane-dense
    chb = jnp.concatenate(chat[1], axis=1)
    ccf = jnp.concatenate(ccs[0], axis=1)
    ccb = jnp.concatenate(ccs[1], axis=1)

    diff = chf - chb
    loss_c = jnp.sum(diff * diff) * (1.0 / float(T * B * D))
    x_loss = jnp.sum(lvec[0])
    back_x_loss = jnp.sum(lvec[1])
    total = x_loss + back_x_loss + loss_c

    bic_ref[...] = (chf + chb) * 0.5
    bii_ref[...] = (ccf + ccb) * 0.5

    z11 = jnp.zeros((1, 1), f32)
    losses_ref[...] = jnp.concatenate(
        [z11 + total, z11 + x_loss, z11 + back_x_loss, z11 + loss_c], axis=1)


def make_mgru_params(key, input_size, hidden_size):
    """Deterministic init mirroring the PyTorch module's reset_parameters,
    returned already transposed / gate-split for the kernel wrapper."""
    D, H = input_size, hidden_size
    keys = jax.random.split(key, 14)

    def u(k, shape, fan):
        bound = 1.0 / (fan ** 0.5)
        return jax.random.uniform(k, shape, jnp.float32, -bound, bound)

    Wx = u(keys[0], (D, D), D)          # temp_decay_x: TemporalDecay(D, D)
    bx = u(keys[1], (D,), D)
    Wh = u(keys[2], (H, D), H)          # temp_decay_h: TemporalDecay(D, H)
    bh = u(keys[3], (H,), H)
    Wout = u(keys[4], (D, H), H)        # output_layer: Linear(H, D)
    bout = u(keys[5], (D,), H)
    Wz = u(keys[6], (D, D), D) * (1.0 - jnp.eye(D, dtype=jnp.float32))
    bz = u(keys[7], (D,), D)            # z_layer: FeatureRegression(D)
    Wbeta = u(keys[8], (D, 2 * D), 2 * D)   # beta_layer: Linear(2D, D)
    bbeta = u(keys[9], (D,), 2 * D)
    Wih = u(keys[10], (3 * H, 2 * D), H)    # grucell: GRUCell(2D, H), gates r,z,n
    bih = u(keys[11], (3 * H,), H)
    Whh = u(keys[12], (3 * H, H), H)
    bhh = u(keys[13], (3 * H,), H)

    wic = jnp.stack([Wih[g * H:(g + 1) * H, :D].T for g in range(3)], axis=0)
    wim = jnp.stack([Wih[g * H:(g + 1) * H, D:].T for g in range(3)], axis=0)
    bih_g = jnp.stack([bih[g * H:(g + 1) * H].reshape(1, H) for g in range(3)], axis=0)
    whh = jnp.stack([Whh[g * H:(g + 1) * H, :].T for g in range(3)], axis=0)
    bhh_g = jnp.stack([bhh[g * H:(g + 1) * H].reshape(1, H) for g in range(3)], axis=0)

    return {
        "wxT": Wx.T, "bx": bx.reshape(1, D),
        "whT": Wh.T, "bh": bh.reshape(1, H),
        "woutT": Wout.T, "bout": bout.reshape(1, D),
        "wzT": Wz.T, "bz": bz.reshape(1, D),
        "wbgT": Wbeta[:, :D].T, "wbmT": Wbeta[:, D:].T, "bbeta": bbeta.reshape(1, D),
        "wic": wic, "wim": wim, "bih": bih_g,
        "whh": whh, "bhh": bhh_g,
    }


def bimgru_forward(dataset, params_f, params_b, hidden_size):
    """BiMGRU_ori.forward.  dataset: [B, 3, T, D] (0=values, 1=delta, 2=masks)."""
    B, _, T, D = dataset.shape
    H = hidden_size

    values = dataset[:, 0]   # (B, T, D)
    delta = dataset[:, 1]
    masks = dataset[:, 2]

    # Time-major so per-step kernel access is a leading-axis index.
    vals_t = jnp.transpose(values, (1, 0, 2))                 # (T, B, D)
    masks_t = jnp.transpose(masks, (1, 0, 2))                 # (T, B, D)
    d2 = jnp.transpose(delta, (1, 0, 2)).reshape(T * B, D)    # (T*B, D)
    m2 = masks_t.reshape(T * B, D)                            # (T*B, D)

    pf, pb = params_f, params_b

    # Fused temporal-decay weights for BOTH directions (N = 2*(D+H) <= 128).
    wd = jnp.concatenate([pf["wxT"], pf["whT"], pb["wxT"], pb["whT"]], axis=1)
    bd = jnp.concatenate([pf["bx"], pf["bh"], pb["bx"], pb["bh"]], axis=1)

    def fuse_dir(p):
        # mask pre-pass: beta mask-half | gim_r | gim_z | gim_n  (N = D+3H)
        wm = jnp.concatenate([p["wbmT"], p["wim"][0], p["wim"][1], p["wim"][2]], axis=1)
        bm = jnp.concatenate([p["bbeta"], p["bih"][0], p["bih"][1], p["bih"][2]], axis=1)
        # fused GRU gate weights (r | z | n)
        wic = jnp.concatenate([p["wic"][0], p["wic"][1], p["wic"][2]], axis=1)   # (D, 3H)
        whh = jnp.concatenate([p["whh"][0], p["whh"][1], p["whh"][2]], axis=1)   # (H, 3H)
        bhh = jnp.concatenate([p["bhh"][0], p["bhh"][1], p["bhh"][2]], axis=1)   # (1, 3H)
        return wm, bm, wic, whh, bhh

    wm_f, bm_f, wic_f, whh_f, bhh_f = fuse_dir(pf)
    wm_b, bm_b, wic_b, whh_b, bhh_b = fuse_dir(pb)

    def stack(a, b):
        return jnp.stack([a, b], axis=0)

    weights = [
        wd, bd,
        stack(wm_f, wm_b), stack(bm_f, bm_b),
        stack(pf["wbgT"], pb["wbgT"]),
        stack(pf["woutT"], pb["woutT"]), stack(pf["bout"], pb["bout"]),
        stack(pf["wzT"], pb["wzT"]), stack(pf["bz"], pb["bz"]),
        stack(wic_f, wic_b), stack(whh_f, whh_b), stack(bhh_f, bhh_b),
    ]

    kernel = functools.partial(
        _bimgru_kernel, seq_len=T, batch=B, input_size=D, hidden_size=H)

    out_shapes = (
        jax.ShapeDtypeStruct((1, 4), jnp.float32),      # [loss, x_loss, bwd x_loss, loss_c]
        jax.ShapeDtypeStruct((B, T * D), jnp.float32),  # bi_c_hat, lane-dense
        jax.ShapeDtypeStruct((B, T * D), jnp.float32),  # bi_imputation, lane-dense
    )

    # Advisory cost estimate for XLA scheduling around the custom call.
    matmul_flops = (
        2 * (T * B) * D * (2 * (D + H))
        + 2 * (2 * (T * B) * D * (D + 3 * H))
        + 2 * (2 * (T * B) * D * D)
        + 2 * T * (2 * B * H * D + 2 * B * D * D + 2 * B * D * 3 * H + 2 * B * H * 3 * H)
    )
    flops = int(matmul_flops + 60 * T * B * D)
    transcendentals = int((T * B) * 2 * (D + H) + 2 * T * 3 * B * H)
    bytes_accessed = int(4 * (5 * T * B * D + sum(int(w.size) for w in weights)
                              + 4 + 2 * B * T * D))

    losses, bic2, bii2 = pl.pallas_call(
        kernel,
        out_shape=out_shapes,
        cost_estimate=pl.CostEstimate(
            flops=flops, transcendentals=transcendentals,
            bytes_accessed=bytes_accessed),
    )(vals_t, masks_t, d2, m2, *weights)

    bi_c_hat = bic2.reshape(B, T, D)        # free reshape, no transpose needed
    bi_imputation = bii2.reshape(B, T, D)
    return (losses[0, 0], losses[0, 1], losses[0, 2], losses[0, 3],
            bi_c_hat, bi_imputation)


if __name__ == "__main__":
    B, T, D, H = 2, 8, 16, 32

    key = jax.random.PRNGKey(0)
    k_val, k_del, k_msk, k_pf, k_pb = jax.random.split(key, 5)

    values = jax.random.normal(k_val, (B, T, D), jnp.float32)
    delta = jax.random.uniform(k_del, (B, T, D), jnp.float32, 0.0, 2.0)
    masks = (jax.random.uniform(k_msk, (B, T, D)) < 0.7).astype(jnp.float32)
    dataset = jnp.stack([values, delta, masks], axis=1)   # [B, 3, T, D]

    params_f = make_mgru_params(k_pf, D, H)
    params_b = make_mgru_params(k_pb, D, H)

    fwd = jax.jit(functools.partial(bimgru_forward, hidden_size=H))
    loss, x_loss, back_x_loss, loss_c, bi_c_hat, bi_imp = jax.block_until_ready(
        fwd(dataset, params_f, params_b))

    assert bi_c_hat.shape == (B, T, D)
    assert bi_imp.shape == (B, T, D)
    assert jnp.isfinite(loss) and jnp.isfinite(x_loss)
    assert jnp.isfinite(back_x_loss) and jnp.isfinite(loss_c)
    print("KERNEL_OK")
</pallas_src>

<mosaic_0001>
module attributes {stable_mosaic.version = 11 : i64} {
  func.func @_bimgru_kernel(%arg0: memref<8x2x16xf32, #tpu.memory_space<vmem>>, %arg1: memref<8x2x16xf32, #tpu.memory_space<vmem>>, %arg2: memref<16x16xf32, #tpu.memory_space<vmem>>, %arg3: memref<16x16xf32, #tpu.memory_space<vmem>>, %arg4: memref<16x96xf32, #tpu.memory_space<vmem>>, %arg5: memref<1x96xf32, #tpu.memory_space<vmem>>, %arg6: memref<2x16x112xf32, #tpu.memory_space<vmem>>, %arg7: memref<2x1x112xf32, #tpu.memory_space<vmem>>, %arg8: memref<2x16x16xf32, #tpu.memory_space<vmem>>, %arg9: memref<2x32x16xf32, #tpu.memory_space<vmem>>, %arg10: memref<2x1x16xf32, #tpu.memory_space<vmem>>, %arg11: memref<2x16x16xf32, #tpu.memory_space<vmem>>, %arg12: memref<2x1x16xf32, #tpu.memory_space<vmem>>, %arg13: memref<2x16x96xf32, #tpu.memory_space<vmem>>, %arg14: memref<2x32x96xf32, #tpu.memory_space<vmem>>, %arg15: memref<2x1x96xf32, #tpu.memory_space<vmem>>, %arg16: memref<1x4xf32, #tpu.memory_space<vmem>>, %arg17: memref<2x128xf32, #tpu.memory_space<vmem>>, %arg18: memref<2x128xf32, #tpu.memory_space<vmem>>) attributes {dimension_semantics = [], scalar_prefetch = 0 : i64, scratch_operands = 0 : i64, tpu.core_type = #tpu.core_type<tc>} {
    %c0 = arith.constant 0 : index
    %c0_0 = arith.constant 0 : index
    %c0_1 = arith.constant 0 : index
    %0 = vector.load %arg0[%c0, %c0_0, %c0_1] : memref<8x2x16xf32, #tpu.memory_space<vmem>>, vector<8x2x16xf32>
    %c0_2 = arith.constant 0 : index
    %c0_3 = arith.constant 0 : index
    %c0_4 = arith.constant 0 : index
    %1 = vector.load %arg1[%c0_2, %c0_3, %c0_4] : memref<8x2x16xf32, #tpu.memory_space<vmem>>, vector<8x2x16xf32>
    %c0_5 = arith.constant 0 : index
    %c0_6 = arith.constant 0 : index
    %2 = vector.load %arg2[%c0_5, %c0_6] : memref<16x16xf32, #tpu.memory_space<vmem>>, vector<16x16xf32>
    %c0_7 = arith.constant 0 : index
    %c0_8 = arith.constant 0 : index
    %3 = vector.load %arg3[%c0_7, %c0_8] : memref<16x16xf32, #tpu.memory_space<vmem>>, vector<16x16xf32>
    %cst = arith.constant dense<0.000000e+00> : vector<8x2xf32>
    %4 = vector.multi_reduction <add>, %1, %cst [2] : vector<8x2x16xf32> to vector<8x2xf32>
    %5 = vector.shape_cast %4 : vector<8x2xf32> to vector<8x2x1xf32>
    %cst_9 = arith.constant dense<0.000000e+00> : vector<8x1xf32>
    %6 = vector.multi_reduction <add>, %5, %cst_9 [1] : vector<8x2x1xf32> to vector<8x1xf32>
    %7 = vector.shape_cast %6 : vector<8x1xf32> to vector<8x1x1xf32>
    %cst_10 = arith.constant 9.99999974E-6 : f32
    %8 = vector.broadcast %cst_10 : f32 to vector<8x1x1xf32>
    %9 = arith.addf %7, %8 : vector<8x1x1xf32>
    %cst_11 = arith.constant 1.000000e+00 : f32
    %10 = vector.broadcast %cst_11 : f32 to vector<8x1x1xf32>
    %11 = arith.divf %10, %9 : vector<8x1x1xf32>
    %12 = vector.broadcast %11 : vector<8x1x1xf32> to vector<8x2x16xf32>
    %13 = arith.mulf %1, %12 : vector<8x2x16xf32>
    %c0_12 = arith.constant 0 : index
    %c0_13 = arith.constant 0 : index
    %14 = vector.load %arg4[%c0_12, %c0_13] : memref<16x96xf32, #tpu.memory_space<vmem>>, vector<16x96xf32>
    %cst_14 = arith.constant dense<0.000000e+00> : vector<16x96xf32>
    %15 = tpu.matmul %2, %14, %cst_14 {dimension_numbers = #tpu.dot_dimension_numbers<[1], [0], [0], [1], [0, 0, 1, 1], [], []>} : vector<16x16xf32>, vector<16x96xf32>, vector<16x96xf32> -> vector<16x96xf32>
    %c0_15 = arith.constant 0 : index
    %c0_16 = arith.constant 0 : index
    %16 = vector.load %arg5[%c0_15, %c0_16] : memref<1x96xf32, #tpu.memory_space<vmem>>, vector<1x96xf32>
    %17 = vector.broadcast %16 : vector<1x96xf32> to vector<16x96xf32>
    %18 = arith.addf %15, %17 : vector<16x96xf32>
    %cst_17 = arith.constant 0.000000e+00 : f32
    %19 = vector.broadcast %cst_17 : f32 to vector<16x96xf32>
    %20 = arith.maximumf %18, %19 : vector<16x96xf32>
    %cst_18 = arith.constant 0.000000e+00 : f32
    %21 = vector.broadcast %cst_18 : f32 to vector<16x96xf32>
    %22 = arith.subf %21, %20 : vector<16x96xf32>
    %23 = math.exp %22 : vector<16x96xf32>
    %24 = vector.extract_strided_slice %23 {offsets = [0, 0], sizes = [16, 16], strides = [1, 1]} : vector<16x96xf32> to vector<16x16xf32>
    %25 = vector.extract_strided_slice %23 {offsets = [0, 48], sizes = [16, 16], strides = [1, 1]} : vector<16x96xf32> to vector<16x16xf32>
    %26 = vector.extract_strided_slice %23 {offsets = [0, 16], sizes = [16, 32], strides = [1, 1]} : vector<16x96xf32> to vector<16x32xf32>
    %27 = vector.shape_cast %26 : vector<16x32xf32> to vector<8x2x32xf32>
    %28 = vector.extract_strided_slice %23 {offsets = [0, 64], sizes = [16, 32], strides = [1, 1]} : vector<16x96xf32> to vector<16x32xf32>
    %29 = vector.shape_cast %28 : vector<16x32xf32> to vector<8x2x32xf32>
    %c0_19 = arith.constant 0 : index
    %c0_20 = arith.constant 0 : index
    %c0_21 = arith.constant 0 : index
    %30 = vector.load %arg6[%c0_19, %c0_20, %c0_21] : memref<2x16x112xf32, #tpu.memory_space<vmem>>, vector<1x16x112xf32>
    %31 = vector.shape_cast %30 : vector<1x16x112xf32> to vector<16x112xf32>
    %cst_22 = arith.constant dense<0.000000e+00> : vector<16x112xf32>
    %32 = tpu.matmul %3, %31, %cst_22 {dimension_numbers = #tpu.dot_dimension_numbers<[1], [0], [0], [1], [0, 0, 1, 1], [], []>} : vector<16x16xf32>, vector<16x112xf32>, vector<16x112xf32> -> vector<16x112xf32>
    %c0_23 = arith.constant 0 : index
    %c0_24 = arith.constant 0 : index
    %c0_25 = arith.constant 0 : index
    %33 = vector.load %arg7[%c0_23, %c0_24, %c0_25] : memref<2x1x112xf32, #tpu.memory_space<vmem>>, vector<1x1x112xf32>
    %34 = vector.shape_cast %33 : vector<1x1x112xf32> to vector<1x112xf32>
    %35 = vector.broadcast %34 : vector<1x112xf32> to vector<16x112xf32>
    %36 = arith.addf %32, %35 : vector<16x112xf32>
    %c0_26 = arith.constant 0 : index
    %c0_27 = arith.constant 0 : index
    %c0_28 = arith.constant 0 : index
    %37 = vector.load %arg8[%c0_26, %c0_27, %c0_28] : memref<2x16x16xf32, #tpu.memory_space<vmem>>, vector<1x16x16xf32>
    %38 = vector.shape_cast %37 : vector<1x16x16xf32> to vector<16x16xf32>
    %cst_29 = arith.constant dense<0.000000e+00> : vector<16x16xf32>
    %39 = tpu.matmul %24, %38, %cst_29 {dimension_numbers = #tpu.dot_dimension_numbers<[1], [0], [0], [1], [0, 0, 1, 1], [], []>} : vector<16x16xf32>, vector<16x16xf32>, vector<16x16xf32> -> vector<16x16xf32>
    %40 = vector.extract_strided_slice %36 {offsets = [0, 0], sizes = [16, 16], strides = [1, 1]} : vector<16x112xf32> to vector<16x16xf32>
    %41 = arith.addf %39, %40 : vector<16x16xf32>
    %42 = vector.shape_cast %41 : vector<16x16xf32> to vector<8x2x16xf32>
    %43 = vector.extract_strided_slice %36 {offsets = [0, 16], sizes = [16, 96], strides = [1, 1]} : vector<16x112xf32> to vector<16x96xf32>
    %44 = vector.shape_cast %43 : vector<16x96xf32> to vector<8x2x96xf32>
    %c1 = arith.constant 1 : index
    %c0_30 = arith.constant 0 : index
    %c0_31 = arith.constant 0 : index
    %45 = vector.load %arg6[%c1, %c0_30, %c0_31] : memref<2x16x112xf32, #tpu.memory_space<vmem>>, vector<1x16x112xf32>
    %46 = vector.shape_cast %45 : vector<1x16x112xf32> to vector<16x112xf32>
    %cst_32 = arith.constant dense<0.000000e+00> : vector<16x112xf32>
    %47 = tpu.matmul %3, %46, %cst_32 {dimension_numbers = #tpu.dot_dimension_numbers<[1], [0], [0], [1], [0, 0, 1, 1], [], []>} : vector<16x16xf32>, vector<16x112xf32>, vector<16x112xf32> -> vector<16x112xf32>
    %c1_33 = arith.constant 1 : index
    %c0_34 = arith.constant 0 : index
    %c0_35 = arith.constant 0 : index
    %48 = vector.load %arg7[%c1_33, %c0_34, %c0_35] : memref<2x1x112xf32, #tpu.memory_space<vmem>>, vector<1x1x112xf32>
    %49 = vector.shape_cast %48 : vector<1x1x112xf32> to vector<1x112xf32>
    %50 = vector.broadcast %49 : vector<1x112xf32> to vector<16x112xf32>
    %51 = arith.addf %47, %50 : vector<16x112xf32>
    %c1_36 = arith.constant 1 : index
    %c0_37 = arith.constant 0 : index
    %c0_38 = arith.constant 0 : index
    %52 = vector.load %arg8[%c1_36, %c0_37, %c0_38] : memref<2x16x16xf32, #tpu.memory_space<vmem>>, vector<1x16x16xf32>
    %53 = vector.shape_cast %52 : vector<1x16x16xf32> to vector<16x16xf32>
    %cst_39 = arith.constant dense<0.000000e+00> : vector<16x16xf32>
    %54 = tpu.matmul %25, %53, %cst_39 {dimension_numbers = #tpu.dot_dimension_numbers<[1], [0], [0], [1], [0, 0, 1, 1], [], []>} : vector<16x16xf32>, vector<16x16xf32>, vector<16x16xf32> -> vector<16x16xf32>
    %55 = vector.extract_strided_slice %51 {offsets = [0, 0], sizes = [16, 16], strides = [1, 1]} : vector<16x112xf32> to vector<16x16xf32>
    %56 = arith.addf %54, %55 : vector<16x16xf32>
    %57 = vector.shape_cast %56 : vector<16x16xf32> to vector<8x2x16xf32>
    %58 = vector.extract_strided_slice %51 {offsets = [0, 16], sizes = [16, 96], strides = [1, 1]} : vector<16x112xf32> to vector<16x96xf32>
    %59 = vector.shape_cast %58 : vector<16x96xf32> to vector<8x2x96xf32>
    %c0_40 = arith.constant 0 : index
    %c0_41 = arith.constant 0 : index
    %c0_42 = arith.constant 0 : index
    %60 = vector.load %arg9[%c0_40, %c0_41, %c0_42] : memref<2x32x16xf32, #tpu.memory_space<vmem>>, vector<1x32x16xf32>
    %61 = vector.shape_cast %60 : vector<1x32x16xf32> to vector<32x16xf32>
    %c1_43 = arith.constant 1 : index
    %c0_44 = arith.constant 0 : index
    %c0_45 = arith.constant 0 : index
    %62 = vector.load %arg9[%c1_43, %c0_44, %c0_45] : memref<2x32x16xf32, #tpu.memory_space<vmem>>, vector<1x32x16xf32>
    %63 = vector.shape_cast %62 : vector<1x32x16xf32> to vector<32x16xf32>
    %c0_46 = arith.constant 0 : index
    %c0_47 = arith.constant 0 : index
    %c0_48 = arith.constant 0 : index
    %64 = vector.load %arg10[%c0_46, %c0_47, %c0_48] : memref<2x1x16xf32, #tpu.memory_space<vmem>>, vector<1x1x16xf32>
    %65 = vector.shape_cast %64 : vector<1x1x16xf32> to vector<1x16xf32>
    %c1_49 = arith.constant 1 : index
    %c0_50 = arith.constant 0 : index
    %c0_51 = arith.constant 0 : index
    %66 = vector.load %arg10[%c1_49, %c0_50, %c0_51] : memref<2x1x16xf32, #tpu.memory_space<vmem>>, vector<1x1x16xf32>
    %67 = vector.shape_cast %66 : vector<1x1x16xf32> to vector<1x16xf32>
    %c0_52 = arith.constant 0 : index
    %c0_53 = arith.constant 0 : index
    %c0_54 = arith.constant 0 : index
    %68 = vector.load %arg11[%c0_52, %c0_53, %c0_54] : memref<2x16x16xf32, #tpu.memory_space<vmem>>, vector<1x16x16xf32>
    %69 = vector.shape_cast %68 : vector<1x16x16xf32> to vector<16x16xf32>
    %c1_55 = arith.constant 1 : index
    %c0_56 = arith.constant 0 : index
    %c0_57 = arith.constant 0 : index
    %70 = vector.load %arg11[%c1_55, %c0_56, %c0_57] : memref<2x16x16xf32, #tpu.memory_space<vmem>>, vector<1x16x16xf32>
    %71 = vector.shape_cast %70 : vector<1x16x16xf32> to vector<16x16xf32>
    %c0_58 = arith.constant 0 : index
    %c0_59 = arith.constant 0 : index
    %c0_60 = arith.constant 0 : index
    %72 = vector.load %arg12[%c0_58, %c0_59, %c0_60] : memref<2x1x16xf32, #tpu.memory_space<vmem>>, vector<1x1x16xf32>
    %73 = vector.shape_cast %72 : vector<1x1x16xf32> to vector<1x16xf32>
    %c1_61 = arith.constant 1 : index
    %c0_62 = arith.constant 0 : index
    %c0_63 = arith.constant 0 : index
    %74 = vector.load %arg12[%c1_61, %c0_62, %c0_63] : memref<2x1x16xf32, #tpu.memory_space<vmem>>, vector<1x1x16xf32>
    %75 = vector.shape_cast %74 : vector<1x1x16xf32> to vector<1x16xf32>
    %c0_64 = arith.constant 0 : index
    %c0_65 = arith.constant 0 : index
    %c0_66 = arith.constant 0 : index
    %76 = vector.load %arg13[%c0_64, %c0_65, %c0_66] : memref<2x16x96xf32, #tpu.memory_space<vmem>>, vector<1x16x96xf32>
    %77 = vector.shape_cast %76 : vector<1x16x96xf32> to vector<16x96xf32>
    %c1_67 = arith.constant 1 : index
    %c0_68 = arith.constant 0 : index
    %c0_69 = arith.constant 0 : index
    %78 = vector.load %arg13[%c1_67, %c0_68, %c0_69] : memref<2x16x96xf32, #tpu.memory_space<vmem>>, vector<1x16x96xf32>
    %79 = vector.shape_cast %78 : vector<1x16x96xf32> to vector<16x96xf32>
    %c0_70 = arith.constant 0 : index
    %c0_71 = arith.constant 0 : index
    %c0_72 = arith.constant 0 : index
    %80 = vector.load %arg14[%c0_70, %c0_71, %c0_72] : memref<2x32x96xf32, #tpu.memory_space<vmem>>, vector<1x32x96xf32>
    %81 = vector.shape_cast %80 : vector<1x32x96xf32> to vector<32x96xf32>
    %c1_73 = arith.constant 1 : index
    %c0_74 = arith.constant 0 : index
    %c0_75 = arith.constant 0 : index
    %82 = vector.load %arg14[%c1_73, %c0_74, %c0_75] : memref<2x32x96xf32, #tpu.memory_space<vmem>>, vector<1x32x96xf32>
    %83 = vector.shape_cast %82 : vector<1x32x96xf32> to vector<32x96xf32>
    %c0_76 = arith.constant 0 : index
    %c0_77 = arith.constant 0 : index
    %c0_78 = arith.constant 0 : index
    %84 = vector.load %arg15[%c0_76, %c0_77, %c0_78] : memref<2x1x96xf32, #tpu.memory_space<vmem>>, vector<1x1x96xf32>
    %85 = vector.shape_cast %84 : vector<1x1x96xf32> to vector<1x96xf32>
    %c1_79 = arith.constant 1 : index
    %c0_80 = arith.constant 0 : index
    %c0_81 = arith.constant 0 : index
    %86 = vector.load %arg15[%c1_79, %c0_80, %c0_81] : memref<2x1x96xf32, #tpu.memory_space<vmem>>, vector<1x1x96xf32>
    %87 = vector.shape_cast %86 : vector<1x1x96xf32> to vector<1x96xf32>
    %cst_82 = arith.constant 0.000000e+00 : f32
    %88 = vector.broadcast %cst_82 : f32 to vector<2x32xf32>
    %cst_83 = arith.constant 0.000000e+00 : f32
    %89 = vector.broadcast %cst_83 : f32 to vector<2x32xf32>
    %cst_84 = arith.constant 0.000000e+00 : f32
    %90 = vector.broadcast %cst_84 : f32 to vector<2x16xf32>
    %cst_85 = arith.constant 0.000000e+00 : f32
    %91 = vector.broadcast %cst_85 : f32 to vector<2x16xf32>
    %92 = vector.extract_strided_slice %0 {offsets = [0, 0, 0], sizes = [1, 2, 16], strides = [1, 1, 1]} : vector<8x2x16xf32> to vector<1x2x16xf32>
    %93 = vector.shape_cast %92 : vector<1x2x16xf32> to vector<2x16xf32>
    %94 = vector.extract_strided_slice %1 {offsets = [0, 0, 0], sizes = [1, 2, 16], strides = [1, 1, 1]} : vector<8x2x16xf32> to vector<1x2x16xf32>
    %95 = vector.shape_cast %94 : vector<1x2x16xf32> to vector<2x16xf32>
    %96 = vector.extract_strided_slice %13 {offsets = [0, 0, 0], sizes = [1, 2, 16], strides = [1, 1, 1]} : vector<8x2x16xf32> to vector<1x2x16xf32>
    %97 = vector.shape_cast %96 : vector<1x2x16xf32> to vector<2x16xf32>
    %98 = vector.extract_strided_slice %27 {offsets = [0, 0, 0], sizes = [1, 2, 32], strides = [1, 1, 1]} : vector<8x2x32xf32> to vector<1x2x32xf32>
    %99 = vector.shape_cast %98 : vector<1x2x32xf32> to vector<2x32xf32>
    %100 = arith.mulf %88, %99 : vector<2x32xf32>
    %cst_86 = arith.constant dense<0.000000e+00> : vector<2x16xf32>
    %101 = tpu.matmul %100, %61, %cst_86 {dimension_numbers = #tpu.dot_dimension_numbers<[1], [0], [0], [1], [0, 0, 1, 1], [], []>} : vector<2x32xf32>, vector<32x16xf32>, vector<2x16xf32> -> vector<2x16xf32>
    %102 = vector.broadcast %65 : vector<1x16xf32> to vector<2x16xf32>
    %103 = arith.addf %101, %102 : vector<2x16xf32>
    %104 = arith.mulf %95, %93 : vector<2x16xf32>
    %cst_87 = arith.constant 1.000000e+00 : f32
    %105 = vector.broadcast %cst_87 : f32 to vector<2x16xf32>
    %106 = arith.subf %105, %95 : vector<2x16xf32>
    %107 = arith.mulf %106, %103 : vector<2x16xf32>
    %108 = arith.addf %104, %107 : vector<2x16xf32>
    %cst_88 = arith.constant dense<0.000000e+00> : vector<2x16xf32>
    %109 = tpu.matmul %108, %69, %cst_88 {dimension_numbers = #tpu.dot_dimension_numbers<[1], [0], [0], [1], [0, 0, 1, 1], [], []>} : vector<2x16xf32>, vector<16x16xf32>, vector<2x16xf32> -> vector<2x16xf32>
    %110 = vector.broadcast %73 : vector<1x16xf32> to vector<2x16xf32>
    %111 = arith.addf %109, %110 : vector<2x16xf32>
    %112 = vector.extract_strided_slice %42 {offsets = [0, 0, 0], sizes = [1, 2, 16], strides = [1, 1, 1]} : vector<8x2x16xf32> to vector<1x2x16xf32>
    %113 = vector.shape_cast %112 : vector<1x2x16xf32> to vector<2x16xf32>
    %114 = arith.mulf %113, %111 : vector<2x16xf32>
    %cst_89 = arith.constant 1.000000e+00 : f32
    %115 = vector.broadcast %cst_89 : f32 to vector<2x16xf32>
    %116 = arith.subf %115, %113 : vector<2x16xf32>
    %117 = arith.mulf %116, %103 : vector<2x16xf32>
    %118 = arith.addf %114, %117 : vector<2x16xf32>
    %119 = arith.mulf %106, %118 : vector<2x16xf32>
    %120 = arith.addf %104, %119 : vector<2x16xf32>
    %121 = arith.subf %93, %103 : vector<2x16xf32>
    %122 = math.absf %121 : vector<2x16xf32>
    %123 = arith.subf %93, %111 : vector<2x16xf32>
    %124 = math.absf %123 : vector<2x16xf32>
    %125 = arith.addf %122, %124 : vector<2x16xf32>
    %126 = arith.subf %93, %118 : vector<2x16xf32>
    %127 = math.absf %126 : vector<2x16xf32>
    %128 = arith.addf %125, %127 : vector<2x16xf32>
    %129 = arith.mulf %128, %97 : vector<2x16xf32>
    %130 = arith.addf %90, %129 : vector<2x16xf32>
    %cst_90 = arith.constant dense<0.000000e+00> : vector<2x96xf32>
    %131 = tpu.matmul %120, %77, %cst_90 {dimension_numbers = #tpu.dot_dimension_numbers<[1], [0], [0], [1], [0, 0, 1, 1], [], []>} : vector<2x16xf32>, vector<16x96xf32>, vector<2x96xf32> -> vector<2x96xf32>
    %132 = vector.extract_strided_slice %44 {offsets = [0, 0, 0], sizes = [1, 2, 96], strides = [1, 1, 1]} : vector<8x2x96xf32> to vector<1x2x96xf32>
    %133 = vector.shape_cast %132 : vector<1x2x96xf32> to vector<2x96xf32>
    %134 = arith.addf %131, %133 : vector<2x96xf32>
    %cst_91 = arith.constant dense<0.000000e+00> : vector<2x96xf32>
    %135 = tpu.matmul %100, %81, %cst_91 {dimension_numbers = #tpu.dot_dimension_numbers<[1], [0], [0], [1], [0, 0, 1, 1], [], []>} : vector<2x32xf32>, vector<32x96xf32>, vector<2x96xf32> -> vector<2x96xf32>
    %136 = vector.broadcast %85 : vector<1x96xf32> to vector<2x96xf32>
    %137 = arith.addf %135, %136 : vector<2x96xf32>
    %138 = vector.extract_strided_slice %134 {offsets = [0, 0], sizes = [2, 32], strides = [1, 1]} : vector<2x96xf32> to vector<2x32xf32>
    %139 = vector.extract_strided_slice %137 {offsets = [0, 0], sizes = [2, 32], strides = [1, 1]} : vector<2x96xf32> to vector<2x32xf32>
    %140 = arith.addf %138, %139 : vector<2x32xf32>
    %141 = arith.negf %140 : vector<2x32xf32>
    %142 = math.exp %141 : vector<2x32xf32>
    %cst_92 = arith.constant 1.000000e+00 : f32
    %143 = vector.broadcast %cst_92 : f32 to vector<2x32xf32>
    %144 = arith.addf %143, %142 : vector<2x32xf32>
    %145 = arith.divf %143, %144 : vector<2x32xf32>
    %146 = vector.extract_strided_slice %134 {offsets = [0, 32], sizes = [2, 32], strides = [1, 1]} : vector<2x96xf32> to vector<2x32xf32>
    %147 = vector.extract_strided_slice %137 {offsets = [0, 32], sizes = [2, 32], strides = [1, 1]} : vector<2x96xf32> to vector<2x32xf32>
    %148 = arith.addf %146, %147 : vector<2x32xf32>
    %149 = arith.negf %148 : vector<2x32xf32>
    %150 = math.exp %149 : vector<2x32xf32>
    %cst_93 = arith.constant 1.000000e+00 : f32
    %151 = vector.broadcast %cst_93 : f32 to vector<2x32xf32>
    %152 = arith.addf %151, %150 : vector<2x32xf32>
    %153 = arith.divf %151, %152 : vector<2x32xf32>
    %154 = vector.extract_strided_slice %134 {offsets = [0, 64], sizes = [2, 32], strides = [1, 1]} : vector<2x96xf32> to vector<2x32xf32>
    %155 = vector.extract_strided_slice %137 {offsets = [0, 64], sizes = [2, 32], strides = [1, 1]} : vector<2x96xf32> to vector<2x32xf32>
    %156 = arith.mulf %145, %155 : vector<2x32xf32>
    %157 = arith.addf %154, %156 : vector<2x32xf32>
    %158 = math.tanh %157 : vector<2x32xf32>
    %cst_94 = arith.constant 1.000000e+00 : f32
    %159 = vector.broadcast %cst_94 : f32 to vector<2x32xf32>
    %160 = arith.subf %159, %153 : vector<2x32xf32>
    %161 = arith.mulf %160, %158 : vector<2x32xf32>
    %162 = arith.mulf %153, %100 : vector<2x32xf32>
    %163 = arith.addf %161, %162 : vector<2x32xf32>
    %164 = vector.extract_strided_slice %0 {offsets = [7, 0, 0], sizes = [1, 2, 16], strides = [1, 1, 1]} : vector<8x2x16xf32> to vector<1x2x16xf32>
    %165 = vector.shape_cast %164 : vector<1x2x16xf32> to vector<2x16xf32>
    %166 = vector.extract_strided_slice %1 {offsets = [7, 0, 0], sizes = [1, 2, 16], strides = [1, 1, 1]} : vector<8x2x16xf32> to vector<1x2x16xf32>
    %167 = vector.shape_cast %166 : vector<1x2x16xf32> to vector<2x16xf32>
    %168 = vector.extract_strided_slice %13 {offsets = [7, 0, 0], sizes = [1, 2, 16], strides = [1, 1, 1]} : vector<8x2x16xf32> to vector<1x2x16xf32>
    %169 = vector.shape_cast %168 : vector<1x2x16xf32> to vector<2x16xf32>
    %170 = vector.extract_strided_slice %29 {offsets = [7, 0, 0], sizes = [1, 2, 32], strides = [1, 1, 1]} : vector<8x2x32xf32> to vector<1x2x32xf32>
    %171 = vector.shape_cast %170 : vector<1x2x32xf32> to vector<2x32xf32>
    %172 = arith.mulf %89, %171 : vector<2x32xf32>
    %cst_95 = arith.constant dense<0.000000e+00> : vector<2x16xf32>
    %173 = tpu.matmul %172, %63, %cst_95 {dimension_numbers = #tpu.dot_dimension_numbers<[1], [0], [0], [1], [0, 0, 1, 1], [], []>} : vector<2x32xf32>, vector<32x16xf32>, vector<2x16xf32> -> vector<2x16xf32>
    %174 = vector.broadcast %67 : vector<1x16xf32> to vector<2x16xf32>
    %175 = arith.addf %173, %174 : vector<2x16xf32>
    %176 = arith.mulf %167, %165 : vector<2x16xf32>
    %cst_96 = arith.constant 1.000000e+00 : f32
    %177 = vector.broadcast %cst_96 : f32 to vector<2x16xf32>
    %178 = arith.subf %177, %167 : vector<2x16xf32>
    %179 = arith.mulf %178, %175 : vector<2x16xf32>
    %180 = arith.addf %176, %179 : vector<2x16xf32>
    %cst_97 = arith.constant dense<0.000000e+00> : vector<2x16xf32>
    %181 = tpu.matmul %180, %71, %cst_97 {dimension_numbers = #tpu.dot_dimension_numbers<[1], [0], [0], [1], [0, 0, 1, 1], [], []>} : vector<2x16xf32>, vector<16x16xf32>, vector<2x16xf32> -> vector<2x16xf32>
    %182 = vector.broadcast %75 : vector<1x16xf32> to vector<2x16xf32>
    %183 = arith.addf %181, %182 : vector<2x16xf32>
    %184 = vector.extract_strided_slice %57 {offsets = [7, 0, 0], sizes = [1, 2, 16], strides = [1, 1, 1]} : vector<8x2x16xf32> to vector<1x2x16xf32>
    %185 = vector.shape_cast %184 : vector<1x2x16xf32> to vector<2x16xf32>
    %186 = arith.mulf %185, %183 : vector<2x16xf32>
    %cst_98 = arith.constant 1.000000e+00 : f32
    %187 = vector.broadcast %cst_98 : f32 to vector<2x16xf32>
    %188 = arith.subf %187, %185 : vector<2x16xf32>
    %189 = arith.mulf %188, %175 : vector<2x16xf32>
    %190 = arith.addf %186, %189 : vector<2x16xf32>
    %191 = arith.mulf %178, %190 : vector<2x16xf32>
    %192 = arith.addf %176, %191 : vector<2x16xf32>
    %193 = arith.subf %165, %175 : vector<2x16xf32>
    %194 = math.absf %193 : vector<2x16xf32>
    %195 = arith.subf %165, %183 : vector<2x16xf32>
    %196 = math.absf %195 : vector<2x16xf32>
    %197 = arith.addf %194, %196 : vector<2x16xf32>
    %198 = arith.subf %165, %190 : vector<2x16xf32>
    %199 = math.absf %198 : vector<2x16xf32>
    %200 = arith.addf %197, %199 : vector<2x16xf32>
    %201 = arith.mulf %200, %169 : vector<2x16xf32>
    %202 = arith.addf %91, %201 : vector<2x16xf32>
    %cst_99 = arith.constant dense<0.000000e+00> : vector<2x96xf32>
    %203 = tpu.matmul %192, %79, %cst_99 {dimension_numbers = #tpu.dot_dimension_numbers<[1], [0], [0], [1], [0, 0, 1, 1], [], []>} : vector<2x16xf32>, vector<16x96xf32>, vector<2x96xf32> -> vector<2x96xf32>
    %204 = vector.extract_strided_slice %59 {offsets = [7, 0, 0], sizes = [1, 2, 96], strides = [1, 1, 1]} : vector<8x2x96xf32> to vector<1x2x96xf32>
    %205 = vector.shape_cast %204 : vector<1x2x96xf32> to vector<2x96xf32>
    %206 = arith.addf %203, %205 : vector<2x96xf32>
    %cst_100 = arith.constant dense<0.000000e+00> : vector<2x96xf32>
    %207 = tpu.matmul %172, %83, %cst_100 {dimension_numbers = #tpu.dot_dimension_numbers<[1], [0], [0], [1], [0, 0, 1, 1], [], []>} : vector<2x32xf32>, vector<32x96xf32>, vector<2x96xf32> -> vector<2x96xf32>
    %208 = vector.broadcast %87 : vector<1x96xf32> to vector<2x96xf32>
    %209 = arith.addf %207, %208 : vector<2x96xf32>
    %210 = vector.extract_strided_slice %206 {offsets = [0, 0], sizes = [2, 32], strides = [1, 1]} : vector<2x96xf32> to vector<2x32xf32>
    %211 = vector.extract_strided_slice %209 {offsets = [0, 0], sizes = [2, 32], strides = [1, 1]} : vector<2x96xf32> to vector<2x32xf32>
    %212 = arith.addf %210, %211 : vector<2x32xf32>
    %213 = arith.negf %212 : vector<2x32xf32>
    %214 = math.exp %213 : vector<2x32xf32>
    %cst_101 = arith.constant 1.000000e+00 : f32
    %215 = vector.broadcast %cst_101 : f32 to vector<2x32xf32>
    %216 = arith.addf %215, %214 : vector<2x32xf32>
    %217 = arith.divf %215, %216 : vector<2x32xf32>
    %218 = vector.extract_strided_slice %206 {offsets = [0, 32], sizes = [2, 32], strides = [1, 1]} : vector<2x96xf32> to vector<2x32xf32>
    %219 = vector.extract_strided_slice %209 {offsets = [0, 32], sizes = [2, 32], strides = [1, 1]} : vector<2x96xf32> to vector<2x32xf32>
    %220 = arith.addf %218, %219 : vector<2x32xf32>
    %221 = arith.negf %220 : vector<2x32xf32>
    %222 = math.exp %221 : vector<2x32xf32>
    %cst_102 = arith.constant 1.000000e+00 : f32
    %223 = vector.broadcast %cst_102 : f32 to vector<2x32xf32>
    %224 = arith.addf %223, %222 : vector<2x32xf32>
    %225 = arith.divf %223, %224 : vector<2x32xf32>
    %226 = vector.extract_strided_slice %206 {offsets = [0, 64], sizes = [2, 32], strides = [1, 1]} : vector<2x96xf32> to vector<2x32xf32>
    %227 = vector.extract_strided_slice %209 {offsets = [0, 64], sizes = [2, 32], strides = [1, 1]} : vector<2x96xf32> to vector<2x32xf32>
    %228 = arith.mulf %217, %227 : vector<2x32xf32>
    %229 = arith.addf %226, %228 : vector<2x32xf32>
    %230 = math.tanh %229 : vector<2x32xf32>
    %cst_103 = arith.constant 1.000000e+00 : f32
    %231 = vector.broadcast %cst_103 : f32 to vector<2x32xf32>
    %232 = arith.subf %231, %225 : vector<2x32xf32>
    %233 = arith.mulf %232, %230 : vector<2x32xf32>
    %234 = arith.mulf %225, %172 : vector<2x32xf32>
    %235 = arith.addf %233, %234 : vector<2x32xf32>
    %236 = vector.extract_strided_slice %0 {offsets = [1, 0, 0], sizes = [1, 2, 16], strides = [1, 1, 1]} : vector<8x2x16xf32> to vector<1x2x16xf32>
    %237 = vector.shape_cast %236 : vector<1x2x16xf32> to vector<2x16xf32>
    %238 = vector.extract_strided_slice %1 {offsets = [1, 0, 0], sizes = [1, 2, 16], strides = [1, 1, 1]} : vector<8x2x16xf32> to vector<1x2x16xf32>
    %239 = vector.shape_cast %238 : vector<1x2x16xf32> to vector<2x16xf32>
    %240 = vector.extract_strided_slice %13 {offsets = [1, 0, 0], sizes = [1, 2, 16], strides = [1, 1, 1]} : vector<8x2x16xf32> to vector<1x2x16xf32>
    %241 = vector.shape_cast %240 : vector<1x2x16xf32> to vector<2x16xf32>
    %242 = vector.extract_strided_slice %27 {offsets = [1, 0, 0], sizes = [1, 2, 32], strides = [1, 1, 1]} : vector<8x2x32xf32> to vector<1x2x32xf32>
    %243 = vector.shape_cast %242 : vector<1x2x32xf32> to vector<2x32xf32>
    %244 = arith.mulf %163, %243 : vector<2x32xf32>
    %cst_104 = arith.constant dense<0.000000e+00> : vector<2x16xf32>
    %245 = tpu.matmul %244, %61, %cst_104 {dimension_numbers = #tpu.dot_dimension_numbers<[1], [0], [0], [1], [0, 0, 1, 1], [], []>} : vector<2x32xf32>, vector<32x16xf32>, vector<2x16xf32> -> vector<2x16xf32>
    %246 = vector.broadcast %65 : vector<1x16xf32> to vector<2x16xf32>
    %247 = arith.addf %245, %246 : vector<2x16xf32>
    %248 = arith.mulf %239, %237 : vector<2x16xf32>
    %cst_105 = arith.constant 1.000000e+00 : f32
    %249 = vector.broadcast %cst_105 : f32 to vector<2x16xf32>
    %250 = arith.subf %249, %239 : vector<2x16xf32>
    %251 = arith.mulf %250, %247 : vector<2x16xf32>
    %252 = arith.addf %248, %251 : vector<2x16xf32>
    %cst_106 = arith.constant dense<0.000000e+00> : vector<2x16xf32>
    %253 = tpu.matmul %252, %69, %cst_106 {dimension_numbers = #tpu.dot_dimension_numbers<[1], [0], [0], [1], [0, 0, 1, 1], [], []>} : vector<2x16xf32>, vector<16x16xf32>, vector<2x16xf32> -> vector<2x16xf32>
    %254 = vector.broadcast %73 : vector<1x16xf32> to vector<2x16xf32>
    %255 = arith.addf %253, %254 : vector<2x16xf32>
    %256 = vector.extract_strided_slice %42 {offsets = [1, 0, 0], sizes = [1, 2, 16], strides = [1, 1, 1]} : vector<8x2x16xf32> to vector<1x2x16xf32>
    %257 = vector.shape_cast %256 : vector<1x2x16xf32> to vector<2x16xf32>
    %258 = arith.mulf %257, %255 : vector<2x16xf32>
    %cst_107 = arith.constant 1.000000e+00 : f32
    %259 = vector.broadcast %cst_107 : f32 to vector<2x16xf32>
    %260 = arith.subf %259, %257 : vector<2x16xf32>
    %261 = arith.mulf %260, %247 : vector<2x16xf32>
    %262 = arith.addf %258, %261 : vector<2x16xf32>
    %263 = arith.mulf %250, %262 : vector<2x16xf32>
    %264 = arith.addf %248, %263 : vector<2x16xf32>
    %265 = arith.subf %237, %247 : vector<2x16xf32>
    %266 = math.absf %265 : vector<2x16xf32>
    %267 = arith.subf %237, %255 : vector<2x16xf32>
    %268 = math.absf %267 : vector<2x16xf32>
    %269 = arith.addf %266, %268 : vector<2x16xf32>
    %270 = arith.subf %237, %262 : vector<2x16xf32>
    %271 = math.absf %270 : vector<2x16xf32>
    %272 = arith.addf %269, %271 : vector<2x16xf32>
    %273 = arith.mulf %272, %241 : vector<2x16xf32>
    %274 = arith.addf %130, %273 : vector<2x16xf32>
    %cst_108 = arith.constant dense<0.000000e+00> : vector<2x96xf32>
    %275 = tpu.matmul %264, %77, %cst_108 {dimension_numbers = #tpu.dot_dimension_numbers<[1], [0], [0], [1], [0, 0, 1, 1], [], []>} : vector<2x16xf32>, vector<16x96xf32>, vector<2x96xf32> -> vector<2x96xf32>
    %276 = vector.extract_strided_slice %44 {offsets = [1, 0, 0], sizes = [1, 2, 96], strides = [1, 1, 1]} : vector<8x2x96xf32> to vector<1x2x96xf32>
    %277 = vector.shape_cast %276 : vector<1x2x96xf32> to vector<2x96xf32>
    %278 = arith.addf %275, %277 : vector<2x96xf32>
    %cst_109 = arith.constant dense<0.000000e+00> : vector<2x96xf32>
    %279 = tpu.matmul %244, %81, %cst_109 {dimension_numbers = #tpu.dot_dimension_numbers<[1], [0], [0], [1], [0, 0, 1, 1], [], []>} : vector<2x32xf32>, vector<32x96xf32>, vector<2x96xf32> -> vector<2x96xf32>
    %280 = vector.broadcast %85 : vector<1x96xf32> to vector<2x96xf32>
    %281 = arith.addf %279, %280 : vector<2x96xf32>
    %282 = vector.extract_strided_slice %278 {offsets = [0, 0], sizes = [2, 32], strides = [1, 1]} : vector<2x96xf32> to vector<2x32xf32>
    %283 = vector.extract_strided_slice %281 {offsets = [0, 0], sizes = [2, 32], strides = [1, 1]} : vector<2x96xf32> to vector<2x32xf32>
    %284 = arith.addf %282, %283 : vector<2x32xf32>
    %285 = arith.negf %284 : vector<2x32xf32>
    %286 = math.exp %285 : vector<2x32xf32>
    %cst_110 = arith.constant 1.000000e+00 : f32
    %287 = vector.broadcast %cst_110 : f32 to vector<2x32xf32>
    %288 = arith.addf %287, %286 : vector<2x32xf32>
    %289 = arith.divf %287, %288 : vector<2x32xf32>
    %290 = vector.extract_strided_slice %278 {offsets = [0, 32], sizes = [2, 32], strides = [1, 1]} : vector<2x96xf32> to vector<2x32xf32>
    %291 = vector.extract_strided_slice %281 {offsets = [0, 32], sizes = [2, 32], strides = [1, 1]} : vector<2x96xf32> to vector<2x32xf32>
    %292 = arith.addf %290, %291 : vector<2x32xf32>
    %293 = arith.negf %292 : vector<2x32xf32>
    %294 = math.exp %293 : vector<2x32xf32>
    %cst_111 = arith.constant 1.000000e+00 : f32
    %295 = vector.broadcast %cst_111 : f32 to vector<2x32xf32>
    %296 = arith.addf %295, %294 : vector<2x32xf32>
    %297 = arith.divf %295, %296 : vector<2x32xf32>
    %298 = vector.extract_strided_slice %278 {offsets = [0, 64], sizes = [2, 32], strides = [1, 1]} : vector<2x96xf32> to vector<2x32xf32>
    %299 = vector.extract_strided_slice %281 {offsets = [0, 64], sizes = [2, 32], strides = [1, 1]} : vector<2x96xf32> to vector<2x32xf32>
    %300 = arith.mulf %289, %299 : vector<2x32xf32>
    %301 = arith.addf %298, %300 : vector<2x32xf32>
    %302 = math.tanh %301 : vector<2x32xf32>
    %cst_112 = arith.constant 1.000000e+00 : f32
    %303 = vector.broadcast %cst_112 : f32 to vector<2x32xf32>
    %304 = arith.subf %303, %297 : vector<2x32xf32>
    %305 = arith.mulf %304, %302 : vector<2x32xf32>
    %306 = arith.mulf %297, %244 : vector<2x32xf32>
    %307 = arith.addf %305, %306 : vector<2x32xf32>
    %308 = vector.extract_strided_slice %0 {offsets = [6, 0, 0], sizes = [1, 2, 16], strides = [1, 1, 1]} : vector<8x2x16xf32> to vector<1x2x16xf32>
    %309 = vector.shape_cast %308 : vector<1x2x16xf32> to vector<2x16xf32>
    %310 = vector.extract_strided_slice %1 {offsets = [6, 0, 0], sizes = [1, 2, 16], strides = [1, 1, 1]} : vector<8x2x16xf32> to vector<1x2x16xf32>
    %311 = vector.shape_cast %310 : vector<1x2x16xf32> to vector<2x16xf32>
    %312 = vector.extract_strided_slice %13 {offsets = [6, 0, 0], sizes = [1, 2, 16], strides = [1, 1, 1]} : vector<8x2x16xf32> to vector<1x2x16xf32>
    %313 = vector.shape_cast %312 : vector<1x2x16xf32> to vector<2x16xf32>
    %314 = vector.extract_strided_slice %29 {offsets = [6, 0, 0], sizes = [1, 2, 32], strides = [1, 1, 1]} : vector<8x2x32xf32> to vector<1x2x32xf32>
    %315 = vector.shape_cast %314 : vector<1x2x32xf32> to vector<2x32xf32>
    %316 = arith.mulf %235, %315 : vector<2x32xf32>
    %cst_113 = arith.constant dense<0.000000e+00> : vector<2x16xf32>
    %317 = tpu.matmul %316, %63, %cst_113 {dimension_numbers = #tpu.dot_dimension_numbers<[1], [0], [0], [1], [0, 0, 1, 1], [], []>} : vector<2x32xf32>, vector<32x16xf32>, vector<2x16xf32> -> vector<2x16xf32>
    %318 = vector.broadcast %67 : vector<1x16xf32> to vector<2x16xf32>
    %319 = arith.addf %317, %318 : vector<2x16xf32>
    %320 = arith.mulf %311, %309 : vector<2x16xf32>
    %cst_114 = arith.constant 1.000000e+00 : f32
    %321 = vector.broadcast %cst_114 : f32 to vector<2x16xf32>
    %322 = arith.subf %321, %311 : vector<2x16xf32>
    %323 = arith.mulf %322, %319 : vector<2x16xf32>
    %324 = arith.addf %320, %323 : vector<2x16xf32>
    %cst_115 = arith.constant dense<0.000000e+00> : vector<2x16xf32>
    %325 = tpu.matmul %324, %71, %cst_115 {dimension_numbers = #tpu.dot_dimension_numbers<[1], [0], [0], [1], [0, 0, 1, 1], [], []>} : vector<2x16xf32>, vector<16x16xf32>, vector<2x16xf32> -> vector<2x16xf32>
    %326 = vector.broadcast %75 : vector<1x16xf32> to vector<2x16xf32>
    %327 = arith.addf %325, %326 : vector<2x16xf32>
    %328 = vector.extract_strided_slice %57 {offsets = [6, 0, 0], sizes = [1, 2, 16], strides = [1, 1, 1]} : vector<8x2x16xf32> to vector<1x2x16xf32>
    %329 = vector.shape_cast %328 : vector<1x2x16xf32> to vector<2x16xf32>
    %330 = arith.mulf %329, %327 : vector<2x16xf32>
    %cst_116 = arith.constant 1.000000e+00 : f32
    %331 = vector.broadcast %cst_116 : f32 to vector<2x16xf32>
    %332 = arith.subf %331, %329 : vector<2x16xf32>
    %333 = arith.mulf %332, %319 : vector<2x16xf32>
    %334 = arith.addf %330, %333 : vector<2x16xf32>
    %335 = arith.mulf %322, %334 : vector<2x16xf32>
    %336 = arith.addf %320, %335 : vector<2x16xf32>
    %337 = arith.subf %309, %319 : vector<2x16xf32>
    %338 = math.absf %337 : vector<2x16xf32>
    %339 = arith.subf %309, %327 : vector<2x16xf32>
    %340 = math.absf %339 : vector<2x16xf32>
    %341 = arith.addf %338, %340 : vector<2x16xf32>
    %342 = arith.subf %309, %334 : vector<2x16xf32>
    %343 = math.absf %342 : vector<2x16xf32>
    %344 = arith.addf %341, %343 : vector<2x16xf32>
    %345 = arith.mulf %344, %313 : vector<2x16xf32>
    %346 = arith.addf %202, %345 : vector<2x16xf32>
    %cst_117 = arith.constant dense<0.000000e+00> : vector<2x96xf32>
    %347 = tpu.matmul %336, %79, %cst_117 {dimension_numbers = #tpu.dot_dimension_numbers<[1], [0], [0], [1], [0, 0, 1, 1], [], []>} : vector<2x16xf32>, vector<16x96xf32>, vector<2x96xf32> -> vector<2x96xf32>
    %348 = vector.extract_strided_slice %59 {offsets = [6, 0, 0], sizes = [1, 2, 96], strides = [1, 1, 1]} : vector<8x2x96xf32> to vector<1x2x96xf32>
    %349 = vector.shape_cast %348 : vector<1x2x96xf32> to vector<2x96xf32>
    %350 = arith.addf %347, %349 : vector<2x96xf32>
    %cst_118 = arith.constant dense<0.000000e+00> : vector<2x96xf32>
    %351 = tpu.matmul %316, %83, %cst_118 {dimension_numbers = #tpu.dot_dimension_numbers<[1], [0], [0], [1], [0, 0, 1, 1], [], []>} : vector<2x32xf32>, vector<32x96xf32>, vector<2x96xf32> -> vector<2x96xf32>
    %352 = vector.broadcast %87 : vector<1x96xf32> to vector<2x96xf32>
    %353 = arith.addf %351, %352 : vector<2x96xf32>
    %354 = vector.extract_strided_slice %350 {offsets = [0, 0], sizes = [2, 32], strides = [1, 1]} : vector<2x96xf32> to vector<2x32xf32>
    %355 = vector.extract_strided_slice %353 {offsets = [0, 0], sizes = [2, 32], strides = [1, 1]} : vector<2x96xf32> to vector<2x32xf32>
    %356 = arith.addf %354, %355 : vector<2x32xf32>
    %357 = arith.negf %356 : vector<2x32xf32>
    %358 = math.exp %357 : vector<2x32xf32>
    %cst_119 = arith.constant 1.000000e+00 : f32
    %359 = vector.broadcast %cst_119 : f32 to vector<2x32xf32>
    %360 = arith.addf %359, %358 : vector<2x32xf32>
    %361 = arith.divf %359, %360 : vector<2x32xf32>
    %362 = vector.extract_strided_slice %350 {offsets = [0, 32], sizes = [2, 32], strides = [1, 1]} : vector<2x96xf32> to vector<2x32xf32>
    %363 = vector.extract_strided_slice %353 {offsets = [0, 32], sizes = [2, 32], strides = [1, 1]} : vector<2x96xf32> to vector<2x32xf32>
    %364 = arith.addf %362, %363 : vector<2x32xf32>
    %365 = arith.negf %364 : vector<2x32xf32>
    %366 = math.exp %365 : vector<2x32xf32>
    %cst_120 = arith.constant 1.000000e+00 : f32
    %367 = vector.broadcast %cst_120 : f32 to vector<2x32xf32>
    %368 = arith.addf %367, %366 : vector<2x32xf32>
    %369 = arith.divf %367, %368 : vector<2x32xf32>
    %370 = vector.extract_strided_slice %350 {offsets = [0, 64], sizes = [2, 32], strides = [1, 1]} : vector<2x96xf32> to vector<2x32xf32>
    %371 = vector.extract_strided_slice %353 {offsets = [0, 64], sizes = [2, 32], strides = [1, 1]} : vector<2x96xf32> to vector<2x32xf32>
    %372 = arith.mulf %361, %371 : vector<2x32xf32>
    %373 = arith.addf %370, %372 : vector<2x32xf32>
    %374 = math.tanh %373 : vector<2x32xf32>
    %cst_121 = arith.constant 1.000000e+00 : f32
    %375 = vector.broadcast %cst_121 : f32 to vector<2x32xf32>
    %376 = arith.subf %375, %369 : vector<2x32xf32>
    %377 = arith.mulf %376, %374 : vector<2x32xf32>
    %378 = arith.mulf %369, %316 : vector<2x32xf32>
    %379 = arith.addf %377, %378 : vector<2x32xf32>
    %380 = vector.extract_strided_slice %0 {offsets = [2, 0, 0], sizes = [1, 2, 16], strides = [1, 1, 1]} : vector<8x2x16xf32> to vector<1x2x16xf32>
    %381 = vector.shape_cast %380 : vector<1x2x16xf32> to vector<2x16xf32>
    %382 = vector.extract_strided_slice %1 {offsets = [2, 0, 0], sizes = [1, 2, 16], strides = [1, 1, 1]} : vector<8x2x16xf32> to vector<1x2x16xf32>
    %383 = vector.shape_cast %382 : vector<1x2x16xf32> to vector<2x16xf32>
    %384 = vector.extract_strided_slice %13 {offsets = [2, 0, 0], sizes = [1, 2, 16], strides = [1, 1, 1]} : vector<8x2x16xf32> to vector<1x2x16xf32>
    %385 = vector.shape_cast %384 : vector<1x2x16xf32> to vector<2x16xf32>
    %386 = vector.extract_strided_slice %27 {offsets = [2, 0, 0], sizes = [1, 2, 32], strides = [1, 1, 1]} : vector<8x2x32xf32> to vector<1x2x32xf32>
    %387 = vector.shape_cast %386 : vector<1x2x32xf32> to vector<2x32xf32>
    %388 = arith.mulf %307, %387 : vector<2x32xf32>
    %cst_122 = arith.constant dense<0.000000e+00> : vector<2x16xf32>
    %389 = tpu.matmul %388, %61, %cst_122 {dimension_numbers = #tpu.dot_dimension_numbers<[1], [0], [0], [1], [0, 0, 1, 1], [], []>} : vector<2x32xf32>, vector<32x16xf32>, vector<2x16xf32> -> vector<2x16xf32>
    %390 = vector.broadcast %65 : vector<1x16xf32> to vector<2x16xf32>
    %391 = arith.addf %389, %390 : vector<2x16xf32>
    %392 = arith.mulf %383, %381 : vector<2x16xf32>
    %cst_123 = arith.constant 1.000000e+00 : f32
    %393 = vector.broadcast %cst_123 : f32 to vector<2x16xf32>
    %394 = arith.subf %393, %383 : vector<2x16xf32>
    %395 = arith.mulf %394, %391 : vector<2x16xf32>
    %396 = arith.addf %392, %395 : vector<2x16xf32>
    %cst_124 = arith.constant dense<0.000000e+00> : vector<2x16xf32>
    %397 = tpu.matmul %396, %69, %cst_124 {dimension_numbers = #tpu.dot_dimension_numbers<[1], [0], [0], [1], [0, 0, 1, 1], [], []>} : vector<2x16xf32>, vector<16x16xf32>, vector<2x16xf32> -> vector<2x16xf32>
    %398 = vector.broadcast %73 : vector<1x16xf32> to vector<2x16xf32>
    %399 = arith.addf %397, %398 : vector<2x16xf32>
    %400 = vector.extract_strided_slice %42 {offsets = [2, 0, 0], sizes = [1, 2, 16], strides = [1, 1, 1]} : vector<8x2x16xf32> to vector<1x2x16xf32>
    %401 = vector.shape_cast %400 : vector<1x2x16xf32> to vector<2x16xf32>
    %402 = arith.mulf %401, %399 : vector<2x16xf32>
    %cst_125 = arith.constant 1.000000e+00 : f32
    %403 = vector.broadcast %cst_125 : f32 to vector<2x16xf32>
    %404 = arith.subf %403, %401 : vector<2x16xf32>
    %405 = arith.mulf %404, %391 : vector<2x16xf32>
    %406 = arith.addf %402, %405 : vector<2x16xf32>
    %407 = arith.mulf %394, %406 : vector<2x16xf32>
    %408 = arith.addf %392, %407 : vector<2x16xf32>
    %409 = arith.subf %381, %391 : vector<2x16xf32>
    %410 = math.absf %409 : vector<2x16xf32>
    %411 = arith.subf %381, %399 : vector<2x16xf32>
    %412 = math.absf %411 : vector<2x16xf32>
    %413 = arith.addf %410, %412 : vector<2x16xf32>
    %414 = arith.subf %381, %406 : vector<2x16xf32>
    %415 = math.absf %414 : vector<2x16xf32>
    %416 = arith.addf %413, %415 : vector<2x16xf32>
    %417 = arith.mulf %416, %385 : vector<2x16xf32>
    %418 = arith.addf %274, %417 : vector<2x16xf32>
    %cst_126 = arith.constant dense<0.000000e+00> : vector<2x96xf32>
    %419 = tpu.matmul %408, %77, %cst_126 {dimension_numbers = #tpu.dot_dimension_numbers<[1], [0], [0], [1], [0, 0, 1, 1], [], []>} : vector<2x16xf32>, vector<16x96xf32>, vector<2x96xf32> -> vector<2x96xf32>
    %420 = vector.extract_strided_slice %44 {offsets = [2, 0, 0], sizes = [1, 2, 96], strides = [1, 1, 1]} : vector<8x2x96xf32> to vector<1x2x96xf32>
    %421 = vector.shape_cast %420 : vector<1x2x96xf32> to vector<2x96xf32>
    %422 = arith.addf %419, %421 : vector<2x96xf32>
    %cst_127 = arith.constant dense<0.000000e+00> : vector<2x96xf32>
    %423 = tpu.matmul %388, %81, %cst_127 {dimension_numbers = #tpu.dot_dimension_numbers<[1], [0], [0], [1], [0, 0, 1, 1], [], []>} : vector<2x32xf32>, vector<32x96xf32>, vector<2x96xf32> -> vector<2x96xf32>
    %424 = vector.broadcast %85 : vector<1x96xf32> to vector<2x96xf32>
    %425 = arith.addf %423, %424 : vector<2x96xf32>
    %426 = vector.extract_strided_slice %422 {offsets = [0, 0], sizes = [2, 32], strides = [1, 1]} : vector<2x96xf32> to vector<2x32xf32>
    %427 = vector.extract_strided_slice %425 {offsets = [0, 0], sizes = [2, 32], strides = [1, 1]} : vector<2x96xf32> to vector<2x32xf32>
    %428 = arith.addf %426, %427 : vector<2x32xf32>
    %429 = arith.negf %428 : vector<2x32xf32>
    %430 = math.exp %429 : vector<2x32xf32>
    %cst_128 = arith.constant 1.000000e+00 : f32
    %431 = vector.broadcast %cst_128 : f32 to vector<2x32xf32>
    %432 = arith.addf %431, %430 : vector<2x32xf32>
    %433 = arith.divf %431, %432 : vector<2x32xf32>
    %434 = vector.extract_strided_slice %422 {offsets = [0, 32], sizes = [2, 32], strides = [1, 1]} : vector<2x96xf32> to vector<2x32xf32>
    %435 = vector.extract_strided_slice %425 {offsets = [0, 32], sizes = [2, 32], strides = [1, 1]} : vector<2x96xf32> to vector<2x32xf32>
    %436 = arith.addf %434, %435 : vector<2x32xf32>
    %437 = arith.negf %436 : vector<2x32xf32>
    %438 = math.exp %437 : vector<2x32xf32>
    %cst_129 = arith.constant 1.000000e+00 : f32
    %439 = vector.broadcast %cst_129 : f32 to vector<2x32xf32>
    %440 = arith.addf %439, %438 : vector<2x32xf32>
    %441 = arith.divf %439, %440 : vector<2x32xf32>
    %442 = vector.extract_strided_slice %422 {offsets = [0, 64], sizes = [2, 32], strides = [1, 1]} : vector<2x96xf32> to vector<2x32xf32>
    %443 = vector.extract_strided_slice %425 {offsets = [0, 64], sizes = [2, 32], strides = [1, 1]} : vector<2x96xf32> to vector<2x32xf32>
    %444 = arith.mulf %433, %443 : vector<2x32xf32>
    %445 = arith.addf %442, %444 : vector<2x32xf32>
    %446 = math.tanh %445 : vector<2x32xf32>
    %cst_130 = arith.constant 1.000000e+00 : f32
    %447 = vector.broadcast %cst_130 : f32 to vector<2x32xf32>
    %448 = arith.subf %447, %441 : vector<2x32xf32>
    %449 = arith.mulf %448, %446 : vector<2x32xf32>
    %450 = arith.mulf %441, %388 : vector<2x32xf32>
    %451 = arith.addf %449, %450 : vector<2x32xf32>
    %452 = vector.extract_strided_slice %0 {offsets = [5, 0, 0], sizes = [1, 2, 16], strides = [1, 1, 1]} : vector<8x2x16xf32> to vector<1x2x16xf32>
    %453 = vector.shape_cast %452 : vector<1x2x16xf32> to vector<2x16xf32>
    %454 = vector.extract_strided_slice %1 {offsets = [5, 0, 0], sizes = [1, 2, 16], strides = [1, 1, 1]} : vector<8x2x16xf32> to vector<1x2x16xf32>
    %455 = vector.shape_cast %454 : vector<1x2x16xf32> to vector<2x16xf32>
    %456 = vector.extract_strided_slice %13 {offsets = [5, 0, 0], sizes = [1, 2, 16], strides = [1, 1, 1]} : vector<8x2x16xf32> to vector<1x2x16xf32>
    %457 = vector.shape_cast %456 : vector<1x2x16xf32> to vector<2x16xf32>
    %458 = vector.extract_strided_slice %29 {offsets = [5, 0, 0], sizes = [1, 2, 32], strides = [1, 1, 1]} : vector<8x2x32xf32> to vector<1x2x32xf32>
    %459 = vector.shape_cast %458 : vector<1x2x32xf32> to vector<2x32xf32>
    %460 = arith.mulf %379, %459 : vector<2x32xf32>
    %cst_131 = arith.constant dense<0.000000e+00> : vector<2x16xf32>
    %461 = tpu.matmul %460, %63, %cst_131 {dimension_numbers = #tpu.dot_dimension_numbers<[1], [0], [0], [1], [0, 0, 1, 1], [], []>} : vector<2x32xf32>, vector<32x16xf32>, vector<2x16xf32> -> vector<2x16xf32>
    %462 = vector.broadcast %67 : vector<1x16xf32> to vector<2x16xf32>
    %463 = arith.addf %461, %462 : vector<2x16xf32>
    %464 = arith.mulf %455, %453 : vector<2x16xf32>
    %cst_132 = arith.constant 1.000000e+00 : f32
    %465 = vector.broadcast %cst_132 : f32 to vector<2x16xf32>
    %466 = arith.subf %465, %455 : vector<2x16xf32>
    %467 = arith.mulf %466, %463 : vector<2x16xf32>
    %468 = arith.addf %464, %467 : vector<2x16xf32>
    %cst_133 = arith.constant dense<0.000000e+00> : vector<2x16xf32>
    %469 = tpu.matmul %468, %71, %cst_133 {dimension_numbers = #tpu.dot_dimension_numbers<[1], [0], [0], [1], [0, 0, 1, 1], [], []>} : vector<2x16xf32>, vector<16x16xf32>, vector<2x16xf32> -> vector<2x16xf32>
    %470 = vector.broadcast %75 : vector<1x16xf32> to vector<2x16xf32>
    %471 = arith.addf %469, %470 : vector<2x16xf32>
    %472 = vector.extract_strided_slice %57 {offsets = [5, 0, 0], sizes = [1, 2, 16], strides = [1, 1, 1]} : vector<8x2x16xf32> to vector<1x2x16xf32>
    %473 = vector.shape_cast %472 : vector<1x2x16xf32> to vector<2x16xf32>
    %474 = arith.mulf %473, %471 : vector<2x16xf32>
    %cst_134 = arith.constant 1.000000e+00 : f32
    %475 = vector.broadcast %cst_134 : f32 to vector<2x16xf32>
    %476 = arith.subf %475, %473 : vector<2x16xf32>
    %477 = arith.mulf %476, %463 : vector<2x16xf32>
    %478 = arith.addf %474, %477 : vector<2x16xf32>
    %479 = arith.mulf %466, %478 : vector<2x16xf32>
    %480 = arith.addf %464, %479 : vector<2x16xf32>
    %481 = arith.subf %453, %463 : vector<2x16xf32>
    %482 = math.absf %481 : vector<2x16xf32>
    %483 = arith.subf %453, %471 : vector<2x16xf32>
    %484 = math.absf %483 : vector<2x16xf32>
    %485 = arith.addf %482, %484 : vector<2x16xf32>
    %486 = arith.subf %453, %478 : vector<2x16xf32>
    %487 = math.absf %486 : vector<2x16xf32>
    %488 = arith.addf %485, %487 : vector<2x16xf32>
    %489 = arith.mulf %488, %457 : vector<2x16xf32>
    %490 = arith.addf %346, %489 : vector<2x16xf32>
    %cst_135 = arith.constant dense<0.000000e+00> : vector<2x96xf32>
    %491 = tpu.matmul %480, %79, %cst_135 {dimension_numbers = #tpu.dot_dimension_numbers<[1], [0], [0], [1], [0, 0, 1, 1], [], []>} : vector<2x16xf32>, vector<16x96xf32>, vector<2x96xf32> -> vector<2x96xf32>
    %492 = vector.extract_strided_slice %59 {offsets = [5, 0, 0], sizes = [1, 2, 96], strides = [1, 1, 1]} : vector<8x2x96xf32> to vector<1x2x96xf32>
    %493 = vector.shape_cast %492 : vector<1x2x96xf32> to vector<2x96xf32>
    %494 = arith.addf %491, %493 : vector<2x96xf32>
    %cst_136 = arith.constant dense<0.000000e+00> : vector<2x96xf32>
    %495 = tpu.matmul %460, %83, %cst_136 {dimension_numbers = #tpu.dot_dimension_numbers<[1], [0], [0], [1], [0, 0, 1, 1], [], []>} : vector<2x32xf32>, vector<32x96xf32>, vector<2x96xf32> -> vector<2x96xf32>
    %496 = vector.broadcast %87 : vector<1x96xf32> to vector<2x96xf32>
    %497 = arith.addf %495, %496 : vector<2x96xf32>
    %498 = vector.extract_strided_slice %494 {offsets = [0, 0], sizes = [2, 32], strides = [1, 1]} : vector<2x96xf32> to vector<2x32xf32>
    %499 = vector.extract_strided_slice %497 {offsets = [0, 0], sizes = [2, 32], strides = [1, 1]} : vector<2x96xf32> to vector<2x32xf32>
    %500 = arith.addf %498, %499 : vector<2x32xf32>
    %501 = arith.negf %500 : vector<2x32xf32>
    %502 = math.exp %501 : vector<2x32xf32>
    %cst_137 = arith.constant 1.000000e+00 : f32
    %503 = vector.broadcast %cst_137 : f32 to vector<2x32xf32>
    %504 = arith.addf %503, %502 : vector<2x32xf32>
    %505 = arith.divf %503, %504 : vector<2x32xf32>
    %506 = vector.extract_strided_slice %494 {offsets = [0, 32], sizes = [2, 32], strides = [1, 1]} : vector<2x96xf32> to vector<2x32xf32>
    %507 = vector.extract_strided_slice %497 {offsets = [0, 32], sizes = [2, 32], strides = [1, 1]} : vector<2x96xf32> to vector<2x32xf32>
    %508 = arith.addf %506, %507 : vector<2x32xf32>
    %509 = arith.negf %508 : vector<2x32xf32>
    %510 = math.exp %509 : vector<2x32xf32>
    %cst_138 = arith.constant 1.000000e+00 : f32
    %511 = vector.broadcast %cst_138 : f32 to vector<2x32xf32>
    %512 = arith.addf %511, %510 : vector<2x32xf32>
    %513 = arith.divf %511, %512 : vector<2x32xf32>
    %514 = vector.extract_strided_slice %494 {offsets = [0, 64], sizes = [2, 32], strides = [1, 1]} : vector<2x96xf32> to vector<2x32xf32>
    %515 = vector.extract_strided_slice %497 {offsets = [0, 64], sizes = [2, 32], strides = [1, 1]} : vector<2x96xf32> to vector<2x32xf32>
    %516 = arith.mulf %505, %515 : vector<2x32xf32>
    %517 = arith.addf %514, %516 : vector<2x32xf32>
    %518 = math.tanh %517 : vector<2x32xf32>
    %cst_139 = arith.constant 1.000000e+00 : f32
    %519 = vector.broadcast %cst_139 : f32 to vector<2x32xf32>
    %520 = arith.subf %519, %513 : vector<2x32xf32>
    %521 = arith.mulf %520, %518 : vector<2x32xf32>
    %522 = arith.mulf %513, %460 : vector<2x32xf32>
    %523 = arith.addf %521, %522 : vector<2x32xf32>
    %524 = vector.extract_strided_slice %0 {offsets = [3, 0, 0], sizes = [1, 2, 16], strides = [1, 1, 1]} : vector<8x2x16xf32> to vector<1x2x16xf32>
    %525 = vector.shape_cast %524 : vector<1x2x16xf32> to vector<2x16xf32>
    %526 = vector.extract_strided_slice %1 {offsets = [3, 0, 0], sizes = [1, 2, 16], strides = [1, 1, 1]} : vector<8x2x16xf32> to vector<1x2x16xf32>
    %527 = vector.shape_cast %526 : vector<1x2x16xf32> to vector<2x16xf32>
    %528 = vector.extract_strided_slice %13 {offsets = [3, 0, 0], sizes = [1, 2, 16], strides = [1, 1, 1]} : vector<8x2x16xf32> to vector<1x2x16xf32>
    %529 = vector.shape_cast %528 : vector<1x2x16xf32> to vector<2x16xf32>
    %530 = vector.extract_strided_slice %27 {offsets = [3, 0, 0], sizes = [1, 2, 32], strides = [1, 1, 1]} : vector<8x2x32xf32> to vector<1x2x32xf32>
    %531 = vector.shape_cast %530 : vector<1x2x32xf32> to vector<2x32xf32>
    %532 = arith.mulf %451, %531 : vector<2x32xf32>
    %cst_140 = arith.constant dense<0.000000e+00> : vector<2x16xf32>
    %533 = tpu.matmul %532, %61, %cst_140 {dimension_numbers = #tpu.dot_dimension_numbers<[1], [0], [0], [1], [0, 0, 1, 1], [], []>} : vector<2x32xf32>, vector<32x16xf32>, vector<2x16xf32> -> vector<2x16xf32>
    %534 = vector.broadcast %65 : vector<1x16xf32> to vector<2x16xf32>
    %535 = arith.addf %533, %534 : vector<2x16xf32>
    %536 = arith.mulf %527, %525 : vector<2x16xf32>
    %cst_141 = arith.constant 1.000000e+00 : f32
    %537 = vector.broadcast %cst_141 : f32 to vector<2x16xf32>
    %538 = arith.subf %537, %527 : vector<2x16xf32>
    %539 = arith.mulf %538, %535 : vector<2x16xf32>
    %540 = arith.addf %536, %539 : vector<2x16xf32>
    %cst_142 = arith.constant dense<0.000000e+00> : vector<2x16xf32>
    %541 = tpu.matmul %540, %69, %cst_142 {dimension_numbers = #tpu.dot_dimension_numbers<[1], [0], [0], [1], [0, 0, 1, 1], [], []>} : vector<2x16xf32>, vector<16x16xf32>, vector<2x16xf32> -> vector<2x16xf32>
    %542 = vector.broadcast %73 : vector<1x16xf32> to vector<2x16xf32>
    %543 = arith.addf %541, %542 : vector<2x16xf32>
    %544 = vector.extract_strided_slice %42 {offsets = [3, 0, 0], sizes = [1, 2, 16], strides = [1, 1, 1]} : vector<8x2x16xf32> to vector<1x2x16xf32>
    %545 = vector.shape_cast %544 : vector<1x2x16xf32> to vector<2x16xf32>
    %546 = arith.mulf %545, %543 : vector<2x16xf32>
    %cst_143 = arith.constant 1.000000e+00 : f32
    %547 = vector.broadcast %cst_143 : f32 to vector<2x16xf32>
    %548 = arith.subf %547, %545 : vector<2x16xf32>
    %549 = arith.mulf %548, %535 : vector<2x16xf32>
    %550 = arith.addf %546, %549 : vector<2x16xf32>
    %551 = arith.mulf %538, %550 : vector<2x16xf32>
    %552 = arith.addf %536, %551 : vector<2x16xf32>
    %553 = arith.subf %525, %535 : vector<2x16xf32>
    %554 = math.absf %553 : vector<2x16xf32>
    %555 = arith.subf %525, %543 : vector<2x16xf32>
    %556 = math.absf %555 : vector<2x16xf32>
    %557 = arith.addf %554, %556 : vector<2x16xf32>
    %558 = arith.subf %525, %550 : vector<2x16xf32>
    %559 = math.absf %558 : vector<2x16xf32>
    %560 = arith.addf %557, %559 : vector<2x16xf32>
    %561 = arith.mulf %560, %529 : vector<2x16xf32>
    %562 = arith.addf %418, %561 : vector<2x16xf32>
    %cst_144 = arith.constant dense<0.000000e+00> : vector<2x96xf32>
    %563 = tpu.matmul %552, %77, %cst_144 {dimension_numbers = #tpu.dot_dimension_numbers<[1], [0], [0], [1], [0, 0, 1, 1], [], []>} : vector<2x16xf32>, vector<16x96xf32>, vector<2x96xf32> -> vector<2x96xf32>
    %564 = vector.extract_strided_slice %44 {offsets = [3, 0, 0], sizes = [1, 2, 96], strides = [1, 1, 1]} : vector<8x2x96xf32> to vector<1x2x96xf32>
    %565 = vector.shape_cast %564 : vector<1x2x96xf32> to vector<2x96xf32>
    %566 = arith.addf %563, %565 : vector<2x96xf32>
    %cst_145 = arith.constant dense<0.000000e+00> : vector<2x96xf32>
    %567 = tpu.matmul %532, %81, %cst_145 {dimension_numbers = #tpu.dot_dimension_numbers<[1], [0], [0], [1], [0, 0, 1, 1], [], []>} : vector<2x32xf32>, vector<32x96xf32>, vector<2x96xf32> -> vector<2x96xf32>
    %568 = vector.broadcast %85 : vector<1x96xf32> to vector<2x96xf32>
    %569 = arith.addf %567, %568 : vector<2x96xf32>
    %570 = vector.extract_strided_slice %566 {offsets = [0, 0], sizes = [2, 32], strides = [1, 1]} : vector<2x96xf32> to vector<2x32xf32>
    %571 = vector.extract_strided_slice %569 {offsets = [0, 0], sizes = [2, 32], strides = [1, 1]} : vector<2x96xf32> to vector<2x32xf32>
    %572 = arith.addf %570, %571 : vector<2x32xf32>
    %573 = arith.negf %572 : vector<2x32xf32>
    %574 = math.exp %573 : vector<2x32xf32>
    %cst_146 = arith.constant 1.000000e+00 : f32
    %575 = vector.broadcast %cst_146 : f32 to vector<2x32xf32>
    %576 = arith.addf %575, %574 : vector<2x32xf32>
    %577 = arith.divf %575, %576 : vector<2x32xf32>
    %578 = vector.extract_strided_slice %566 {offsets = [0, 32], sizes = [2, 32], strides = [1, 1]} : vector<2x96xf32> to vector<2x32xf32>
    %579 = vector.extract_strided_slice %569 {offsets = [0, 32], sizes = [2, 32], strides = [1, 1]} : vector<2x96xf32> to vector<2x32xf32>
    %580 = arith.addf %578, %579 : vector<2x32xf32>
    %581 = arith.negf %580 : vector<2x32xf32>
    %582 = math.exp %581 : vector<2x32xf32>
    %cst_147 = arith.constant 1.000000e+00 : f32
    %583 = vector.broadcast %cst_147 : f32 to vector<2x32xf32>
    %584 = arith.addf %583, %582 : vector<2x32xf32>
    %585 = arith.divf %583, %584 : vector<2x32xf32>
    %586 = vector.extract_strided_slice %566 {offsets = [0, 64], sizes = [2, 32], strides = [1, 1]} : vector<2x96xf32> to vector<2x32xf32>
    %587 = vector.extract_strided_slice %569 {offsets = [0, 64], sizes = [2, 32], strides = [1, 1]} : vector<2x96xf32> to vector<2x32xf32>
    %588 = arith.mulf %577, %587 : vector<2x32xf32>
    %589 = arith.addf %586, %588 : vector<2x32xf32>
    %590 = math.tanh %589 : vector<2x32xf32>
    %cst_148 = arith.constant 1.000000e+00 : f32
    %591 = vector.broadcast %cst_148 : f32 to vector<2x32xf32>
    %592 = arith.subf %591, %585 : vector<2x32xf32>
    %593 = arith.mulf %592, %590 : vector<2x32xf32>
    %594 = arith.mulf %585, %532 : vector<2x32xf32>
    %595 = arith.addf %593, %594 : vector<2x32xf32>
    %596 = vector.extract_strided_slice %0 {offsets = [4, 0, 0], sizes = [1, 2, 16], strides = [1, 1, 1]} : vector<8x2x16xf32> to vector<1x2x16xf32>
    %597 = vector.shape_cast %596 : vector<1x2x16xf32> to vector<2x16xf32>
    %598 = vector.extract_strided_slice %1 {offsets = [4, 0, 0], sizes = [1, 2, 16], strides = [1, 1, 1]} : vector<8x2x16xf32> to vector<1x2x16xf32>
    %599 = vector.shape_cast %598 : vector<1x2x16xf32> to vector<2x16xf32>
    %600 = vector.extract_strided_slice %13 {offsets = [4, 0, 0], sizes = [1, 2, 16], strides = [1, 1, 1]} : vector<8x2x16xf32> to vector<1x2x16xf32>
    %601 = vector.shape_cast %600 : vector<1x2x16xf32> to vector<2x16xf32>
    %602 = vector.extract_strided_slice %29 {offsets = [4, 0, 0], sizes = [1, 2, 32], strides = [1, 1, 1]} : vector<8x2x32xf32> to vector<1x2x32xf32>
    %603 = vector.shape_cast %602 : vector<1x2x32xf32> to vector<2x32xf32>
    %604 = arith.mulf %523, %603 : vector<2x32xf32>
    %cst_149 = arith.constant dense<0.000000e+00> : vector<2x16xf32>
    %605 = tpu.matmul %604, %63, %cst_149 {dimension_numbers = #tpu.dot_dimension_numbers<[1], [0], [0], [1], [0, 0, 1, 1], [], []>} : vector<2x32xf32>, vector<32x16xf32>, vector<2x16xf32> -> vector<2x16xf32>
    %606 = vector.broadcast %67 : vector<1x16xf32> to vector<2x16xf32>
    %607 = arith.addf %605, %606 : vector<2x16xf32>
    %608 = arith.mulf %599, %597 : vector<2x16xf32>
    %cst_150 = arith.constant 1.000000e+00 : f32
    %609 = vector.broadcast %cst_150 : f32 to vector<2x16xf32>
    %610 = arith.subf %609, %599 : vector<2x16xf32>
    %611 = arith.mulf %610, %607 : vector<2x16xf32>
    %612 = arith.addf %608, %611 : vector<2x16xf32>
    %cst_151 = arith.constant dense<0.000000e+00> : vector<2x16xf32>
    %613 = tpu.matmul %612, %71, %cst_151 {dimension_numbers = #tpu.dot_dimension_numbers<[1], [0], [0], [1], [0, 0, 1, 1], [], []>} : vector<2x16xf32>, vector<16x16xf32>, vector<2x16xf32> -> vector<2x16xf32>
    %614 = vector.broadcast %75 : vector<1x16xf32> to vector<2x16xf32>
    %615 = arith.addf %613, %614 : vector<2x16xf32>
    %616 = vector.extract_strided_slice %57 {offsets = [4, 0, 0], sizes = [1, 2, 16], strides = [1, 1, 1]} : vector<8x2x16xf32> to vector<1x2x16xf32>
    %617 = vector.shape_cast %616 : vector<1x2x16xf32> to vector<2x16xf32>
    %618 = arith.mulf %617, %615 : vector<2x16xf32>
    %cst_152 = arith.constant 1.000000e+00 : f32
    %619 = vector.broadcast %cst_152 : f32 to vector<2x16xf32>
    %620 = arith.subf %619, %617 : vector<2x16xf32>
    %621 = arith.mulf %620, %607 : vector<2x16xf32>
    %622 = arith.addf %618, %621 : vector<2x16xf32>
    %623 = arith.mulf %610, %622 : vector<2x16xf32>
    %624 = arith.addf %608, %623 : vector<2x16xf32>
    %625 = arith.subf %597, %607 : vector<2x16xf32>
    %626 = math.absf %625 : vector<2x16xf32>
    %627 = arith.subf %597, %615 : vector<2x16xf32>
    %628 = math.absf %627 : vector<2x16xf32>
    %629 = arith.addf %626, %628 : vector<2x16xf32>
    %630 = arith.subf %597, %622 : vector<2x16xf32>
    %631 = math.absf %630 : vector<2x16xf32>
    %632 = arith.addf %629, %631 : vector<2x16xf32>
    %633 = arith.mulf %632, %601 : vector<2x16xf32>
    %634 = arith.addf %490, %633 : vector<2x16xf32>
    %cst_153 = arith.constant dense<0.000000e+00> : vector<2x96xf32>
    %635 = tpu.matmul %624, %79, %cst_153 {dimension_numbers = #tpu.dot_dimension_numbers<[1], [0], [0], [1], [0, 0, 1, 1], [], []>} : vector<2x16xf32>, vector<16x96xf32>, vector<2x96xf32> -> vector<2x96xf32>
    %636 = vector.extract_strided_slice %59 {offsets = [4, 0, 0], sizes = [1, 2, 96], strides = [1, 1, 1]} : vector<8x2x96xf32> to vector<1x2x96xf32>
    %637 = vector.shape_cast %636 : vector<1x2x96xf32> to vector<2x96xf32>
    %638 = arith.addf %635, %637 : vector<2x96xf32>
    %cst_154 = arith.constant dense<0.000000e+00> : vector<2x96xf32>
    %639 = tpu.matmul %604, %83, %cst_154 {dimension_numbers = #tpu.dot_dimension_numbers<[1], [0], [0], [1], [0, 0, 1, 1], [], []>} : vector<2x32xf32>, vector<32x96xf32>, vector<2x96xf32> -> vector<2x96xf32>
    %640 = vector.broadcast %87 : vector<1x96xf32> to vector<2x96xf32>
    %641 = arith.addf %639, %640 : vector<2x96xf32>
    %642 = vector.extract_strided_slice %638 {offsets = [0, 0], sizes = [2, 32], strides = [1, 1]} : vector<2x96xf32> to vector<2x32xf32>
    %643 = vector.extract_strided_slice %641 {offsets = [0, 0], sizes = [2, 32], strides = [1, 1]} : vector<2x96xf32> to vector<2x32xf32>
    %644 = arith.addf %642, %643 : vector<2x32xf32>
    %645 = arith.negf %644 : vector<2x32xf32>
    %646 = math.exp %645 : vector<2x32xf32>
    %cst_155 = arith.constant 1.000000e+00 : f32
    %647 = vector.broadcast %cst_155 : f32 to vector<2x32xf32>
    %648 = arith.addf %647, %646 : vector<2x32xf32>
    %649 = arith.divf %647, %648 : vector<2x32xf32>
    %650 = vector.extract_strided_slice %638 {offsets = [0, 32], sizes = [2, 32], strides = [1, 1]} : vector<2x96xf32> to vector<2x32xf32>
    %651 = vector.extract_strided_slice %641 {offsets = [0, 32], sizes = [2, 32], strides = [1, 1]} : vector<2x96xf32> to vector<2x32xf32>
    %652 = arith.addf %650, %651 : vector<2x32xf32>
    %653 = arith.negf %652 : vector<2x32xf32>
    %654 = math.exp %653 : vector<2x32xf32>
    %cst_156 = arith.constant 1.000000e+00 : f32
    %655 = vector.broadcast %cst_156 : f32 to vector<2x32xf32>
    %656 = arith.addf %655, %654 : vector<2x32xf32>
    %657 = arith.divf %655, %656 : vector<2x32xf32>
    %658 = vector.extract_strided_slice %638 {offsets = [0, 64], sizes = [2, 32], strides = [1, 1]} : vector<2x96xf32> to vector<2x32xf32>
    %659 = vector.extract_strided_slice %641 {offsets = [0, 64], sizes = [2, 32], strides = [1, 1]} : vector<2x96xf32> to vector<2x32xf32>
    %660 = arith.mulf %649, %659 : vector<2x32xf32>
    %661 = arith.addf %658, %660 : vector<2x32xf32>
    %662 = math.tanh %661 : vector<2x32xf32>
    %cst_157 = arith.constant 1.000000e+00 : f32
    %663 = vector.broadcast %cst_157 : f32 to vector<2x32xf32>
    %664 = arith.subf %663, %657 : vector<2x32xf32>
    %665 = arith.mulf %664, %662 : vector<2x32xf32>
    %666 = arith.mulf %657, %604 : vector<2x32xf32>
    %667 = arith.addf %665, %666 : vector<2x32xf32>
    %668 = vector.extract_strided_slice %0 {offsets = [4, 0, 0], sizes = [1, 2, 16], strides = [1, 1, 1]} : vector<8x2x16xf32> to vector<1x2x16xf32>
    %669 = vector.shape_cast %668 : vector<1x2x16xf32> to vector<2x16xf32>
    %670 = vector.extract_strided_slice %1 {offsets = [4, 0, 0], sizes = [1, 2, 16], strides = [1, 1, 1]} : vector<8x2x16xf32> to vector<1x2x16xf32>
    %671 = vector.shape_cast %670 : vector<1x2x16xf32> to vector<2x16xf32>
    %672 = vector.extract_strided_slice %13 {offsets = [4, 0, 0], sizes = [1, 2, 16], strides = [1, 1, 1]} : vector<8x2x16xf32> to vector<1x2x16xf32>
    %673 = vector.shape_cast %672 : vector<1x2x16xf32> to vector<2x16xf32>
    %674 = vector.extract_strided_slice %27 {offsets = [4, 0, 0], sizes = [1, 2, 32], strides = [1, 1, 1]} : vector<8x2x32xf32> to vector<1x2x32xf32>
    %675 = vector.shape_cast %674 : vector<1x2x32xf32> to vector<2x32xf32>
    %676 = arith.mulf %595, %675 : vector<2x32xf32>
    %cst_158 = arith.constant dense<0.000000e+00> : vector<2x16xf32>
    %677 = tpu.matmul %676, %61, %cst_158 {dimension_numbers = #tpu.dot_dimension_numbers<[1], [0], [0], [1], [0, 0, 1, 1], [], []>} : vector<2x32xf32>, vector<32x16xf32>, vector<2x16xf32> -> vector<2x16xf32>
    %678 = vector.broadcast %65 : vector<1x16xf32> to vector<2x16xf32>
    %679 = arith.addf %677, %678 : vector<2x16xf32>
    %680 = arith.mulf %671, %669 : vector<2x16xf32>
    %cst_159 = arith.constant 1.000000e+00 : f32
    %681 = vector.broadcast %cst_159 : f32 to vector<2x16xf32>
    %682 = arith.subf %681, %671 : vector<2x16xf32>
    %683 = arith.mulf %682, %679 : vector<2x16xf32>
    %684 = arith.addf %680, %683 : vector<2x16xf32>
    %cst_160 = arith.constant dense<0.000000e+00> : vector<2x16xf32>
    %685 = tpu.matmul %684, %69, %cst_160 {dimension_numbers = #tpu.dot_dimension_numbers<[1], [0], [0], [1], [0, 0, 1, 1], [], []>} : vector<2x16xf32>, vector<16x16xf32>, vector<2x16xf32> -> vector<2x16xf32>
    %686 = vector.broadcast %73 : vector<1x16xf32> to vector<2x16xf32>
    %687 = arith.addf %685, %686 : vector<2x16xf32>
    %688 = vector.extract_strided_slice %42 {offsets = [4, 0, 0], sizes = [1, 2, 16], strides = [1, 1, 1]} : vector<8x2x16xf32> to vector<1x2x16xf32>
    %689 = vector.shape_cast %688 : vector<1x2x16xf32> to vector<2x16xf32>
    %690 = arith.mulf %689, %687 : vector<2x16xf32>
    %cst_161 = arith.constant 1.000000e+00 : f32
    %691 = vector.broadcast %cst_161 : f32 to vector<2x16xf32>
    %692 = arith.subf %691, %689 : vector<2x16xf32>
    %693 = arith.mulf %692, %679 : vector<2x16xf32>
    %694 = arith.addf %690, %693 : vector<2x16xf32>
    %695 = arith.mulf %682, %694 : vector<2x16xf32>
    %696 = arith.addf %680, %695 : vector<2x16xf32>
    %697 = arith.subf %669, %679 : vector<2x16xf32>
    %698 = math.absf %697 : vector<2x16xf32>
    %699 = arith.subf %669, %687 : vector<2x16xf32>
    %700 = math.absf %699 : vector<2x16xf32>
    %701 = arith.addf %698, %700 : vector<2x16xf32>
    %702 = arith.subf %669, %694 : vector<2x16xf32>
    %703 = math.absf %702 : vector<2x16xf32>
    %704 = arith.addf %701, %703 : vector<2x16xf32>
    %705 = arith.mulf %704, %673 : vector<2x16xf32>
    %706 = arith.addf %562, %705 : vector<2x16xf32>
    %cst_162 = arith.constant dense<0.000000e+00> : vector<2x96xf32>
    %707 = tpu.matmul %696, %77, %cst_162 {dimension_numbers = #tpu.dot_dimension_numbers<[1], [0], [0], [1], [0, 0, 1, 1], [], []>} : vector<2x16xf32>, vector<16x96xf32>, vector<2x96xf32> -> vector<2x96xf32>
    %708 = vector.extract_strided_slice %44 {offsets = [4, 0, 0], sizes = [1, 2, 96], strides = [1, 1, 1]} : vector<8x2x96xf32> to vector<1x2x96xf32>
    %709 = vector.shape_cast %708 : vector<1x2x96xf32> to vector<2x96xf32>
    %710 = arith.addf %707, %709 : vector<2x96xf32>
    %cst_163 = arith.constant dense<0.000000e+00> : vector<2x96xf32>
    %711 = tpu.matmul %676, %81, %cst_163 {dimension_numbers = #tpu.dot_dimension_numbers<[1], [0], [0], [1], [0, 0, 1, 1], [], []>} : vector<2x32xf32>, vector<32x96xf32>, vector<2x96xf32> -> vector<2x96xf32>
    %712 = vector.broadcast %85 : vector<1x96xf32> to vector<2x96xf32>
    %713 = arith.addf %711, %712 : vector<2x96xf32>
    %714 = vector.extract_strided_slice %710 {offsets = [0, 0], sizes = [2, 32], strides = [1, 1]} : vector<2x96xf32> to vector<2x32xf32>
    %715 = vector.extract_strided_slice %713 {offsets = [0, 0], sizes = [2, 32], strides = [1, 1]} : vector<2x96xf32> to vector<2x32xf32>
    %716 = arith.addf %714, %715 : vector<2x32xf32>
    %717 = arith.negf %716 : vector<2x32xf32>
    %718 = math.exp %717 : vector<2x32xf32>
    %cst_164 = arith.constant 1.000000e+00 : f32
    %719 = vector.broadcast %cst_164 : f32 to vector<2x32xf32>
    %720 = arith.addf %719, %718 : vector<2x32xf32>
    %721 = arith.divf %719, %720 : vector<2x32xf32>
    %722 = vector.extract_strided_slice %710 {offsets = [0, 32], sizes = [2, 32], strides = [1, 1]} : vector<2x96xf32> to vector<2x32xf32>
    %723 = vector.extract_strided_slice %713 {offsets = [0, 32], sizes = [2, 32], strides = [1, 1]} : vector<2x96xf32> to vector<2x32xf32>
    %724 = arith.addf %722, %723 : vector<2x32xf32>
    %725 = arith.negf %724 : vector<2x32xf32>
    %726 = math.exp %725 : vector<2x32xf32>
    %cst_165 = arith.constant 1.000000e+00 : f32
    %727 = vector.broadcast %cst_165 : f32 to vector<2x32xf32>
    %728 = arith.addf %727, %726 : vector<2x32xf32>
    %729 = arith.divf %727, %728 : vector<2x32xf32>
    %730 = vector.extract_strided_slice %710 {offsets = [0, 64], sizes = [2, 32], strides = [1, 1]} : vector<2x96xf32> to vector<2x32xf32>
    %731 = vector.extract_strided_slice %713 {offsets = [0, 64], sizes = [2, 32], strides = [1, 1]} : vector<2x96xf32> to vector<2x32xf32>
    %732 = arith.mulf %721, %731 : vector<2x32xf32>
    %733 = arith.addf %730, %732 : vector<2x32xf32>
    %734 = math.tanh %733 : vector<2x32xf32>
    %cst_166 = arith.constant 1.000000e+00 : f32
    %735 = vector.broadcast %cst_166 : f32 to vector<2x32xf32>
    %736 = arith.subf %735, %729 : vector<2x32xf32>
    %737 = arith.mulf %736, %734 : vector<2x32xf32>
    %738 = arith.mulf %729, %676 : vector<2x32xf32>
    %739 = arith.addf %737, %738 : vector<2x32xf32>
    %740 = vector.extract_strided_slice %0 {offsets = [3, 0, 0], sizes = [1, 2, 16], strides = [1, 1, 1]} : vector<8x2x16xf32> to vector<1x2x16xf32>
    %741 = vector.shape_cast %740 : vector<1x2x16xf32> to vector<2x16xf32>
    %742 = vector.extract_strided_slice %1 {offsets = [3, 0, 0], sizes = [1, 2, 16], strides = [1, 1, 1]} : vector<8x2x16xf32> to vector<1x2x16xf32>
    %743 = vector.shape_cast %742 : vector<1x2x16xf32> to vector<2x16xf32>
    %744 = vector.extract_strided_slice %13 {offsets = [3, 0, 0], sizes = [1, 2, 16], strides = [1, 1, 1]} : vector<8x2x16xf32> to vector<1x2x16xf32>
    %745 = vector.shape_cast %744 : vector<1x2x16xf32> to vector<2x16xf32>
    %746 = vector.extract_strided_slice %29 {offsets = [3, 0, 0], sizes = [1, 2, 32], strides = [1, 1, 1]} : vector<8x2x32xf32> to vector<1x2x32xf32>
    %747 = vector.shape_cast %746 : vector<1x2x32xf32> to vector<2x32xf32>
    %748 = arith.mulf %667, %747 : vector<2x32xf32>
    %cst_167 = arith.constant dense<0.000000e+00> : vector<2x16xf32>
    %749 = tpu.matmul %748, %63, %cst_167 {dimension_numbers = #tpu.dot_dimension_numbers<[1], [0], [0], [1], [0, 0, 1, 1], [], []>} : vector<2x32xf32>, vector<32x16xf32>, vector<2x16xf32> -> vector<2x16xf32>
    %750 = vector.broadcast %67 : vector<1x16xf32> to vector<2x16xf32>
    %751 = arith.addf %749, %750 : vector<2x16xf32>
    %752 = arith.mulf %743, %741 : vector<2x16xf32>
    %cst_168 = arith.constant 1.000000e+00 : f32
    %753 = vector.broadcast %cst_168 : f32 to vector<2x16xf32>
    %754 = arith.subf %753, %743 : vector<2x16xf32>
    %755 = arith.mulf %754, %751 : vector<2x16xf32>
    %756 = arith.addf %752, %755 : vector<2x16xf32>
    %cst_169 = arith.constant dense<0.000000e+00> : vector<2x16xf32>
    %757 = tpu.matmul %756, %71, %cst_169 {dimension_numbers = #tpu.dot_dimension_numbers<[1], [0], [0], [1], [0, 0, 1, 1], [], []>} : vector<2x16xf32>, vector<16x16xf32>, vector<2x16xf32> -> vector<2x16xf32>
    %758 = vector.broadcast %75 : vector<1x16xf32> to vector<2x16xf32>
    %759 = arith.addf %757, %758 : vector<2x16xf32>
    %760 = vector.extract_strided_slice %57 {offsets = [3, 0, 0], sizes = [1, 2, 16], strides = [1, 1, 1]} : vector<8x2x16xf32> to vector<1x2x16xf32>
    %761 = vector.shape_cast %760 : vector<1x2x16xf32> to vector<2x16xf32>
    %762 = arith.mulf %761, %759 : vector<2x16xf32>
    %cst_170 = arith.constant 1.000000e+00 : f32
    %763 = vector.broadcast %cst_170 : f32 to vector<2x16xf32>
    %764 = arith.subf %763, %761 : vector<2x16xf32>
    %765 = arith.mulf %764, %751 : vector<2x16xf32>
    %766 = arith.addf %762, %765 : vector<2x16xf32>
    %767 = arith.mulf %754, %766 : vector<2x16xf32>
    %768 = arith.addf %752, %767 : vector<2x16xf32>
    %769 = arith.subf %741, %751 : vector<2x16xf32>
    %770 = math.absf %769 : vector<2x16xf32>
    %771 = arith.subf %741, %759 : vector<2x16xf32>
    %772 = math.absf %771 : vector<2x16xf32>
    %773 = arith.addf %770, %772 : vector<2x16xf32>
    %774 = arith.subf %741, %766 : vector<2x16xf32>
    %775 = math.absf %774 : vector<2x16xf32>
    %776 = arith.addf %773, %775 : vector<2x16xf32>
    %777 = arith.mulf %776, %745 : vector<2x16xf32>
    %778 = arith.addf %634, %777 : vector<2x16xf32>
    %cst_171 = arith.constant dense<0.000000e+00> : vector<2x96xf32>
    %779 = tpu.matmul %768, %79, %cst_171 {dimension_numbers = #tpu.dot_dimension_numbers<[1], [0], [0], [1], [0, 0, 1, 1], [], []>} : vector<2x16xf32>, vector<16x96xf32>, vector<2x96xf32> -> vector<2x96xf32>
    %780 = vector.extract_strided_slice %59 {offsets = [3, 0, 0], sizes = [1, 2, 96], strides = [1, 1, 1]} : vector<8x2x96xf32> to vector<1x2x96xf32>
    %781 = vector.shape_cast %780 : vector<1x2x96xf32> to vector<2x96xf32>
    %782 = arith.addf %779, %781 : vector<2x96xf32>
    %cst_172 = arith.constant dense<0.000000e+00> : vector<2x96xf32>
    %783 = tpu.matmul %748, %83, %cst_172 {dimension_numbers = #tpu.dot_dimension_numbers<[1], [0], [0], [1], [0, 0, 1, 1], [], []>} : vector<2x32xf32>, vector<32x96xf32>, vector<2x96xf32> -> vector<2x96xf32>
    %784 = vector.broadcast %87 : vector<1x96xf32> to vector<2x96xf32>
    %785 = arith.addf %783, %784 : vector<2x96xf32>
    %786 = vector.extract_strided_slice %782 {offsets = [0, 0], sizes = [2, 32], strides = [1, 1]} : vector<2x96xf32> to vector<2x32xf32>
    %787 = vector.extract_strided_slice %785 {offsets = [0, 0], sizes = [2, 32], strides = [1, 1]} : vector<2x96xf32> to vector<2x32xf32>
    %788 = arith.addf %786, %787 : vector<2x32xf32>
    %789 = arith.negf %788 : vector<2x32xf32>
    %790 = math.exp %789 : vector<2x32xf32>
    %cst_173 = arith.constant 1.000000e+00 : f32
    %791 = vector.broadcast %cst_173 : f32 to vector<2x32xf32>
    %792 = arith.addf %791, %790 : vector<2x32xf32>
    %793 = arith.divf %791, %792 : vector<2x32xf32>
    %794 = vector.extract_strided_slice %782 {offsets = [0, 32], sizes = [2, 32], strides = [1, 1]} : vector<2x96xf32> to vector<2x32xf32>
    %795 = vector.extract_strided_slice %785 {offsets = [0, 32], sizes = [2, 32], strides = [1, 1]} : vector<2x96xf32> to vector<2x32xf32>
    %796 = arith.addf %794, %795 : vector<2x32xf32>
    %797 = arith.negf %796 : vector<2x32xf32>
    %798 = math.exp %797 : vector<2x32xf32>
    %cst_174 = arith.constant 1.000000e+00 : f32
    %799 = vector.broadcast %cst_174 : f32 to vector<2x32xf32>
    %800 = arith.addf %799, %798 : vector<2x32xf32>
    %801 = arith.divf %799, %800 : vector<2x32xf32>
    %802 = vector.extract_strided_slice %782 {offsets = [0, 64], sizes = [2, 32], strides = [1, 1]} : vector<2x96xf32> to vector<2x32xf32>
    %803 = vector.extract_strided_slice %785 {offsets = [0, 64], sizes = [2, 32], strides = [1, 1]} : vector<2x96xf32> to vector<2x32xf32>
    %804 = arith.mulf %793, %803 : vector<2x32xf32>
    %805 = arith.addf %802, %804 : vector<2x32xf32>
    %806 = math.tanh %805 : vector<2x32xf32>
    %cst_175 = arith.constant 1.000000e+00 : f32
    %807 = vector.broadcast %cst_175 : f32 to vector<2x32xf32>
    %808 = arith.subf %807, %801 : vector<2x32xf32>
    %809 = arith.mulf %808, %806 : vector<2x32xf32>
    %810 = arith.mulf %801, %748 : vector<2x32xf32>
    %811 = arith.addf %809, %810 : vector<2x32xf32>
    %812 = vector.extract_strided_slice %0 {offsets = [5, 0, 0], sizes = [1, 2, 16], strides = [1, 1, 1]} : vector<8x2x16xf32> to vector<1x2x16xf32>
    %813 = vector.shape_cast %812 : vector<1x2x16xf32> to vector<2x16xf32>
    %814 = vector.extract_strided_slice %1 {offsets = [5, 0, 0], sizes = [1, 2, 16], strides = [1, 1, 1]} : vector<8x2x16xf32> to vector<1x2x16xf32>
    %815 = vector.shape_cast %814 : vector<1x2x16xf32> to vector<2x16xf32>
    %816 = vector.extract_strided_slice %13 {offsets = [5, 0, 0], sizes = [1, 2, 16], strides = [1, 1, 1]} : vector<8x2x16xf32> to vector<1x2x16xf32>
    %817 = vector.shape_cast %816 : vector<1x2x16xf32> to vector<2x16xf32>
    %818 = vector.extract_strided_slice %27 {offsets = [5, 0, 0], sizes = [1, 2, 32], strides = [1, 1, 1]} : vector<8x2x32xf32> to vector<1x2x32xf32>
    %819 = vector.shape_cast %818 : vector<1x2x32xf32> to vector<2x32xf32>
    %820 = arith.mulf %739, %819 : vector<2x32xf32>
    %cst_176 = arith.constant dense<0.000000e+00> : vector<2x16xf32>
    %821 = tpu.matmul %820, %61, %cst_176 {dimension_numbers = #tpu.dot_dimension_numbers<[1], [0], [0], [1], [0, 0, 1, 1], [], []>} : vector<2x32xf32>, vector<32x16xf32>, vector<2x16xf32> -> vector<2x16xf32>
    %822 = vector.broadcast %65 : vector<1x16xf32> to vector<2x16xf32>
    %823 = arith.addf %821, %822 : vector<2x16xf32>
    %824 = arith.mulf %815, %813 : vector<2x16xf32>
    %cst_177 = arith.constant 1.000000e+00 : f32
    %825 = vector.broadcast %cst_177 : f32 to vector<2x16xf32>
    %826 = arith.subf %825, %815 : vector<2x16xf32>
    %827 = arith.mulf %826, %823 : vector<2x16xf32>
    %828 = arith.addf %824, %827 : vector<2x16xf32>
    %cst_178 = arith.constant dense<0.000000e+00> : vector<2x16xf32>
    %829 = tpu.matmul %828, %69, %cst_178 {dimension_numbers = #tpu.dot_dimension_numbers<[1], [0], [0], [1], [0, 0, 1, 1], [], []>} : vector<2x16xf32>, vector<16x16xf32>, vector<2x16xf32> -> vector<2x16xf32>
    %830 = vector.broadcast %73 : vector<1x16xf32> to vector<2x16xf32>
    %831 = arith.addf %829, %830 : vector<2x16xf32>
    %832 = vector.extract_strided_slice %42 {offsets = [5, 0, 0], sizes = [1, 2, 16], strides = [1, 1, 1]} : vector<8x2x16xf32> to vector<1x2x16xf32>
    %833 = vector.shape_cast %832 : vector<1x2x16xf32> to vector<2x16xf32>
    %834 = arith.mulf %833, %831 : vector<2x16xf32>
    %cst_179 = arith.constant 1.000000e+00 : f32
    %835 = vector.broadcast %cst_179 : f32 to vector<2x16xf32>
    %836 = arith.subf %835, %833 : vector<2x16xf32>
    %837 = arith.mulf %836, %823 : vector<2x16xf32>
    %838 = arith.addf %834, %837 : vector<2x16xf32>
    %839 = arith.mulf %826, %838 : vector<2x16xf32>
    %840 = arith.addf %824, %839 : vector<2x16xf32>
    %841 = arith.subf %813, %823 : vector<2x16xf32>
    %842 = math.absf %841 : vector<2x16xf32>
    %843 = arith.subf %813, %831 : vector<2x16xf32>
    %844 = math.absf %843 : vector<2x16xf32>
    %845 = arith.addf %842, %844 : vector<2x16xf32>
    %846 = arith.subf %813, %838 : vector<2x16xf32>
    %847 = math.absf %846 : vector<2x16xf32>
    %848 = arith.addf %845, %847 : vector<2x16xf32>
    %849 = arith.mulf %848, %817 : vector<2x16xf32>
    %850 = arith.addf %706, %849 : vector<2x16xf32>
    %cst_180 = arith.constant dense<0.000000e+00> : vector<2x96xf32>
    %851 = tpu.matmul %840, %77, %cst_180 {dimension_numbers = #tpu.dot_dimension_numbers<[1], [0], [0], [1], [0, 0, 1, 1], [], []>} : vector<2x16xf32>, vector<16x96xf32>, vector<2x96xf32> -> vector<2x96xf32>
    %852 = vector.extract_strided_slice %44 {offsets = [5, 0, 0], sizes = [1, 2, 96], strides = [1, 1, 1]} : vector<8x2x96xf32> to vector<1x2x96xf32>
    %853 = vector.shape_cast %852 : vector<1x2x96xf32> to vector<2x96xf32>
    %854 = arith.addf %851, %853 : vector<2x96xf32>
    %cst_181 = arith.constant dense<0.000000e+00> : vector<2x96xf32>
    %855 = tpu.matmul %820, %81, %cst_181 {dimension_numbers = #tpu.dot_dimension_numbers<[1], [0], [0], [1], [0, 0, 1, 1], [], []>} : vector<2x32xf32>, vector<32x96xf32>, vector<2x96xf32> -> vector<2x96xf32>
    %856 = vector.broadcast %85 : vector<1x96xf32> to vector<2x96xf32>
    %857 = arith.addf %855, %856 : vector<2x96xf32>
    %858 = vector.extract_strided_slice %854 {offsets = [0, 0], sizes = [2, 32], strides = [1, 1]} : vector<2x96xf32> to vector<2x32xf32>
    %859 = vector.extract_strided_slice %857 {offsets = [0, 0], sizes = [2, 32], strides = [1, 1]} : vector<2x96xf32> to vector<2x32xf32>
    %860 = arith.addf %858, %859 : vector<2x32xf32>
    %861 = arith.negf %860 : vector<2x32xf32>
    %862 = math.exp %861 : vector<2x32xf32>
    %cst_182 = arith.constant 1.000000e+00 : f32
    %863 = vector.broadcast %cst_182 : f32 to vector<2x32xf32>
    %864 = arith.addf %863, %862 : vector<2x32xf32>
    %865 = arith.divf %863, %864 : vector<2x32xf32>
    %866 = vector.extract_strided_slice %854 {offsets = [0, 32], sizes = [2, 32], strides = [1, 1]} : vector<2x96xf32> to vector<2x32xf32>
    %867 = vector.extract_strided_slice %857 {offsets = [0, 32], sizes = [2, 32], strides = [1, 1]} : vector<2x96xf32> to vector<2x32xf32>
    %868 = arith.addf %866, %867 : vector<2x32xf32>
    %869 = arith.negf %868 : vector<2x32xf32>
    %870 = math.exp %869 : vector<2x32xf32>
    %cst_183 = arith.constant 1.000000e+00 : f32
    %871 = vector.broadcast %cst_183 : f32 to vector<2x32xf32>
    %872 = arith.addf %871, %870 : vector<2x32xf32>
    %873 = arith.divf %871, %872 : vector<2x32xf32>
    %874 = vector.extract_strided_slice %854 {offsets = [0, 64], sizes = [2, 32], strides = [1, 1]} : vector<2x96xf32> to vector<2x32xf32>
    %875 = vector.extract_strided_slice %857 {offsets = [0, 64], sizes = [2, 32], strides = [1, 1]} : vector<2x96xf32> to vector<2x32xf32>
    %876 = arith.mulf %865, %875 : vector<2x32xf32>
    %877 = arith.addf %874, %876 : vector<2x32xf32>
    %878 = math.tanh %877 : vector<2x32xf32>
    %cst_184 = arith.constant 1.000000e+00 : f32
    %879 = vector.broadcast %cst_184 : f32 to vector<2x32xf32>
    %880 = arith.subf %879, %873 : vector<2x32xf32>
    %881 = arith.mulf %880, %878 : vector<2x32xf32>
    %882 = arith.mulf %873, %820 : vector<2x32xf32>
    %883 = arith.addf %881, %882 : vector<2x32xf32>
    %884 = vector.extract_strided_slice %0 {offsets = [2, 0, 0], sizes = [1, 2, 16], strides = [1, 1, 1]} : vector<8x2x16xf32> to vector<1x2x16xf32>
    %885 = vector.shape_cast %884 : vector<1x2x16xf32> to vector<2x16xf32>
    %886 = vector.extract_strided_slice %1 {offsets = [2, 0, 0], sizes = [1, 2, 16], strides = [1, 1, 1]} : vector<8x2x16xf32> to vector<1x2x16xf32>
    %887 = vector.shape_cast %886 : vector<1x2x16xf32> to vector<2x16xf32>
    %888 = vector.extract_strided_slice %13 {offsets = [2, 0, 0], sizes = [1, 2, 16], strides = [1, 1, 1]} : vector<8x2x16xf32> to vector<1x2x16xf32>
    %889 = vector.shape_cast %888 : vector<1x2x16xf32> to vector<2x16xf32>
    %890 = vector.extract_strided_slice %29 {offsets = [2, 0, 0], sizes = [1, 2, 32], strides = [1, 1, 1]} : vector<8x2x32xf32> to vector<1x2x32xf32>
    %891 = vector.shape_cast %890 : vector<1x2x32xf32> to vector<2x32xf32>
    %892 = arith.mulf %811, %891 : vector<2x32xf32>
    %cst_185 = arith.constant dense<0.000000e+00> : vector<2x16xf32>
    %893 = tpu.matmul %892, %63, %cst_185 {dimension_numbers = #tpu.dot_dimension_numbers<[1], [0], [0], [1], [0, 0, 1, 1], [], []>} : vector<2x32xf32>, vector<32x16xf32>, vector<2x16xf32> -> vector<2x16xf32>
    %894 = vector.broadcast %67 : vector<1x16xf32> to vector<2x16xf32>
    %895 = arith.addf %893, %894 : vector<2x16xf32>
    %896 = arith.mulf %887, %885 : vector<2x16xf32>
    %cst_186 = arith.constant 1.000000e+00 : f32
    %897 = vector.broadcast %cst_186 : f32 to vector<2x16xf32>
    %898 = arith.subf %897, %887 : vector<2x16xf32>
    %899 = arith.mulf %898, %895 : vector<2x16xf32>
    %900 = arith.addf %896, %899 : vector<2x16xf32>
    %cst_187 = arith.constant dense<0.000000e+00> : vector<2x16xf32>
    %901 = tpu.matmul %900, %71, %cst_187 {dimension_numbers = #tpu.dot_dimension_numbers<[1], [0], [0], [1], [0, 0, 1, 1], [], []>} : vector<2x16xf32>, vector<16x16xf32>, vector<2x16xf32> -> vector<2x16xf32>
    %902 = vector.broadcast %75 : vector<1x16xf32> to vector<2x16xf32>
    %903 = arith.addf %901, %902 : vector<2x16xf32>
    %904 = vector.extract_strided_slice %57 {offsets = [2, 0, 0], sizes = [1, 2, 16], strides = [1, 1, 1]} : vector<8x2x16xf32> to vector<1x2x16xf32>
    %905 = vector.shape_cast %904 : vector<1x2x16xf32> to vector<2x16xf32>
    %906 = arith.mulf %905, %903 : vector<2x16xf32>
    %cst_188 = arith.constant 1.000000e+00 : f32
    %907 = vector.broadcast %cst_188 : f32 to vector<2x16xf32>
    %908 = arith.subf %907, %905 : vector<2x16xf32>
    %909 = arith.mulf %908, %895 : vector<2x16xf32>
    %910 = arith.addf %906, %909 : vector<2x16xf32>
    %911 = arith.mulf %898, %910 : vector<2x16xf32>
    %912 = arith.addf %896, %911 : vector<2x16xf32>
    %913 = arith.subf %885, %895 : vector<2x16xf32>
    %914 = math.absf %913 : vector<2x16xf32>
    %915 = arith.subf %885, %903 : vector<2x16xf32>
    %916 = math.absf %915 : vector<2x16xf32>
    %917 = arith.addf %914, %916 : vector<2x16xf32>
    %918 = arith.subf %885, %910 : vector<2x16xf32>
    %919 = math.absf %918 : vector<2x16xf32>
    %920 = arith.addf %917, %919 : vector<2x16xf32>
    %921 = arith.mulf %920, %889 : vector<2x16xf32>
    %922 = arith.addf %778, %921 : vector<2x16xf32>
    %cst_189 = arith.constant dense<0.000000e+00> : vector<2x96xf32>
    %923 = tpu.matmul %912, %79, %cst_189 {dimension_numbers = #tpu.dot_dimension_numbers<[1], [0], [0], [1], [0, 0, 1, 1], [], []>} : vector<2x16xf32>, vector<16x96xf32>, vector<2x96xf32> -> vector<2x96xf32>
    %924 = vector.extract_strided_slice %59 {offsets = [2, 0, 0], sizes = [1, 2, 96], strides = [1, 1, 1]} : vector<8x2x96xf32> to vector<1x2x96xf32>
    %925 = vector.shape_cast %924 : vector<1x2x96xf32> to vector<2x96xf32>
    %926 = arith.addf %923, %925 : vector<2x96xf32>
    %cst_190 = arith.constant dense<0.000000e+00> : vector<2x96xf32>
    %927 = tpu.matmul %892, %83, %cst_190 {dimension_numbers = #tpu.dot_dimension_numbers<[1], [0], [0], [1], [0, 0, 1, 1], [], []>} : vector<2x32xf32>, vector<32x96xf32>, vector<2x96xf32> -> vector<2x96xf32>
    %928 = vector.broadcast %87 : vector<1x96xf32> to vector<2x96xf32>
    %929 = arith.addf %927, %928 : vector<2x96xf32>
    %930 = vector.extract_strided_slice %926 {offsets = [0, 0], sizes = [2, 32], strides = [1, 1]} : vector<2x96xf32> to vector<2x32xf32>
    %931 = vector.extract_strided_slice %929 {offsets = [0, 0], sizes = [2, 32], strides = [1, 1]} : vector<2x96xf32> to vector<2x32xf32>
    %932 = arith.addf %930, %931 : vector<2x32xf32>
    %933 = arith.negf %932 : vector<2x32xf32>
    %934 = math.exp %933 : vector<2x32xf32>
    %cst_191 = arith.constant 1.000000e+00 : f32
    %935 = vector.broadcast %cst_191 : f32 to vector<2x32xf32>
    %936 = arith.addf %935, %934 : vector<2x32xf32>
    %937 = arith.divf %935, %936 : vector<2x32xf32>
    %938 = vector.extract_strided_slice %926 {offsets = [0, 32], sizes = [2, 32], strides = [1, 1]} : vector<2x96xf32> to vector<2x32xf32>
    %939 = vector.extract_strided_slice %929 {offsets = [0, 32], sizes = [2, 32], strides = [1, 1]} : vector<2x96xf32> to vector<2x32xf32>
    %940 = arith.addf %938, %939 : vector<2x32xf32>
    %941 = arith.negf %940 : vector<2x32xf32>
    %942 = math.exp %941 : vector<2x32xf32>
    %cst_192 = arith.constant 1.000000e+00 : f32
    %943 = vector.broadcast %cst_192 : f32 to vector<2x32xf32>
    %944 = arith.addf %943, %942 : vector<2x32xf32>
    %945 = arith.divf %943, %944 : vector<2x32xf32>
    %946 = vector.extract_strided_slice %926 {offsets = [0, 64], sizes = [2, 32], strides = [1, 1]} : vector<2x96xf32> to vector<2x32xf32>
    %947 = vector.extract_strided_slice %929 {offsets = [0, 64], sizes = [2, 32], strides = [1, 1]} : vector<2x96xf32> to vector<2x32xf32>
    %948 = arith.mulf %937, %947 : vector<2x32xf32>
    %949 = arith.addf %946, %948 : vector<2x32xf32>
    %950 = math.tanh %949 : vector<2x32xf32>
    %cst_193 = arith.constant 1.000000e+00 : f32
    %951 = vector.broadcast %cst_193 : f32 to vector<2x32xf32>
    %952 = arith.subf %951, %945 : vector<2x32xf32>
    %953 = arith.mulf %952, %950 : vector<2x32xf32>
    %954 = arith.mulf %945, %892 : vector<2x32xf32>
    %955 = arith.addf %953, %954 : vector<2x32xf32>
    %956 = vector.extract_strided_slice %0 {offsets = [6, 0, 0], sizes = [1, 2, 16], strides = [1, 1, 1]} : vector<8x2x16xf32> to vector<1x2x16xf32>
    %957 = vector.shape_cast %956 : vector<1x2x16xf32> to vector<2x16xf32>
    %958 = vector.extract_strided_slice %1 {offsets = [6, 0, 0], sizes = [1, 2, 16], strides = [1, 1, 1]} : vector<8x2x16xf32> to vector<1x2x16xf32>
    %959 = vector.shape_cast %958 : vector<1x2x16xf32> to vector<2x16xf32>
    %960 = vector.extract_strided_slice %13 {offsets = [6, 0, 0], sizes = [1, 2, 16], strides = [1, 1, 1]} : vector<8x2x16xf32> to vector<1x2x16xf32>
    %961 = vector.shape_cast %960 : vector<1x2x16xf32> to vector<2x16xf32>
    %962 = vector.extract_strided_slice %27 {offsets = [6, 0, 0], sizes = [1, 2, 32], strides = [1, 1, 1]} : vector<8x2x32xf32> to vector<1x2x32xf32>
    %963 = vector.shape_cast %962 : vector<1x2x32xf32> to vector<2x32xf32>
    %964 = arith.mulf %883, %963 : vector<2x32xf32>
    %cst_194 = arith.constant dense<0.000000e+00> : vector<2x16xf32>
    %965 = tpu.matmul %964, %61, %cst_194 {dimension_numbers = #tpu.dot_dimension_numbers<[1], [0], [0], [1], [0, 0, 1, 1], [], []>} : vector<2x32xf32>, vector<32x16xf32>, vector<2x16xf32> -> vector<2x16xf32>
    %966 = vector.broadcast %65 : vector<1x16xf32> to vector<2x16xf32>
    %967 = arith.addf %965, %966 : vector<2x16xf32>
    %968 = arith.mulf %959, %957 : vector<2x16xf32>
    %cst_195 = arith.constant 1.000000e+00 : f32
    %969 = vector.broadcast %cst_195 : f32 to vector<2x16xf32>
    %970 = arith.subf %969, %959 : vector<2x16xf32>
    %971 = arith.mulf %970, %967 : vector<2x16xf32>
    %972 = arith.addf %968, %971 : vector<2x16xf32>
    %cst_196 = arith.constant dense<0.000000e+00> : vector<2x16xf32>
    %973 = tpu.matmul %972, %69, %cst_196 {dimension_numbers = #tpu.dot_dimension_numbers<[1], [0], [0], [1], [0, 0, 1, 1], [], []>} : vector<2x16xf32>, vector<16x16xf32>, vector<2x16xf32> -> vector<2x16xf32>
    %974 = vector.broadcast %73 : vector<1x16xf32> to vector<2x16xf32>
    %975 = arith.addf %973, %974 : vector<2x16xf32>
    %976 = vector.extract_strided_slice %42 {offsets = [6, 0, 0], sizes = [1, 2, 16], strides = [1, 1, 1]} : vector<8x2x16xf32> to vector<1x2x16xf32>
    %977 = vector.shape_cast %976 : vector<1x2x16xf32> to vector<2x16xf32>
    %978 = arith.mulf %977, %975 : vector<2x16xf32>
    %cst_197 = arith.constant 1.000000e+00 : f32
    %979 = vector.broadcast %cst_197 : f32 to vector<2x16xf32>
    %980 = arith.subf %979, %977 : vector<2x16xf32>
    %981 = arith.mulf %980, %967 : vector<2x16xf32>
    %982 = arith.addf %978, %981 : vector<2x16xf32>
    %983 = arith.mulf %970, %982 : vector<2x16xf32>
    %984 = arith.addf %968, %983 : vector<2x16xf32>
    %985 = arith.subf %957, %967 : vector<2x16xf32>
    %986 = math.absf %985 : vector<2x16xf32>
    %987 = arith.subf %957, %975 : vector<2x16xf32>
    %988 = math.absf %987 : vector<2x16xf32>
    %989 = arith.addf %986, %988 : vector<2x16xf32>
    %990 = arith.subf %957, %982 : vector<2x16xf32>
    %991 = math.absf %990 : vector<2x16xf32>
    %992 = arith.addf %989, %991 : vector<2x16xf32>
    %993 = arith.mulf %992, %961 : vector<2x16xf32>
    %994 = arith.addf %850, %993 : vector<2x16xf32>
    %cst_198 = arith.constant dense<0.000000e+00> : vector<2x96xf32>
    %995 = tpu.matmul %984, %77, %cst_198 {dimension_numbers = #tpu.dot_dimension_numbers<[1], [0], [0], [1], [0, 0, 1, 1], [], []>} : vector<2x16xf32>, vector<16x96xf32>, vector<2x96xf32> -> vector<2x96xf32>
    %996 = vector.extract_strided_slice %44 {offsets = [6, 0, 0], sizes = [1, 2, 96], strides = [1, 1, 1]} : vector<8x2x96xf32> to vector<1x2x96xf32>
    %997 = vector.shape_cast %996 : vector<1x2x96xf32> to vector<2x96xf32>
    %998 = arith.addf %995, %997 : vector<2x96xf32>
    %cst_199 = arith.constant dense<0.000000e+00> : vector<2x96xf32>
    %999 = tpu.matmul %964, %81, %cst_199 {dimension_numbers = #tpu.dot_dimension_numbers<[1], [0], [0], [1], [0, 0, 1, 1], [], []>} : vector<2x32xf32>, vector<32x96xf32>, vector<2x96xf32> -> vector<2x96xf32>
    %1000 = vector.broadcast %85 : vector<1x96xf32> to vector<2x96xf32>
    %1001 = arith.addf %999, %1000 : vector<2x96xf32>
    %1002 = vector.extract_strided_slice %998 {offsets = [0, 0], sizes = [2, 32], strides = [1, 1]} : vector<2x96xf32> to vector<2x32xf32>
    %1003 = vector.extract_strided_slice %1001 {offsets = [0, 0], sizes = [2, 32], strides = [1, 1]} : vector<2x96xf32> to vector<2x32xf32>
    %1004 = arith.addf %1002, %1003 : vector<2x32xf32>
    %1005 = arith.negf %1004 : vector<2x32xf32>
    %1006 = math.exp %1005 : vector<2x32xf32>
    %cst_200 = arith.constant 1.000000e+00 : f32
    %1007 = vector.broadcast %cst_200 : f32 to vector<2x32xf32>
    %1008 = arith.addf %1007, %1006 : vector<2x32xf32>
    %1009 = arith.divf %1007, %1008 : vector<2x32xf32>
    %1010 = vector.extract_strided_slice %998 {offsets = [0, 32], sizes = [2, 32], strides = [1, 1]} : vector<2x96xf32> to vector<2x32xf32>
    %1011 = vector.extract_strided_slice %1001 {offsets = [0, 32], sizes = [2, 32], strides = [1, 1]} : vector<2x96xf32> to vector<2x32xf32>
    %1012 = arith.addf %1010, %1011 : vector<2x32xf32>
    %1013 = arith.negf %1012 : vector<2x32xf32>
    %1014 = math.exp %1013 : vector<2x32xf32>
    %cst_201 = arith.constant 1.000000e+00 : f32
    %1015 = vector.broadcast %cst_201 : f32 to vector<2x32xf32>
    %1016 = arith.addf %1015, %1014 : vector<2x32xf32>
    %1017 = arith.divf %1015, %1016 : vector<2x32xf32>
    %1018 = vector.extract_strided_slice %998 {offsets = [0, 64], sizes = [2, 32], strides = [1, 1]} : vector<2x96xf32> to vector<2x32xf32>
    %1019 = vector.extract_strided_slice %1001 {offsets = [0, 64], sizes = [2, 32], strides = [1, 1]} : vector<2x96xf32> to vector<2x32xf32>
    %1020 = arith.mulf %1009, %1019 : vector<2x32xf32>
    %1021 = arith.addf %1018, %1020 : vector<2x32xf32>
    %1022 = math.tanh %1021 : vector<2x32xf32>
    %cst_202 = arith.constant 1.000000e+00 : f32
    %1023 = vector.broadcast %cst_202 : f32 to vector<2x32xf32>
    %1024 = arith.subf %1023, %1017 : vector<2x32xf32>
    %1025 = arith.mulf %1024, %1022 : vector<2x32xf32>
    %1026 = arith.mulf %1017, %964 : vector<2x32xf32>
    %1027 = arith.addf %1025, %1026 : vector<2x32xf32>
    %1028 = vector.extract_strided_slice %0 {offsets = [1, 0, 0], sizes = [1, 2, 16], strides = [1, 1, 1]} : vector<8x2x16xf32> to vector<1x2x16xf32>
    %1029 = vector.shape_cast %1028 : vector<1x2x16xf32> to vector<2x16xf32>
    %1030 = vector.extract_strided_slice %1 {offsets = [1, 0, 0], sizes = [1, 2, 16], strides = [1, 1, 1]} : vector<8x2x16xf32> to vector<1x2x16xf32>
    %1031 = vector.shape_cast %1030 : vector<1x2x16xf32> to vector<2x16xf32>
    %1032 = vector.extract_strided_slice %13 {offsets = [1, 0, 0], sizes = [1, 2, 16], strides = [1, 1, 1]} : vector<8x2x16xf32> to vector<1x2x16xf32>
    %1033 = vector.shape_cast %1032 : vector<1x2x16xf32> to vector<2x16xf32>
    %1034 = vector.extract_strided_slice %29 {offsets = [1, 0, 0], sizes = [1, 2, 32], strides = [1, 1, 1]} : vector<8x2x32xf32> to vector<1x2x32xf32>
    %1035 = vector.shape_cast %1034 : vector<1x2x32xf32> to vector<2x32xf32>
    %1036 = arith.mulf %955, %1035 : vector<2x32xf32>
    %cst_203 = arith.constant dense<0.000000e+00> : vector<2x16xf32>
    %1037 = tpu.matmul %1036, %63, %cst_203 {dimension_numbers = #tpu.dot_dimension_numbers<[1], [0], [0], [1], [0, 0, 1, 1], [], []>} : vector<2x32xf32>, vector<32x16xf32>, vector<2x16xf32> -> vector<2x16xf32>
    %1038 = vector.broadcast %67 : vector<1x16xf32> to vector<2x16xf32>
    %1039 = arith.addf %1037, %1038 : vector<2x16xf32>
    %1040 = arith.mulf %1031, %1029 : vector<2x16xf32>
    %cst_204 = arith.constant 1.000000e+00 : f32
    %1041 = vector.broadcast %cst_204 : f32 to vector<2x16xf32>
    %1042 = arith.subf %1041, %1031 : vector<2x16xf32>
    %1043 = arith.mulf %1042, %1039 : vector<2x16xf32>
    %1044 = arith.addf %1040, %1043 : vector<2x16xf32>
    %cst_205 = arith.constant dense<0.000000e+00> : vector<2x16xf32>
    %1045 = tpu.matmul %1044, %71, %cst_205 {dimension_numbers = #tpu.dot_dimension_numbers<[1], [0], [0], [1], [0, 0, 1, 1], [], []>} : vector<2x16xf32>, vector<16x16xf32>, vector<2x16xf32> -> vector<2x16xf32>
    %1046 = vector.broadcast %75 : vector<1x16xf32> to vector<2x16xf32>
    %1047 = arith.addf %1045, %1046 : vector<2x16xf32>
    %1048 = vector.extract_strided_slice %57 {offsets = [1, 0, 0], sizes = [1, 2, 16], strides = [1, 1, 1]} : vector<8x2x16xf32> to vector<1x2x16xf32>
    %1049 = vector.shape_cast %1048 : vector<1x2x16xf32> to vector<2x16xf32>
    %1050 = arith.mulf %1049, %1047 : vector<2x16xf32>
    %cst_206 = arith.constant 1.000000e+00 : f32
    %1051 = vector.broadcast %cst_206 : f32 to vector<2x16xf32>
    %1052 = arith.subf %1051, %1049 : vector<2x16xf32>
    %1053 = arith.mulf %1052, %1039 : vector<2x16xf32>
    %1054 = arith.addf %1050, %1053 : vector<2x16xf32>
    %1055 = arith.mulf %1042, %1054 : vector<2x16xf32>
    %1056 = arith.addf %1040, %1055 : vector<2x16xf32>
    %1057 = arith.subf %1029, %1039 : vector<2x16xf32>
    %1058 = math.absf %1057 : vector<2x16xf32>
    %1059 = arith.subf %1029, %1047 : vector<2x16xf32>
    %1060 = math.absf %1059 : vector<2x16xf32>
    %1061 = arith.addf %1058, %1060 : vector<2x16xf32>
    %1062 = arith.subf %1029, %1054 : vector<2x16xf32>
    %1063 = math.absf %1062 : vector<2x16xf32>
    %1064 = arith.addf %1061, %1063 : vector<2x16xf32>
    %1065 = arith.mulf %1064, %1033 : vector<2x16xf32>
    %1066 = arith.addf %922, %1065 : vector<2x16xf32>
    %cst_207 = arith.constant dense<0.000000e+00> : vector<2x96xf32>
    %1067 = tpu.matmul %1056, %79, %cst_207 {dimension_numbers = #tpu.dot_dimension_numbers<[1], [0], [0], [1], [0, 0, 1, 1], [], []>} : vector<2x16xf32>, vector<16x96xf32>, vector<2x96xf32> -> vector<2x96xf32>
    %1068 = vector.extract_strided_slice %59 {offsets = [1, 0, 0], sizes = [1, 2, 96], strides = [1, 1, 1]} : vector<8x2x96xf32> to vector<1x2x96xf32>
    %1069 = vector.shape_cast %1068 : vector<1x2x96xf32> to vector<2x96xf32>
    %1070 = arith.addf %1067, %1069 : vector<2x96xf32>
    %cst_208 = arith.constant dense<0.000000e+00> : vector<2x96xf32>
    %1071 = tpu.matmul %1036, %83, %cst_208 {dimension_numbers = #tpu.dot_dimension_numbers<[1], [0], [0], [1], [0, 0, 1, 1], [], []>} : vector<2x32xf32>, vector<32x96xf32>, vector<2x96xf32> -> vector<2x96xf32>
    %1072 = vector.broadcast %87 : vector<1x96xf32> to vector<2x96xf32>
    %1073 = arith.addf %1071, %1072 : vector<2x96xf32>
    %1074 = vector.extract_strided_slice %1070 {offsets = [0, 0], sizes = [2, 32], strides = [1, 1]} : vector<2x96xf32> to vector<2x32xf32>
    %1075 = vector.extract_strided_slice %1073 {offsets = [0, 0], sizes = [2, 32], strides = [1, 1]} : vector<2x96xf32> to vector<2x32xf32>
    %1076 = arith.addf %1074, %1075 : vector<2x32xf32>
    %1077 = arith.negf %1076 : vector<2x32xf32>
    %1078 = math.exp %1077 : vector<2x32xf32>
    %cst_209 = arith.constant 1.000000e+00 : f32
    %1079 = vector.broadcast %cst_209 : f32 to vector<2x32xf32>
    %1080 = arith.addf %1079, %1078 : vector<2x32xf32>
    %1081 = arith.divf %1079, %1080 : vector<2x32xf32>
    %1082 = vector.extract_strided_slice %1070 {offsets = [0, 32], sizes = [2, 32], strides = [1, 1]} : vector<2x96xf32> to vector<2x32xf32>
    %1083 = vector.extract_strided_slice %1073 {offsets = [0, 32], sizes = [2, 32], strides = [1, 1]} : vector<2x96xf32> to vector<2x32xf32>
    %1084 = arith.addf %1082, %1083 : vector<2x32xf32>
    %1085 = arith.negf %1084 : vector<2x32xf32>
    %1086 = math.exp %1085 : vector<2x32xf32>
    %cst_210 = arith.constant 1.000000e+00 : f32
    %1087 = vector.broadcast %cst_210 : f32 to vector<2x32xf32>
    %1088 = arith.addf %1087, %1086 : vector<2x32xf32>
    %1089 = arith.divf %1087, %1088 : vector<2x32xf32>
    %1090 = vector.extract_strided_slice %1070 {offsets = [0, 64], sizes = [2, 32], strides = [1, 1]} : vector<2x96xf32> to vector<2x32xf32>
    %1091 = vector.extract_strided_slice %1073 {offsets = [0, 64], sizes = [2, 32], strides = [1, 1]} : vector<2x96xf32> to vector<2x32xf32>
    %1092 = arith.mulf %1081, %1091 : vector<2x32xf32>
    %1093 = arith.addf %1090, %1092 : vector<2x32xf32>
    %1094 = math.tanh %1093 : vector<2x32xf32>
    %cst_211 = arith.constant 1.000000e+00 : f32
    %1095 = vector.broadcast %cst_211 : f32 to vector<2x32xf32>
    %1096 = arith.subf %1095, %1089 : vector<2x32xf32>
    %1097 = arith.mulf %1096, %1094 : vector<2x32xf32>
    %1098 = arith.mulf %1089, %1036 : vector<2x32xf32>
    %1099 = arith.addf %1097, %1098 : vector<2x32xf32>
    %1100 = vector.extract_strided_slice %0 {offsets = [7, 0, 0], sizes = [1, 2, 16], strides = [1, 1, 1]} : vector<8x2x16xf32> to vector<1x2x16xf32>
    %1101 = vector.shape_cast %1100 : vector<1x2x16xf32> to vector<2x16xf32>
    %1102 = vector.extract_strided_slice %1 {offsets = [7, 0, 0], sizes = [1, 2, 16], strides = [1, 1, 1]} : vector<8x2x16xf32> to vector<1x2x16xf32>
    %1103 = vector.shape_cast %1102 : vector<1x2x16xf32> to vector<2x16xf32>
    %1104 = vector.extract_strided_slice %13 {offsets = [7, 0, 0], sizes = [1, 2, 16], strides = [1, 1, 1]} : vector<8x2x16xf32> to vector<1x2x16xf32>
    %1105 = vector.shape_cast %1104 : vector<1x2x16xf32> to vector<2x16xf32>
    %1106 = vector.extract_strided_slice %27 {offsets = [7, 0, 0], sizes = [1, 2, 32], strides = [1, 1, 1]} : vector<8x2x32xf32> to vector<1x2x32xf32>
    %1107 = vector.shape_cast %1106 : vector<1x2x32xf32> to vector<2x32xf32>
    %1108 = arith.mulf %1027, %1107 : vector<2x32xf32>
    %cst_212 = arith.constant dense<0.000000e+00> : vector<2x16xf32>
    %1109 = tpu.matmul %1108, %61, %cst_212 {dimension_numbers = #tpu.dot_dimension_numbers<[1], [0], [0], [1], [0, 0, 1, 1], [], []>} : vector<2x32xf32>, vector<32x16xf32>, vector<2x16xf32> -> vector<2x16xf32>
    %1110 = vector.broadcast %65 : vector<1x16xf32> to vector<2x16xf32>
    %1111 = arith.addf %1109, %1110 : vector<2x16xf32>
    %1112 = arith.mulf %1103, %1101 : vector<2x16xf32>
    %cst_213 = arith.constant 1.000000e+00 : f32
    %1113 = vector.broadcast %cst_213 : f32 to vector<2x16xf32>
    %1114 = arith.subf %1113, %1103 : vector<2x16xf32>
    %1115 = arith.mulf %1114, %1111 : vector<2x16xf32>
    %1116 = arith.addf %1112, %1115 : vector<2x16xf32>
    %cst_214 = arith.constant dense<0.000000e+00> : vector<2x16xf32>
    %1117 = tpu.matmul %1116, %69, %cst_214 {dimension_numbers = #tpu.dot_dimension_numbers<[1], [0], [0], [1], [0, 0, 1, 1], [], []>} : vector<2x16xf32>, vector<16x16xf32>, vector<2x16xf32> -> vector<2x16xf32>
    %1118 = vector.broadcast %73 : vector<1x16xf32> to vector<2x16xf32>
    %1119 = arith.addf %1117, %1118 : vector<2x16xf32>
    %1120 = vector.extract_strided_slice %42 {offsets = [7, 0, 0], sizes = [1, 2, 16], strides = [1, 1, 1]} : vector<8x2x16xf32> to vector<1x2x16xf32>
    %1121 = vector.shape_cast %1120 : vector<1x2x16xf32> to vector<2x16xf32>
    %1122 = arith.mulf %1121, %1119 : vector<2x16xf32>
    %cst_215 = arith.constant 1.000000e+00 : f32
    %1123 = vector.broadcast %cst_215 : f32 to vector<2x16xf32>
    %1124 = arith.subf %1123, %1121 : vector<2x16xf32>
    %1125 = arith.mulf %1124, %1111 : vector<2x16xf32>
    %1126 = arith.addf %1122, %1125 : vector<2x16xf32>
    %1127 = arith.mulf %1114, %1126 : vector<2x16xf32>
    %1128 = arith.addf %1112, %1127 : vector<2x16xf32>
    %1129 = arith.subf %1101, %1111 : vector<2x16xf32>
    %1130 = math.absf %1129 : vector<2x16xf32>
    %1131 = arith.subf %1101, %1119 : vector<2x16xf32>
    %1132 = math.absf %1131 : vector<2x16xf32>
    %1133 = arith.addf %1130, %1132 : vector<2x16xf32>
    %1134 = arith.subf %1101, %1126 : vector<2x16xf32>
    %1135 = math.absf %1134 : vector<2x16xf32>
    %1136 = arith.addf %1133, %1135 : vector<2x16xf32>
    %1137 = arith.mulf %1136, %1105 : vector<2x16xf32>
    %1138 = arith.addf %994, %1137 : vector<2x16xf32>
    %1139 = vector.extract_strided_slice %0 {offsets = [0, 0, 0], sizes = [1, 2, 16], strides = [1, 1, 1]} : vector<8x2x16xf32> to vector<1x2x16xf32>
    %1140 = vector.shape_cast %1139 : vector<1x2x16xf32> to vector<2x16xf32>
    %1141 = vector.extract_strided_slice %1 {offsets = [0, 0, 0], sizes = [1, 2, 16], strides = [1, 1, 1]} : vector<8x2x16xf32> to vector<1x2x16xf32>
    %1142 = vector.shape_cast %1141 : vector<1x2x16xf32> to vector<2x16xf32>
    %1143 = vector.extract_strided_slice %13 {offsets = [0, 0, 0], sizes = [1, 2, 16], strides = [1, 1, 1]} : vector<8x2x16xf32> to vector<1x2x16xf32>
    %1144 = vector.shape_cast %1143 : vector<1x2x16xf32> to vector<2x16xf32>
    %1145 = vector.extract_strided_slice %29 {offsets = [0, 0, 0], sizes = [1, 2, 32], strides = [1, 1, 1]} : vector<8x2x32xf32> to vector<1x2x32xf32>
    %1146 = vector.shape_cast %1145 : vector<1x2x32xf32> to vector<2x32xf32>
    %1147 = arith.mulf %1099, %1146 : vector<2x32xf32>
    %cst_216 = arith.constant dense<0.000000e+00> : vector<2x16xf32>
    %1148 = tpu.matmul %1147, %63, %cst_216 {dimension_numbers = #tpu.dot_dimension_numbers<[1], [0], [0], [1], [0, 0, 1, 1], [], []>} : vector<2x32xf32>, vector<32x16xf32>, vector<2x16xf32> -> vector<2x16xf32>
    %1149 = vector.broadcast %67 : vector<1x16xf32> to vector<2x16xf32>
    %1150 = arith.addf %1148, %1149 : vector<2x16xf32>
    %1151 = arith.mulf %1142, %1140 : vector<2x16xf32>
    %cst_217 = arith.constant 1.000000e+00 : f32
    %1152 = vector.broadcast %cst_217 : f32 to vector<2x16xf32>
    %1153 = arith.subf %1152, %1142 : vector<2x16xf32>
    %1154 = arith.mulf %1153, %1150 : vector<2x16xf32>
    %1155 = arith.addf %1151, %1154 : vector<2x16xf32>
    %cst_218 = arith.constant dense<0.000000e+00> : vector<2x16xf32>
    %1156 = tpu.matmul %1155, %71, %cst_218 {dimension_numbers = #tpu.dot_dimension_numbers<[1], [0], [0], [1], [0, 0, 1, 1], [], []>} : vector<2x16xf32>, vector<16x16xf32>, vector<2x16xf32> -> vector<2x16xf32>
    %1157 = vector.broadcast %75 : vector<1x16xf32> to vector<2x16xf32>
    %1158 = arith.addf %1156, %1157 : vector<2x16xf32>
    %1159 = vector.extract_strided_slice %57 {offsets = [0, 0, 0], sizes = [1, 2, 16], strides = [1, 1, 1]} : vector<8x2x16xf32> to vector<1x2x16xf32>
    %1160 = vector.shape_cast %1159 : vector<1x2x16xf32> to vector<2x16xf32>
    %1161 = arith.mulf %1160, %1158 : vector<2x16xf32>
    %cst_219 = arith.constant 1.000000e+00 : f32
    %1162 = vector.broadcast %cst_219 : f32 to vector<2x16xf32>
    %1163 = arith.subf %1162, %1160 : vector<2x16xf32>
    %1164 = arith.mulf %1163, %1150 : vector<2x16xf32>
    %1165 = arith.addf %1161, %1164 : vector<2x16xf32>
    %1166 = arith.mulf %1153, %1165 : vector<2x16xf32>
    %1167 = arith.addf %1151, %1166 : vector<2x16xf32>
    %1168 = arith.subf %1140, %1150 : vector<2x16xf32>
    %1169 = math.absf %1168 : vector<2x16xf32>
    %1170 = arith.subf %1140, %1158 : vector<2x16xf32>
    %1171 = math.absf %1170 : vector<2x16xf32>
    %1172 = arith.addf %1169, %1171 : vector<2x16xf32>
    %1173 = arith.subf %1140, %1165 : vector<2x16xf32>
    %1174 = math.absf %1173 : vector<2x16xf32>
    %1175 = arith.addf %1172, %1174 : vector<2x16xf32>
    %1176 = arith.mulf %1175, %1144 : vector<2x16xf32>
    %1177 = arith.addf %1066, %1176 : vector<2x16xf32>
    %1178 = tpu.concatenate %118, %262, %406, %550, %694, %838, %982, %1126 in 1 : vector<2x16xf32>, vector<2x16xf32>, vector<2x16xf32>, vector<2x16xf32>, vector<2x16xf32>, vector<2x16xf32>, vector<2x16xf32>, vector<2x16xf32> -> vector<2x128xf32>
    %1179 = tpu.concatenate %1165, %1054, %910, %766, %622, %478, %334, %190 in 1 : vector<2x16xf32>, vector<2x16xf32>, vector<2x16xf32>, vector<2x16xf32>, vector<2x16xf32>, vector<2x16xf32>, vector<2x16xf32>, vector<2x16xf32> -> vector<2x128xf32>
    %1180 = tpu.concatenate %120, %264, %408, %552, %696, %840, %984, %1128 in 1 : vector<2x16xf32>, vector<2x16xf32>, vector<2x16xf32>, vector<2x16xf32>, vector<2x16xf32>, vector<2x16xf32>, vector<2x16xf32>, vector<2x16xf32> -> vector<2x128xf32>
    %1181 = tpu.concatenate %1167, %1056, %912, %768, %624, %480, %336, %192 in 1 : vector<2x16xf32>, vector<2x16xf32>, vector<2x16xf32>, vector<2x16xf32>, vector<2x16xf32>, vector<2x16xf32>, vector<2x16xf32>, vector<2x16xf32> -> vector<2x128xf32>
    %1182 = arith.subf %1178, %1179 : vector<2x128xf32>
    %1183 = arith.mulf %1182, %1182 : vector<2x128xf32>
    %1184 = vector.shape_cast %1183 : vector<2x128xf32> to vector<1x2x128xf32>
    %cst_220 = arith.constant dense<0.000000e+00> : vector<1xf32>
    %1185 = vector.multi_reduction <add>, %1184, %cst_220 [1, 2] : vector<1x2x128xf32> to vector<1xf32>
    %1186 = vector.shape_cast %1185 : vector<1xf32> to vector<1x1x1xf32>
    %1187 = vector.extract %1186[0, 0, 0] : f32 from vector<1x1x1xf32>
    %cst_221 = arith.constant 3.906250e-03 : f32
    %1188 = arith.mulf %1187, %cst_221 : f32
    %1189 = vector.shape_cast %1138 : vector<2x16xf32> to vector<1x2x16xf32>
    %cst_222 = arith.constant dense<0.000000e+00> : vector<1xf32>
    %1190 = vector.multi_reduction <add>, %1189, %cst_222 [1, 2] : vector<1x2x16xf32> to vector<1xf32>
    %1191 = vector.shape_cast %1190 : vector<1xf32> to vector<1x1x1xf32>
    %1192 = vector.extract %1191[0, 0, 0] : f32 from vector<1x1x1xf32>
    %1193 = vector.shape_cast %1177 : vector<2x16xf32> to vector<1x2x16xf32>
    %cst_223 = arith.constant dense<0.000000e+00> : vector<1xf32>
    %1194 = vector.multi_reduction <add>, %1193, %cst_223 [1, 2] : vector<1x2x16xf32> to vector<1xf32>
    %1195 = vector.shape_cast %1194 : vector<1xf32> to vector<1x1x1xf32>
    %1196 = vector.extract %1195[0, 0, 0] : f32 from vector<1x1x1xf32>
    %1197 = arith.addf %1192, %1196 : f32
    %1198 = arith.addf %1197, %1188 : f32
    %1199 = arith.addf %1178, %1179 : vector<2x128xf32>
    %cst_224 = arith.constant 5.000000e-01 : f32
    %1200 = vector.broadcast %cst_224 : f32 to vector<2x128xf32>
    %1201 = arith.mulf %1199, %1200 : vector<2x128xf32>
    %c0_225 = arith.constant 0 : index
    %c0_226 = arith.constant 0 : index
    %1202 = vector.load %arg17[%c0_225, %c0_226] : memref<2x128xf32, #tpu.memory_space<vmem>>, vector<2x128xf32>
    tpu.vector_store %arg17[%c0_225, %c0_226], %1201 {strides = array<i32>} : memref<2x128xf32, #tpu.memory_space<vmem>>, vector<2x128xf32>,
    %1203 = arith.addf %1180, %1181 : vector<2x128xf32>
    %cst_227 = arith.constant 5.000000e-01 : f32
    %1204 = vector.broadcast %cst_227 : f32 to vector<2x128xf32>
    %1205 = arith.mulf %1203, %1204 : vector<2x128xf32>
    %c0_228 = arith.constant 0 : index
    %c0_229 = arith.constant 0 : index
    %1206 = vector.load %arg18[%c0_228, %c0_229] : memref<2x128xf32, #tpu.memory_space<vmem>>, vector<2x128xf32>
    tpu.vector_store %arg18[%c0_228, %c0_229], %1205 {strides = array<i32>} : memref<2x128xf32, #tpu.memory_space<vmem>>, vector<2x128xf32>,
    %cst_230 = arith.constant 0.000000e+00 : f32
    %1207 = vector.broadcast %cst_230 : f32 to vector<1x1xf32>
    %1208 = vector.broadcast %1198 : f32 to vector<1x1xf32>
    %1209 = arith.addf %1207, %1208 : vector<1x1xf32>
    %1210 = vector.broadcast %1192 : f32 to vector<1x1xf32>
    %1211 = arith.addf %1207, %1210 : vector<1x1xf32>
    %1212 = vector.broadcast %1196 : f32 to vector<1x1xf32>
    %1213 = arith.addf %1207, %1212 : vector<1x1xf32>
    %1214 = vector.broadcast %1188 : f32 to vector<1x1xf32>
    %1215 = arith.addf %1207, %1214 : vector<1x1xf32>
    %1216 = tpu.concatenate %1209, %1211, %1213, %1215 in 1 : vector<1x1xf32>, vector<1x1xf32>, vector<1x1xf32>, vector<1x1xf32> -> vector<1x4xf32>
    %c0_231 = arith.constant 0 : index
    %c0_232 = arith.constant 0 : index
    %1217 = vector.load %arg16[%c0_231, %c0_232] : memref<1x4xf32, #tpu.memory_space<vmem>>, vector<1x4xf32>
    tpu.vector_store %arg16[%c0_231, %c0_232], %1216 {strides = array<i32>} : memref<1x4xf32, #tpu.memory_space<vmem>>, vector<1x4xf32>,
    return
  }
}

</mosaic_0001>

<llo_original>
// kernel: bimgru_forward.1
$region0: #{bimgru_forward.1}
  #allocation0 [shape = 'u32[]', space=smem, size = 0x4, offset = 0x4, fixed_abs, tag = 'smem constant byte address 0x4 - core index']
  #allocation1 [shape = 'u32[72,128]{1,0:T(1,128)}', space=vmem, size = 0x9000, scoped, tag = 'internal scratch']
  %s0 = inlined_call_operand.vmem [shape: f32[8,2,16], index: 0, kind: input, shape index: {}]
  %s1 = inlined_call_operand.vmem [shape: f32[8,2,16], index: 1, kind: input, shape index: {}]
  %s2 = inlined_call_operand.vmem [shape: f32[16,16], index: 2, kind: input, shape index: {}]
  %s3 = inlined_call_operand.vmem [shape: f32[16,16], index: 3, kind: input, shape index: {}]
  %s4 = inlined_call_operand.vmem [shape: f32[16,96], index: 4, kind: input, shape index: {}]
  %s5 = inlined_call_operand.vmem [shape: f32[1,96], index: 5, kind: input, shape index: {}]
  %s6 = inlined_call_operand.vmem [shape: f32[2,16,112], index: 6, kind: input, shape index: {}]
  %s7 = inlined_call_operand.vmem [shape: f32[2,1,112], index: 7, kind: input, shape index: {}]
  %s8 = inlined_call_operand.vmem [shape: f32[2,16,16], index: 8, kind: input, shape index: {}]
  %s9 = inlined_call_operand.vmem [shape: f32[2,32,16], index: 9, kind: input, shape index: {}]
  %s10 = inlined_call_operand.vmem [shape: f32[2,1,16], index: 10, kind: input, shape index: {}]
  %s11 = inlined_call_operand.vmem [shape: f32[2,16,16], index: 11, kind: input, shape index: {}]
  %s12 = inlined_call_operand.vmem [shape: f32[2,1,16], index: 12, kind: input, shape index: {}]
  %s13 = inlined_call_operand.vmem [shape: f32[2,16,96], index: 13, kind: input, shape index: {}]
  %s14 = inlined_call_operand.vmem [shape: f32[2,32,96], index: 14, kind: input, shape index: {}]
  %s15 = inlined_call_operand.vmem [shape: f32[2,1,96], index: 15, kind: input, shape index: {}]
  %s16 = inlined_call_operand.vmem [shape: f32[1,4], index: 16, kind: output, shape index: {0}]
  %s17 = inlined_call_operand.vmem [shape: f32[2,128], index: 17, kind: output, shape index: {1}]
  %s18 = inlined_call_operand.vmem [shape: f32[2,128], index: 18, kind: output, shape index: {2}]
  %19 = xla_tuple %s16, %s17, %s18
  %s20 = sld [smem:[#allocation0]]
  $region90: #{bimgru_forward.1} parent=0
    _
  %s22 = ssub.s32 1, %s20
  %s23 = scalar_select 0, %s22, %s20
  // Predicated region
  $region2: #{bimgru_forward.1} parent=0 // pred_check
    _
  $region3: #{bimgru_forward.1} parent=0 // pred_check_branch
    %25 = sbr.rel (0) target = $region5
  $region4: #{bimgru_forward.1} parent=0 // pred_region
    _
  $region5: #{bimgru_forward.1} parent=0 // pred_fallthru
    _
  // Predicated region
  $region6: #{bimgru_forward.1} parent=0 // pred_check
    _
  $region7: #{bimgru_forward.1} parent=0 // pred_check_branch
    %27 = sbr.rel (0) target = $region9
  $region8: #{bimgru_forward.1} parent=0 // pred_region
    _
  $region9: #{bimgru_forward.1} parent=0 // pred_fallthru
    _
  // Predicated region
  $region10: #{bimgru_forward.1} parent=0 // pred_check
    _
  $region11: #{bimgru_forward.1} parent=0 // pred_check_branch
    %29 = sbr.rel (0) target = $region13
  $region12: #{bimgru_forward.1} parent=0 // pred_region
    _
  $region13: #{bimgru_forward.1} parent=0 // pred_fallthru
    _
  // Predicated region
  $region14: #{bimgru_forward.1} parent=0 // pred_check
    _
  $region15: #{bimgru_forward.1} parent=0 // pred_check_branch
    %31 = sbr.rel (0) target = $region17
  $region16: #{bimgru_forward.1} parent=0 // pred_region
    _
  $region17: #{bimgru_forward.1} parent=0 // pred_fallthru
    _
  // Predicated region
  $region18: #{bimgru_forward.1} parent=0 // pred_check
    _
  $region19: #{bimgru_forward.1} parent=0 // pred_check_branch
    %33 = sbr.rel (0) target = $region21
  $region20: #{bimgru_forward.1} parent=0 // pred_region
    _
  $region21: #{bimgru_forward.1} parent=0 // pred_fallthru
    _
  // Predicated region
  $region22: #{bimgru_forward.1} parent=0 // pred_check
    _
  $region23: #{bimgru_forward.1} parent=0 // pred_check_branch
    %35 = sbr.rel (0) target = $region25
  $region24: #{bimgru_forward.1} parent=0 // pred_region
    _
  $region25: #{bimgru_forward.1} parent=0 // pred_fallthru
    _
  // Predicated region
  $region26: #{bimgru_forward.1} parent=0 // pred_check
    _
  $region27: #{bimgru_forward.1} parent=0 // pred_check_branch
    %37 = sbr.rel (0) target = $region29
  $region28: #{bimgru_forward.1} parent=0 // pred_region
    _
  $region29: #{bimgru_forward.1} parent=0 // pred_fallthru
    _
  // Predicated region
  $region30: #{bimgru_forward.1} parent=0 // pred_check
    _
  $region31: #{bimgru_forward.1} parent=0 // pred_check_branch
    %39 = sbr.rel (0) target = $region33
  $region32: #{bimgru_forward.1} parent=0 // pred_region
    _
  $region33: #{bimgru_forward.1} parent=0 // pred_fallthru
    _
  // Predicated region
  $region34: #{bimgru_forward.1} parent=0 // pred_check
    _
  $region35: #{bimgru_forward.1} parent=0 // pred_check_branch
    %41 = sbr.rel (0) target = $region37
  $region36: #{bimgru_forward.1} parent=0 // pred_region
    _
  $region37: #{bimgru_forward.1} parent=0 // pred_fallthru
    _
  // Predicated region
  $region38: #{bimgru_forward.1} parent=0 // pred_check
    _
  $region39: #{bimgru_forward.1} parent=0 // pred_check_branch
    %43 = sbr.rel (0) target = $region41
  $region40: #{bimgru_forward.1} parent=0 // pred_region
    _
  $region41: #{bimgru_forward.1} parent=0 // pred_fallthru
    _
  // Predicated region
  $region42: #{bimgru_forward.1} parent=0 // pred_check
    _
  $region43: #{bimgru_forward.1} parent=0 // pred_check_branch
    %45 = sbr.rel (0) target = $region45
  $region44: #{bimgru_forward.1} parent=0 // pred_region
    _
  $region45: #{bimgru_forward.1} parent=0 // pred_fallthru
    _
  // Predicated region
  $region46: #{bimgru_forward.1} parent=0 // pred_check
    _
  $region47: #{bimgru_forward.1} parent=0 // pred_check_branch
    %47 = sbr.rel (0) target = $region49
  $region48: #{bimgru_forward.1} parent=0 // pred_region
    _
  $region49: #{bimgru_forward.1} parent=0 // pred_fallthru
    _
  // Predicated region
  $region50: #{bimgru_forward.1} parent=0 // pred_check
    _
  $region51: #{bimgru_forward.1} parent=0 // pred_check_branch
    %49 = sbr.rel (0) target = $region53
  $region52: #{bimgru_forward.1} parent=0 // pred_region
    _
  $region53: #{bimgru_forward.1} parent=0 // pred_fallthru
    _
  // Predicated region
  $region54: #{bimgru_forward.1} parent=0 // pred_check
    _
  $region55: #{bimgru_forward.1} parent=0 // pred_check_branch
    %51 = sbr.rel (0) target = $region57
  $region56: #{bimgru_forward.1} parent=0 // pred_region
    _
  $region57: #{bimgru_forward.1} parent=0 // pred_fallthru
    _
  // Predicated region
  $region58: #{bimgru_forward.1} parent=0 // pred_check
    _
  $region59: #{bimgru_forward.1} parent=0 // pred_check_branch
    %53 = sbr.rel (0) target = $region61
  $region60: #{bimgru_forward.1} parent=0 // pred_region
    _
  $region61: #{bimgru_forward.1} parent=0 // pred_fallthru
    _
  // Predicated region
  $region62: #{bimgru_forward.1} parent=0 // pred_check
    _
  $region63: #{bimgru_forward.1} parent=0 // pred_check_branch
    %55 = sbr.rel (0) target = $region65
  $region64: #{bimgru_forward.1} parent=0 // pred_region
    _
  $region65: #{bimgru_forward.1} parent=0 // pred_fallthru
    _
  %v56 = vld [vmem:[%s0] sm:$0x3]
  %v57 = vld [vmem:[%s0 + $0x2] sm:$0x3]
  %v58 = vld [vmem:[%s0 + $0x4] sm:$0x3]
  %v59 = vld [vmem:[%s0 + $0x6] sm:$0x3]
  %v60 = vld [vmem:[%s0 + $0x8] sm:$0x3]
  %v61 = vld [vmem:[%s0 + $0xa] sm:$0x3]
  %v62 = vld [vmem:[%s0 + $0xc] sm:$0x3]
  %v63 = vld [vmem:[%s0 + $0xe] sm:$0x3]
  %v64 = vld [vmem:[%s1] sm:$0x3]
  %v65 = vld [vmem:[%s1 + $0x2] sm:$0x3]
  %v66 = vld [vmem:[%s1 + $0x4] sm:$0x3]
  %v67 = vld [vmem:[%s1 + $0x6] sm:$0x3]
  %v68 = vld [vmem:[%s1 + $0x8] sm:$0x3]
  %v69 = vld [vmem:[%s1 + $0xa] sm:$0x3]
  %v70 = vld [vmem:[%s1 + $0xc] sm:$0x3]
  %v71 = vld [vmem:[%s1 + $0xe] sm:$0x3]
  %v72 = vld [vmem:[%s2] sm:$0xff]
  %v73 = vld [vmem:[%s2 + $0x8] sm:$0xff]
  %v74 = vld [vmem:[%s3] sm:$0xff]
  %v75 = vld [vmem:[%s3 + $0x8] sm:$0xff]
  %vm76 = vcmask 123904
  %v77 = vsel %vm76, %v64, 0.0
  %78 = vadd.xlane.f32.xlu0 %v77
  %v79 = vpop.xlane.xlu0 %78
  %v80 = vsel %vm76, %v65, 0.0
  %81 = vadd.xlane.f32.xlu0 %v80
  %v82 = vpop.xlane.xlu0 %81
  %v83 = vsel %vm76, %v66, 0.0
  %84 = vadd.xlane.f32.xlu0 %v83
  %v85 = vpop.xlane.xlu0 %84
  %v86 = vsel %vm76, %v67, 0.0
  %87 = vadd.xlane.f32.xlu0 %v86
  %v88 = vpop.xlane.xlu0 %87
  %v89 = vsel %vm76, %v68, 0.0
  %90 = vadd.xlane.f32.xlu0 %v89
  %v91 = vpop.xlane.xlu0 %90
  %v92 = vsel %vm76, %v69, 0.0
  %93 = vadd.xlane.f32.xlu0 %v92
  %v94 = vpop.xlane.xlu0 %93
  %v95 = vsel %vm76, %v70, 0.0
  %96 = vadd.xlane.f32.xlu0 %v95
  %v97 = vpop.xlane.xlu0 %96
  %v98 = vsel %vm76, %v71, 0.0
  %99 = vadd.xlane.f32.xlu0 %v98
  %v100 = vpop.xlane.xlu0 %99
  %vm101 = vcmask 1041408
  %v102 = vsel %vm101, %v79, 0.0
  %v103 = vrot.slane %v102, 4
  %v104 = vadd.f32 %v102, %v103
  %v105 = vrot.slane %v104, 2
  %v106 = vadd.f32 %v104, %v105
  %v107 = vrot.slane %v106, 1
  %v108 = vadd.f32 %v106, %v107
  %v109 = vsel %vm101, %v82, 0.0
  %v110 = vrot.slane %v109, 4
  %v111 = vadd.f32 %v109, %v110
  %v112 = vrot.slane %v111, 2
  %v113 = vadd.f32 %v111, %v112
  %v114 = vrot.slane %v113, 1
  %v115 = vadd.f32 %v113, %v114
  %v116 = vsel %vm101, %v85, 0.0
  %v117 = vrot.slane %v116, 4
  %v118 = vadd.f32 %v116, %v117
  %v119 = vrot.slane %v118, 2
  %v120 = vadd.f32 %v118, %v119
  %v121 = vrot.slane %v120, 1
  %v122 = vadd.f32 %v120, %v121
  %v123 = vsel %vm101, %v88, 0.0
  %v124 = vrot.slane %v123, 4
  %v125 = vadd.f32 %v123, %v124
  %v126 = vrot.slane %v125, 2
  %v127 = vadd.f32 %v125, %v126
  %v128 = vrot.slane %v127, 1
  %v129 = vadd.f32 %v127, %v128
  %v130 = vsel %vm101, %v91, 0.0
  %v131 = vrot.slane %v130, 4
  %v132 = vadd.f32 %v130, %v131
  %v133 = vrot.slane %v132, 2
  %v134 = vadd.f32 %v132, %v133
  %v135 = vrot.slane %v134, 1
  %v136 = vadd.f32 %v134, %v135
  %v137 = vsel %vm101, %v94, 0.0
  %v138 = vrot.slane %v137, 4
  %v139 = vadd.f32 %v137, %v138
  %v140 = vrot.slane %v139, 2
  %v141 = vadd.f32 %v139, %v140
  %v142 = vrot.slane %v141, 1
  %v143 = vadd.f32 %v141, %v142
  %v144 = vsel %vm101, %v97, 0.0
  %v145 = vrot.slane %v144, 4
  %v146 = vadd.f32 %v144, %v145
  %v147 = vrot.slane %v146, 2
  %v148 = vadd.f32 %v146, %v147
  %v149 = vrot.slane %v148, 1
  %v150 = vadd.f32 %v148, %v149
  %v151 = vsel %vm101, %v100, 0.0
  %v152 = vrot.slane %v151, 4
  %v153 = vadd.f32 %v151, %v152
  %v154 = vrot.slane %v153, 2
  %v155 = vadd.f32 %v153, %v154
  %v156 = vrot.slane %v155, 1
  %v157 = vadd.f32 %v155, %v156
  %v158 = vadd.f32 %v108, 1e-05
  %v159 = vadd.f32 %v115, 1e-05
  %v160 = vadd.f32 %v122, 1e-05
  %v161 = vadd.f32 %v129, 1e-05
  %v162 = vadd.f32 %v136, 1e-05
  %v163 = vadd.f32 %v143, 1e-05
  %v164 = vadd.f32 %v150, 1e-05
  %v165 = vadd.f32 %v157, 1e-05
  %v166 = vrcp.pop %v158
  %v167 = vmul.f32 %v158, %v166
  %v168 = vsub.f32 1.0, %v167
  %v169 = vmul.f32 %v166, %v168
  %v170 = vadd.f32 %v166, %v169
  %vm171 = vweird.f32 %v158
  %vm172 = vweird.f32 %v166
  %vm173 = vmor %vm171, %vm172
  %v174 = vsel %vm173, %v166, %v170
  %v175 = vand.u32 2147483647, %v158
  %vm176 = vcmp.eq.f32.partialorder %v175, 8.507059e+37
  %v177 = vand.u32 %v158, 2147483648
  %v178 = vor.u32 1.1754944e-38, %v177
  %v179 = vsel %vm176, %v178, %v174
  %v180 = vmul.f32 1.0, %v179
  %v181 = vrcp.pop %v159
  %v182 = vmul.f32 %v159, %v181
  %v183 = vsub.f32 1.0, %v182
  %v184 = vmul.f32 %v181, %v183
  %v185 = vadd.f32 %v181, %v184
  %vm186 = vweird.f32 %v159
  %vm187 = vweird.f32 %v181
  %vm188 = vmor %vm186, %vm187
  %v189 = vsel %vm188, %v181, %v185
  %v190 = vand.u32 2147483647, %v159
  %vm191 = vcmp.eq.f32.partialorder %v190, 8.507059e+37
  %v192 = vand.u32 %v159, 2147483648
  %v193 = vor.u32 1.1754944e-38, %v192
  %v194 = vsel %vm191, %v193, %v189
  %v195 = vmul.f32 1.0, %v194
  %v196 = vrcp.pop %v160
  %v197 = vmul.f32 %v160, %v196
  %v198 = vsub.f32 1.0, %v197
  %v199 = vmul.f32 %v196, %v198
  %v200 = vadd.f32 %v196, %v199
  %vm201 = vweird.f32 %v160
  %vm202 = vweird.f32 %v196
  %vm203 = vmor %vm201, %vm202
  %v204 = vsel %vm203, %v196, %v200
  %v205 = vand.u32 2147483647, %v160
  %vm206 = vcmp.eq.f32.partialorder %v205, 8.507059e+37
  %v207 = vand.u32 %v160, 2147483648
  %v208 = vor.u32 1.1754944e-38, %v207
  %v209 = vsel %vm206, %v208, %v204
  %v210 = vmul.f32 1.0, %v209
  %v211 = vrcp.pop %v161
  %v212 = vmul.f32 %v161, %v211
  %v213 = vsub.f32 1.0, %v212
  %v214 = vmul.f32 %v211, %v213
  %v215 = vadd.f32 %v211, %v214
  %vm216 = vweird.f32 %v161
  %vm217 = vweird.f32 %v211
  %vm218 = vmor %vm216, %vm217
  %v219 = vsel %vm218, %v211, %v215
  %v220 = vand.u32 2147483647, %v161
  %vm221 = vcmp.eq.f32.partialorder %v220, 8.507059e+37
  %v222 = vand.u32 %v161, 2147483648
  %v223 = vor.u32 1.1754944e-38, %v222
  %v224 = vsel %vm221, %v223, %v219
  %v225 = vmul.f32 1.0, %v224
  %v226 = vrcp.pop %v162
  %v227 = vmul.f32 %v162, %v226
  %v228 = vsub.f32 1.0, %v227
  %v229 = vmul.f32 %v226, %v228
  %v230 = vadd.f32 %v226, %v229
  %vm231 = vweird.f32 %v162
  %vm232 = vweird.f32 %v226
  %vm233 = vmor %vm231, %vm232
  %v234 = vsel %vm233, %v226, %v230
  %v235 = vand.u32 2147483647, %v162
  %vm236 = vcmp.eq.f32.partialorder %v235, 8.507059e+37
  %v237 = vand.u32 %v162, 2147483648
  %v238 = vor.u32 1.1754944e-38, %v237
  %v239 = vsel %vm236, %v238, %v234
  %v240 = vmul.f32 1.0, %v239
  %v241 = vrcp.pop %v163
  %v242 = vmul.f32 %v163, %v241
  %v243 = vsub.f32 1.0, %v242
  %v244 = vmul.f32 %v241, %v243
  %v245 = vadd.f32 %v241, %v244
  %vm246 = vweird.f32 %v163
  %vm247 = vweird.f32 %v241
  %vm248 = vmor %vm246, %vm247
  %v249 = vsel %vm248, %v241, %v245
  %v250 = vand.u32 2147483647, %v163
  %vm251 = vcmp.eq.f32.partialorder %v250, 8.507059e+37
  %v252 = vand.u32 %v163, 2147483648
  %v253 = vor.u32 1.1754944e-38, %v252
  %v254 = vsel %vm251, %v253, %v249
  %v255 = vmul.f32 1.0, %v254
  %v256 = vrcp.pop %v164
  %v257 = vmul.f32 %v164, %v256
  %v258 = vsub.f32 1.0, %v257
  %v259 = vmul.f32 %v256, %v258
  %v260 = vadd.f32 %v256, %v259
  %vm261 = vweird.f32 %v164
  %vm262 = vweird.f32 %v256
  %vm263 = vmor %vm261, %vm262
  %v264 = vsel %vm263, %v256, %v260
  %v265 = vand.u32 2147483647, %v164
  %vm266 = vcmp.eq.f32.partialorder %v265, 8.507059e+37
  %v267 = vand.u32 %v164, 2147483648
  %v268 = vor.u32 1.1754944e-38, %v267
  %v269 = vsel %vm266, %v268, %v264
  %v270 = vmul.f32 1.0, %v269
  %v271 = vrcp.pop %v165
  %v272 = vmul.f32 %v165, %v271
  %v273 = vsub.f32 1.0, %v272
  %v274 = vmul.f32 %v271, %v273
  %v275 = vadd.f32 %v271, %v274
  %vm276 = vweird.f32 %v165
  %vm277 = vweird.f32 %v271
  %vm278 = vmor %vm276, %vm277
  %v279 = vsel %vm278, %v271, %v275
  %v280 = vand.u32 2147483647, %v165
  %vm281 = vcmp.eq.f32.partialorder %v280, 8.507059e+37
  %v282 = vand.u32 %v165, 2147483648
  %v283 = vor.u32 1.1754944e-38, %v282
  %v284 = vsel %vm281, %v283, %v279
  %v285 = vmul.f32 1.0, %v284
  %v286 = vmul.f32 %v64, %v180
  %v287 = vmul.f32 %v65, %v195
  %v288 = vmul.f32 %v66, %v210
  %v289 = vmul.f32 %v67, %v225
  %v290 = vmul.f32 %v68, %v240
  %v291 = vmul.f32 %v69, %v255
  %v292 = vmul.f32 %v70, %v270
  %v293 = vmul.f32 %v71, %v285
  %v294 = vld [vmem:[%s4] sm:$0xff]
  %v295 = vld [vmem:[%s4 + $0x8] sm:$0xff]
  %v296 = vld [vmem:[%s5] sm:$0x1]
  %v298 = vperm.slane %v296, 0
  %vm300 = vcmask 130048
  %v302 = vsel %vm300, %v72, 0
  %v305 = vsel %vm300, %v73, 0
  %307 = vmatpush.msra.mxu0 0.0
  %308 = vmatpush.msra.mxu0 0.0
  %309 = vmatpush.msra.mxu0 0.0
  %310 = vmatpush.msra.mxu0 0.0
  %311 = vmatpush.msra.mxu0 0.0
  %312 = vmatpush.msra.mxu0 0.0
  %313 = vmatpush.msra.mxu0 0.0
  %314 = vmatpush.msra.mxu0 0.0
  %315 = vmatpush.msra.mxu0 0.0
  %316 = vmatpush.msra.mxu0 0.0
  %317 = vmatpush.msra.mxu0 0.0
  %318 = vmatpush.msra.mxu0 0.0
  %319 = vmatpush.msra.mxu0 0.0
  %320 = vmatpush.msra.mxu0 0.0
  %321 = vmatpush.msra.mxu0 %v295
  %322 = vmatpush.msra.mxu0 %v294
  %323 = vmatmul.f32.gmra.mxu0 %v302
  %v324 = vpop.f32.mrf.mxu0
  %v325 = vadd.f32 %v298, %v324
  %326 = vmatmul.f32.gmra.mxu0 %v305
  %v327 = vpop.f32.mrf.mxu0
  %v328 = vadd.f32 %v298, %v327
  %329 = vdwg.mxu0
  %v330 = vmax.f32 %v325, 0.0
  %v331 = vmax.f32 %v328, 0.0
  %v332 = vsub.f32 0.0, %v330
  %v333 = vsub.f32 0.0, %v331
  %v334 = vmul.f32 %v332, 1.442695
  %v335 = vpow.pop %v334
  %v336 = vmul.f32 %v333, 1.442695
  %v337 = vpow.pop %v336
  %v340 = vrot.slane %v335, 2
  %v341 = vrot.slane %v335, 4
  %v342 = vrot.slane %v335, 6
  %v343 = vrot.slane %v337, 2
  %v344 = vrot.slane %v337, 4
  %v345 = vrot.slane %v337, 6
  %v347 = vld [vmem:[%s6] sm:$0xff]
  %v348 = vld [vmem:[%s6 + $0x8] sm:$0xff]
  %v349 = vld [vmem:[%s7] sm:$0x1]
  %v351 = vperm.slane %v349, 0
  %v354 = vsel %vm300, %v74, 0
  %v357 = vsel %vm300, %v75, 0
  %359 = vmatpush.msra.mxu0 0.0
  %360 = vmatpush.msra.mxu0 0.0
  %361 = vmatpush.msra.mxu0 0.0
  %362 = vmatpush.msra.mxu0 0.0
  %363 = vmatpush.msra.mxu0 0.0
  %364 = vmatpush.msra.mxu0 0.0
  %365 = vmatpush.msra.mxu0 0.0
  %366 = vmatpush.msra.mxu0 0.0
  %367 = vmatpush.msra.mxu0 0.0
  %368 = vmatpush.msra.mxu0 0.0
  %369 = vmatpush.msra.mxu0 0.0
  %370 = vmatpush.msra.mxu0 0.0
  %371 = vmatpush.msra.mxu0 0.0
  %372 = vmatpush.msra.mxu0 0.0
  %373 = vmatpush.msra.mxu0 %v348
  %374 = vmatpush.msra.mxu0 %v347
  %375 = vmatmul.f32.gmra.mxu0 %v354
  %v376 = vpop.f32.mrf.mxu0
  %v377 = vadd.f32 %v351, %v376
  %378 = vmatmul.f32.gmra.mxu0 %v357
  %v379 = vpop.f32.mrf.mxu0
  %v380 = vadd.f32 %v351, %v379
  %381 = vdwg.mxu0
  %v382 = vld [vmem:[%s8] sm:$0xff]
  %v383 = vld [vmem:[%s8 + $0x8] sm:$0xff]
  %v384 = vsel %vm300, %v335, 0
  %v386 = vsel %vm300, %v337, 0
  %388 = vmatpush.msra.mxu0 0.0
  %389 = vmatpush.msra.mxu0 0.0
  %390 = vmatpush.msra.mxu0 0.0
  %391 = vmatpush.msra.mxu0 0.0
  %392 = vmatpush.msra.mxu0 0.0
  %393 = vmatpush.msra.mxu0 0.0
  %394 = vmatpush.msra.mxu0 0.0
  %395 = vmatpush.msra.mxu0 0.0
  %396 = vmatpush.msra.mxu0 0.0
  %397 = vmatpush.msra.mxu0 0.0
  %398 = vmatpush.msra.mxu0 0.0
  %399 = vmatpush.msra.mxu0 0.0
  %400 = vmatpush.msra.mxu0 0.0
  %401 = vmatpush.msra.mxu0 0.0
  %402 = vmatpush.msra.mxu0 %v383
  %403 = vmatpush.msra.mxu0 %v382
  %404 = vmatmul.f32.gmra.mxu0 %v384
  %v405 = vpop.f32.mrf.mxu0
  %v406 = vadd.f32 %v377, %v405
  %407 = vmatmul.f32.gmra.mxu0 %v386
  %v408 = vpop.f32.mrf.mxu0
  %v409 = vadd.f32 %v380, %v408
  %410 = vdwg.mxu0
  %v413 = vrot.slane %v406, 2
  %v414 = vrot.slane %v406, 4
  %v415 = vrot.slane %v406, 6
  %v416 = vrot.slane %v409, 2
  %v417 = vrot.slane %v409, 4
  %v418 = vrot.slane %v409, 6
  %v427 = vrot.slane %v377, 2
  %v428 = vrot.slane %v377, 4
  %v429 = vrot.slane %v377, 6
  %v430 = vrot.slane %v380, 2
  %v431 = vrot.slane %v380, 4
  %s432 = scalar_lea.vmem %s6, 16
  %v433 = vld [vmem:[%s432] sm:$0xff]
  %v434 = vld [vmem:[%s432 + $0x8] sm:$0xff]
  %s435 = scalar_lea.vmem %s7, 1
  %v436 = vld [vmem:[%s435] sm:$0x1]
  %v438 = vperm.slane %v436, 0
  %440 = vmatpush.msra.mxu0 0.0
  %441 = vmatpush.msra.mxu0 0.0
  %442 = vmatpush.msra.mxu0 0.0
  %443 = vmatpush.msra.mxu0 0.0
  %444 = vmatpush.msra.mxu0 0.0
  %445 = vmatpush.msra.mxu0 0.0
  %446 = vmatpush.msra.mxu0 0.0
  %447 = vmatpush.msra.mxu0 0.0
  %448 = vmatpush.msra.mxu0 0.0
  %449 = vmatpush.msra.mxu0 0.0
  %450 = vmatpush.msra.mxu0 0.0
  %451 = vmatpush.msra.mxu0 0.0
  %452 = vmatpush.msra.mxu0 0.0
  %453 = vmatpush.msra.mxu0 0.0
  %454 = vmatpush.msra.mxu0 %v434
  %455 = vmatpush.msra.mxu0 %v433
  %456 = vmatmul.f32.gmra.mxu0 %v354
  %v457 = vpop.f32.mrf.mxu0
  %v458 = vadd.f32 %v438, %v457
  %459 = vmatmul.f32.gmra.mxu0 %v357
  %v460 = vpop.f32.mrf.mxu0
  %v461 = vadd.f32 %v438, %v460
  %462 = vdwg.mxu0
  %s463 = scalar_lea.vmem %s8, 16
  %v464 = vld [vmem:[%s463] sm:$0xff]
  %v465 = vld [vmem:[%s463 + $0x8] sm:$0xff]
  %466 = vrot.lane.b32.xlu0 %v335, 80
  %v467 = vpop.permute.xlu0 %466
  %468 = vrot.lane.b32.xlu0 %v337, 80
  %v469 = vpop.permute.xlu0 %468
  %v470 = vsel %vm300, %v467, 0
  %v472 = vsel %vm300, %v469, 0
  %474 = vmatpush.msra.mxu0 0.0
  %475 = vmatpush.msra.mxu0 0.0
  %476 = vmatpush.msra.mxu0 0.0
  %477 = vmatpush.msra.mxu0 0.0
  %478 = vmatpush.msra.mxu0 0.0
  %479 = vmatpush.msra.mxu0 0.0
  %480 = vmatpush.msra.mxu0 0.0
  %481 = vmatpush.msra.mxu0 0.0
  %482 = vmatpush.msra.mxu0 0.0
  %483 = vmatpush.msra.mxu0 0.0
  %484 = vmatpush.msra.mxu0 0.0
  %485 = vmatpush.msra.mxu0 0.0
  %486 = vmatpush.msra.mxu0 0.0
  %487 = vmatpush.msra.mxu0 0.0
  %488 = vmatpush.msra.mxu0 %v465
  %489 = vmatpush.msra.mxu0 %v464
  %490 = vmatmul.f32.gmra.mxu0 %v470
  %v491 = vpop.f32.mrf.mxu0
  %v492 = vadd.f32 %v458, %v491
  %493 = vmatmul.f32.gmra.mxu0 %v472
  %v494 = vpop.f32.mrf.mxu0
  %v495 = vadd.f32 %v461, %v494
  %496 = vdwg.mxu0
  %v499 = vrot.slane %v492, 2
  %v500 = vrot.slane %v492, 4
  %v501 = vrot.slane %v492, 6
  %v502 = vrot.slane %v495, 2
  %v503 = vrot.slane %v495, 4
  %v504 = vrot.slane %v495, 6
  %v513 = vrot.slane %v458, 2
  %v514 = vrot.slane %v458, 4
  %v515 = vrot.slane %v458, 6
  %v516 = vrot.slane %v461, 2
  %v517 = vrot.slane %v461, 4
  %v518 = vrot.slane %v461, 6
  %v519 = vld [vmem:[%s9] sm:$0xff]
  %v520 = vld [vmem:[%s9 + $0x8] sm:$0xff]
  %v521 = vld [vmem:[%s9 + $0x10] sm:$0xff]
  %v522 = vld [vmem:[%s9 + $0x18] sm:$0xff]
  %s523 = scalar_lea.vmem %s9, 32
  %v524 = vld [vmem:[%s523] sm:$0xff]
  %v525 = vld [vmem:[%s523 + $0x8] sm:$0xff]
  %v526 = vld [vmem:[%s523 + $0x10] sm:$0xff]
  %v527 = vld [vmem:[%s523 + $0x18] sm:$0xff]
  %v528 = vld [vmem:[%s10] sm:$0x1]
  %s529 = scalar_lea.vmem %s10, 1
  %v530 = vld [vmem:[%s529] sm:$0x1]
  %v531 = vld [vmem:[%s11] sm:$0xff]
  %v532 = vld [vmem:[%s11 + $0x8] sm:$0xff]
  %s533 = scalar_lea.vmem %s11, 16
  %v534 = vld [vmem:[%s533] sm:$0xff]
  %v535 = vld [vmem:[%s533 + $0x8] sm:$0xff]
  %v536 = vld [vmem:[%s12] sm:$0x1]
  %s537 = scalar_lea.vmem %s12, 1
  %v538 = vld [vmem:[%s537] sm:$0x1]
  %v539 = vld [vmem:[%s13] sm:$0xff]
  %v540 = vld [vmem:[%s13 + $0x8] sm:$0xff]
  %s541 = scalar_lea.vmem %s13, 16
  %v542 = vld [vmem:[%s541] sm:$0xff]
  %v543 = vld [vmem:[%s541 + $0x8] sm:$0xff]
  %v544 = vld [vmem:[%s14] sm:$0xff]
  %v545 = vld [vmem:[%s14 + $0x8] sm:$0xff]
  %v546 = vld [vmem:[%s14 + $0x10] sm:$0xff]
  %v547 = vld [vmem:[%s14 + $0x18] sm:$0xff]
  %s548 = scalar_lea.vmem %s14, 32
  %v549 = vld [vmem:[%s548] sm:$0xff]
  %v550 = vld [vmem:[%s548 + $0x8] sm:$0xff]
  %v551 = vld [vmem:[%s548 + $0x10] sm:$0xff]
  %v552 = vld [vmem:[%s548 + $0x18] sm:$0xff]
  %v553 = vld [vmem:[%s15] sm:$0x1]
  %s554 = scalar_lea.vmem %s15, 1
  %v555 = vld [vmem:[%s554] sm:$0x1]
  %v556 = vmul.f32 %v335, 0.0
  %v558 = vperm.slane %v528, 0
  %561 = vst [vmem:[#allocation1] ss:$4 sm:$0xff] %v556
  %v562 = vld.sshfl [vmem:[#allocation1] sm:$0xff pattern:$0x73625140]
  %563 = vrot.lane.b32.xlu0 %v562, 112
  %v564 = vpop.permute.xlu0 %563
  %vm565 = vcmask 261120
  %v566 = vsel %vm565, %v564, 0
  %568 = vmatpush.msra.mxu0 0.0
  %569 = vmatpush.msra.mxu0 0.0
  %570 = vmatpush.msra.mxu0 0.0
  %571 = vmatpush.msra.mxu0 0.0
  %572 = vmatpush.msra.mxu0 0.0
  %573 = vmatpush.msra.mxu0 0.0
  %574 = vmatpush.msra.mxu0 0.0
  %575 = vmatpush.msra.mxu0 0.0
  %576 = vmatpush.msra.mxu0 0.0
  %577 = vmatpush.msra.mxu0 0.0
  %578 = vmatpush.msra.mxu0 0.0
  %579 = vmatpush.msra.mxu0 0.0
  %580 = vmatpush.msra.mxu0 %v522
  %581 = vmatpush.msra.mxu0 %v521
  %582 = vmatpush.msra.mxu0 %v520
  %583 = vmatpush.msra.mxu0 %v519
  %584 = vmatmul.f32.gmra.mxu0 %v566
  %v585 = vpop.f32.mrf.mxu0
  %v586 = vadd.f32 %v558, %v585
  %587 = vdwg.mxu0
  %v588 = vmul.f32 %v64, %v56
  %v589 = vsub.f32 1.0, %v64
  %v590 = vmul.f32 %v589, %v586
  %v591 = vadd.f32 %v588, %v590
  %v593 = vperm.slane %v536, 0
  %v596 = vsel %vm300, %v591, 0
  %598 = vmatpush.msra.mxu0 0.0
  %599 = vmatpush.msra.mxu0 0.0
  %600 = vmatpush.msra.mxu0 0.0
  %601 = vmatpush.msra.mxu0 0.0
  %602 = vmatpush.msra.mxu0 0.0
  %603 = vmatpush.msra.mxu0 0.0
  %604 = vmatpush.msra.mxu0 0.0
  %605 = vmatpush.msra.mxu0 0.0
  %606 = vmatpush.msra.mxu0 0.0
  %607 = vmatpush.msra.mxu0 0.0
  %608 = vmatpush.msra.mxu0 0.0
  %609 = vmatpush.msra.mxu0 0.0
  %610 = vmatpush.msra.mxu0 0.0
  %611 = vmatpush.msra.mxu0 0.0
  %612 = vmatpush.msra.mxu0 %v532
  %613 = vmatpush.msra.mxu0 %v531
  %614 = vmatmul.f32.gmra.mxu0 %v596
  %v615 = vpop.f32.mrf.mxu0
  %v616 = vadd.f32 %v593, %v615
  %617 = vdwg.mxu0
  %v618 = vmul.f32 %v406, %v616
  %v619 = vsub.f32 1.0, %v406
  %v620 = vmul.f32 %v619, %v586
  %v621 = vadd.f32 %v618, %v620
  %v622 = vmul.f32 %v589, %v621
  %v623 = vadd.f32 %v588, %v622
  %v624 = vsub.f32 %v56, %v586
  %v625 = vand.u32 2147483647, %v624
  %v626 = vsub.f32 %v56, %v616
  %v627 = vand.u32 2147483647, %v626
  %v628 = vadd.f32 %v625, %v627
  %v629 = vsub.f32 %v56, %v621
  %v630 = vand.u32 2147483647, %v629
  %v631 = vadd.f32 %v628, %v630
  %v632 = vmul.f32 %v631, %v286
  %v633 = vadd.f32 %v632, 0.0
  %634 = vst [vmem:[#allocation1] ss:$4 sm:$0xff] %v377
  %v635 = vld.sshfl [vmem:[#allocation1] sm:$0xff pattern:$0x73625140]
  %636 = vrot.lane.b32.xlu0 %v635, 112
  %v637 = vpop.permute.xlu0 %636
  %v640 = vsel %vm300, %v623, 0
  %642 = vmatpush.msra.mxu0 0.0
  %643 = vmatpush.msra.mxu0 0.0
  %644 = vmatpush.msra.mxu0 0.0
  %645 = vmatpush.msra.mxu0 0.0
  %646 = vmatpush.msra.mxu0 0.0
  %647 = vmatpush.msra.mxu0 0.0
  %648 = vmatpush.msra.mxu0 0.0
  %649 = vmatpush.msra.mxu0 0.0
  %650 = vmatpush.msra.mxu0 0.0
  %651 = vmatpush.msra.mxu0 0.0
  %652 = vmatpush.msra.mxu0 0.0
  %653 = vmatpush.msra.mxu0 0.0
  %654 = vmatpush.msra.mxu0 0.0
  %655 = vmatpush.msra.mxu0 0.0
  %656 = vmatpush.msra.mxu0 %v540
  %657 = vmatpush.msra.mxu0 %v539
  %658 = vmatmul.f32.gmra.mxu0 %v640
  %v659 = vpop.f32.mrf.mxu0
  %v660 = vadd.f32 %v637, %v659
  %661 = vdwg.mxu0
  %v663 = vperm.slane %v553, 0
  %665 = vst [vmem:[#allocation1] ss:$4 sm:$0xff] %v556
  %v666 = vld.sshfl [vmem:[#allocation1] sm:$0xff pattern:$0x73625140]
  %667 = vrot.lane.b32.xlu0 %v666, 112
  %v668 = vpop.permute.xlu0 %667
  %v669 = vsel %vm565, %v668, 0
  %671 = vmatpush.msra.mxu0 0.0
  %672 = vmatpush.msra.mxu0 0.0
  %673 = vmatpush.msra.mxu0 0.0
  %674 = vmatpush.msra.mxu0 0.0
  %675 = vmatpush.msra.mxu0 0.0
  %676 = vmatpush.msra.mxu0 0.0
  %677 = vmatpush.msra.mxu0 0.0
  %678 = vmatpush.msra.mxu0 0.0
  %679 = vmatpush.msra.mxu0 0.0
  %680 = vmatpush.msra.mxu0 0.0
  %681 = vmatpush.msra.mxu0 0.0
  %682 = vmatpush.msra.mxu0 0.0
  %683 = vmatpush.msra.mxu0 %v547
  %684 = vmatpush.msra.mxu0 %v546
  %685 = vmatpush.msra.mxu0 %v545
  %686 = vmatpush.msra.mxu0 %v544
  %687 = vmatmul.f32.gmra.mxu0 %v669
  %v688 = vpop.f32.mrf.mxu0
  %v689 = vadd.f32 %v663, %v688
  %690 = vdwg.mxu0
  %v691 = vadd.f32 %v660, %v689
  %v692 = vxor.u32 %v691, 2147483648
  %v693 = vmul.f32 %v692, 1.442695
  %v694 = vpow.pop %v693
  %v695 = vadd.f32 %v694, 1.0
  %v696 = vrcp.pop %v695
  %v697 = vmul.f32 %v695, %v696
  %v698 = vsub.f32 1.0, %v697
  %v699 = vmul.f32 %v696, %v698
  %v700 = vadd.f32 %v696, %v699
  %vm701 = vweird.f32 %v695
  %vm702 = vweird.f32 %v696
  %vm703 = vmor %vm701, %vm702
  %v704 = vsel %vm703, %v696, %v700
  %v705 = vand.u32 2147483647, %v695
  %vm706 = vcmp.eq.f32.partialorder %v705, 8.507059e+37
  %v707 = vand.u32 %v695, 2147483648
  %v708 = vor.u32 1.1754944e-38, %v707
  %v709 = vsel %vm706, %v708, %v704
  %v710 = vmul.f32 1.0, %v709
  %712 = vrot.lane.b32.xlu0 %v689, 64
  %v713 = vpop.permute.xlu0 %712
  %v715 = vmul.f32 %v710, %v713
  %717 = vrot.lane.b32.xlu0 %v715, 64
  %v718 = vpop.permute.xlu0 %717
  %v720 = vadd.f32 %v660, %v718
  %v721 = vtanh.pop %v720
  %v722 = vsub.f32 1.0, %v710
  %724 = vrot.lane.b32.xlu0 %v721, 96
  %v725 = vpop.permute.xlu0 %724
  %v727 = vmul.f32 %v722, %v725
  %728 = vst [vmem:[#allocation1] ss:$4 sm:$0xff] %v556
  %v729 = vld.sshfl [vmem:[#allocation1] sm:$0xff pattern:$0x73625140]
  %730 = vrot.lane.b32.xlu0 %v729, 16
  %v731 = vpop.permute.xlu0 %730
  %v733 = vmul.f32 %v710, %v731
  %v734 = vadd.f32 %v727, %v733
  %v735 = vmul.f32 %v345, 0.0
  %v737 = vperm.slane %v530, 0
  %740 = vst [vmem:[#allocation1] ss:$4 sm:$0xff] %v735
  %v741 = vld.sshfl [vmem:[#allocation1] sm:$0xff pattern:$0x73625140]
  %742 = vrot.lane.b32.xlu0 %v741, 64
  %v743 = vpop.permute.xlu0 %742
  %v744 = vsel %vm565, %v743, 0
  %746 = vmatpush.msra.mxu0 0.0
  %747 = vmatpush.msra.mxu0 0.0
  %748 = vmatpush.msra.mxu0 0.0
  %749 = vmatpush.msra.mxu0 0.0
  %750 = vmatpush.msra.mxu0 0.0
  %751 = vmatpush.msra.mxu0 0.0
  %752 = vmatpush.msra.mxu0 0.0
  %753 = vmatpush.msra.mxu0 0.0
  %754 = vmatpush.msra.mxu0 0.0
  %755 = vmatpush.msra.mxu0 0.0
  %756 = vmatpush.msra.mxu0 0.0
  %757 = vmatpush.msra.mxu0 0.0
  %758 = vmatpush.msra.mxu0 %v527
  %759 = vmatpush.msra.mxu0 %v526
  %760 = vmatpush.msra.mxu0 %v525
  %761 = vmatpush.msra.mxu0 %v524
  %762 = vmatmul.f32.gmra.mxu0 %v744
  %v763 = vpop.f32.mrf.mxu0
  %v764 = vadd.f32 %v737, %v763
  %765 = vdwg.mxu0
  %v766 = vmul.f32 %v71, %v63
  %v767 = vsub.f32 1.0, %v71
  %v768 = vmul.f32 %v767, %v764
  %v769 = vadd.f32 %v766, %v768
  %v771 = vperm.slane %v538, 0
  %v774 = vsel %vm300, %v769, 0
  %776 = vmatpush.msra.mxu0 0.0
  %777 = vmatpush.msra.mxu0 0.0
  %778 = vmatpush.msra.mxu0 0.0
  %779 = vmatpush.msra.mxu0 0.0
  %780 = vmatpush.msra.mxu0 0.0
  %781 = vmatpush.msra.mxu0 0.0
  %782 = vmatpush.msra.mxu0 0.0
  %783 = vmatpush.msra.mxu0 0.0
  %784 = vmatpush.msra.mxu0 0.0
  %785 = vmatpush.msra.mxu0 0.0
  %786 = vmatpush.msra.mxu0 0.0
  %787 = vmatpush.msra.mxu0 0.0
  %788 = vmatpush.msra.mxu0 0.0
  %789 = vmatpush.msra.mxu0 0.0
  %790 = vmatpush.msra.mxu0 %v535
  %791 = vmatpush.msra.mxu0 %v534
  %792 = vmatmul.f32.gmra.mxu0 %v774
  %v793 = vpop.f32.mrf.mxu0
  %v794 = vadd.f32 %v771, %v793
  %795 = vdwg.mxu0
  %v796 = vmul.f32 %v504, %v794
  %v797 = vsub.f32 1.0, %v504
  %v798 = vmul.f32 %v797, %v764
  %v799 = vadd.f32 %v796, %v798
  %v800 = vmul.f32 %v767, %v799
  %v801 = vadd.f32 %v766, %v800
  %v802 = vsub.f32 %v63, %v764
  %v803 = vand.u32 2147483647, %v802
  %v804 = vsub.f32 %v63, %v794
  %v805 = vand.u32 2147483647, %v804
  %v806 = vadd.f32 %v803, %v805
  %v807 = vsub.f32 %v63, %v799
  %v808 = vand.u32 2147483647, %v807
  %v809 = vadd.f32 %v806, %v808
  %v810 = vmul.f32 %v809, %v293
  %v811 = vadd.f32 %v810, 0.0
  %812 = vst [vmem:[#allocation1] ss:$4 sm:$0xff] %v518
  %v813 = vld.sshfl [vmem:[#allocation1] sm:$0xff pattern:$0x73625140]
  %814 = vrot.lane.b32.xlu0 %v813, 112
  %v815 = vpop.permute.xlu0 %814
  %v818 = vsel %vm300, %v801, 0
  %820 = vmatpush.msra.mxu0 0.0
  %821 = vmatpush.msra.mxu0 0.0
  %822 = vmatpush.msra.mxu0 0.0
  %823 = vmatpush.msra.mxu0 0.0
  %824 = vmatpush.msra.mxu0 0.0
  %825 = vmatpush.msra.mxu0 0.0
  %826 = vmatpush.msra.mxu0 0.0
  %827 = vmatpush.msra.mxu0 0.0
  %828 = vmatpush.msra.mxu0 0.0
  %829 = vmatpush.msra.mxu0 0.0
  %830 = vmatpush.msra.mxu0 0.0
  %831 = vmatpush.msra.mxu0 0.0
  %832 = vmatpush.msra.mxu0 0.0
  %833 = vmatpush.msra.mxu0 0.0
  %834 = vmatpush.msra.mxu0 %v543
  %835 = vmatpush.msra.mxu0 %v542
  %836 = vmatmul.f32.gmra.mxu0 %v818
  %v837 = vpop.f32.mrf.mxu0
  %v838 = vadd.f32 %v815, %v837
  %839 = vdwg.mxu0
  %v841 = vperm.slane %v555, 0
  %843 = vst [vmem:[#allocation1] ss:$4 sm:$0xff] %v735
  %v844 = vld.sshfl [vmem:[#allocation1] sm:$0xff pattern:$0x73625140]
  %845 = vrot.lane.b32.xlu0 %v844, 64
  %v846 = vpop.permute.xlu0 %845
  %v847 = vsel %vm565, %v846, 0
  %849 = vmatpush.msra.mxu0 0.0
  %850 = vmatpush.msra.mxu0 0.0
  %851 = vmatpush.msra.mxu0 0.0
  %852 = vmatpush.msra.mxu0 0.0
  %853 = vmatpush.msra.mxu0 0.0
  %854 = vmatpush.msra.mxu0 0.0
  %855 = vmatpush.msra.mxu0 0.0
  %856 = vmatpush.msra.mxu0 0.0
  %857 = vmatpush.msra.mxu0 0.0
  %858 = vmatpush.msra.mxu0 0.0
  %859 = vmatpush.msra.mxu0 0.0
  %860 = vmatpush.msra.mxu0 0.0
  %861 = vmatpush.msra.mxu0 %v552
  %862 = vmatpush.msra.mxu0 %v551
  %863 = vmatpush.msra.mxu0 %v550
  %864 = vmatpush.msra.mxu0 %v549
  %865 = vmatmul.f32.gmra.mxu0 %v847
  %v866 = vpop.f32.mrf.mxu0
  %v867 = vadd.f32 %v841, %v866
  %868 = vdwg.mxu0
  %v869 = vadd.f32 %v838, %v867
  %v870 = vxor.u32 %v869, 2147483648
  %v871 = vmul.f32 %v870, 1.442695
  %v872 = vpow.pop %v871
  %v873 = vadd.f32 %v872, 1.0
  %v874 = vrcp.pop %v873
  %v875 = vmul.f32 %v873, %v874
  %v876 = vsub.f32 1.0, %v875
  %v877 = vmul.f32 %v874, %v876
  %v878 = vadd.f32 %v874, %v877
  %vm879 = vweird.f32 %v873
  %vm880 = vweird.f32 %v874
  %vm881 = vmor %vm879, %vm880
  %v882 = vsel %vm881, %v874, %v878
  %v883 = vand.u32 2147483647, %v873
  %vm884 = vcmp.eq.f32.partialorder %v883, 8.507059e+37
  %v885 = vand.u32 %v873, 2147483648
  %v886 = vor.u32 1.1754944e-38, %v885
  %v887 = vsel %vm884, %v886, %v882
  %v888 = vmul.f32 1.0, %v887
  %890 = vrot.lane.b32.xlu0 %v867, 64
  %v891 = vpop.permute.xlu0 %890
  %v893 = vmul.f32 %v888, %v891
  %895 = vrot.lane.b32.xlu0 %v893, 64
  %v896 = vpop.permute.xlu0 %895
  %v898 = vadd.f32 %v838, %v896
  %v899 = vtanh.pop %v898
  %v900 = vsub.f32 1.0, %v888
  %902 = vrot.lane.b32.xlu0 %v899, 96
  %v903 = vpop.permute.xlu0 %902
  %v905 = vmul.f32 %v900, %v903
  %906 = vst [vmem:[#allocation1] ss:$4 sm:$0xff] %v735
  %v907 = vld.sshfl [vmem:[#allocation1] sm:$0xff pattern:$0x73625140]
  %908 = vrot.lane.b32.xlu0 %v907, 96
  %v909 = vpop.permute.xlu0 %908
  %v911 = vmul.f32 %v888, %v909
  %v912 = vadd.f32 %v905, %v911
  %913 = vst [vmem:[#allocation1] ss:$4 sm:$0xff] %v340
  %v914 = vld.sshfl [vmem:[#allocation1] sm:$0xff pattern:$0x73625140]
  %915 = vrot.lane.b32.xlu0 %v914, 16
  %v916 = vpop.permute.xlu0 %915
  %v918 = vmul.f32 %v734, %v916
  %920 = vrot.lane.b32.xlu0 %v918, 96
  %v921 = vpop.permute.xlu0 %920
  %v922 = vsel %vm565, %v921, 0
  %924 = vmatpush.msra.mxu0 0.0
  %925 = vmatpush.msra.mxu0 0.0
  %926 = vmatpush.msra.mxu0 0.0
  %927 = vmatpush.msra.mxu0 0.0
  %928 = vmatpush.msra.mxu0 0.0
  %929 = vmatpush.msra.mxu0 0.0
  %930 = vmatpush.msra.mxu0 0.0
  %931 = vmatpush.msra.mxu0 0.0
  %932 = vmatpush.msra.mxu0 0.0
  %933 = vmatpush.msra.mxu0 0.0
  %934 = vmatpush.msra.mxu0 0.0
  %935 = vmatpush.msra.mxu0 0.0
  %936 = vmatpush.msra.mxu0 %v522
  %937 = vmatpush.msra.mxu0 %v521
  %938 = vmatpush.msra.mxu0 %v520
  %939 = vmatpush.msra.mxu0 %v519
  %940 = vmatmul.f32.gmra.mxu0 %v922
  %v941 = vpop.f32.mrf.mxu0
  %v942 = vadd.f32 %v558, %v941
  %943 = vdwg.mxu0
  %v944 = vmul.f32 %v65, %v57
  %v945 = vsub.f32 1.0, %v65
  %v946 = vmul.f32 %v945, %v942
  %v947 = vadd.f32 %v944, %v946
  %v949 = vsel %vm300, %v947, 0
  %951 = vmatpush.msra.mxu0 0.0
  %952 = vmatpush.msra.mxu0 0.0
  %953 = vmatpush.msra.mxu0 0.0
  %954 = vmatpush.msra.mxu0 0.0
  %955 = vmatpush.msra.mxu0 0.0
  %956 = vmatpush.msra.mxu0 0.0
  %957 = vmatpush.msra.mxu0 0.0
  %958 = vmatpush.msra.mxu0 0.0
  %959 = vmatpush.msra.mxu0 0.0
  %960 = vmatpush.msra.mxu0 0.0
  %961 = vmatpush.msra.mxu0 0.0
  %962 = vmatpush.msra.mxu0 0.0
  %963 = vmatpush.msra.mxu0 0.0
  %964 = vmatpush.msra.mxu0 0.0
  %965 = vmatpush.msra.mxu0 %v532
  %966 = vmatpush.msra.mxu0 %v531
  %967 = vmatmul.f32.gmra.mxu0 %v949
  %v968 = vpop.f32.mrf.mxu0
  %v969 = vadd.f32 %v593, %v968
  %970 = vdwg.mxu0
  %v971 = vmul.f32 %v413, %v969
  %v972 = vsub.f32 1.0, %v413
  %v973 = vmul.f32 %v972, %v942
  %v974 = vadd.f32 %v971, %v973
  %v975 = vmul.f32 %v945, %v974
  %v976 = vadd.f32 %v944, %v975
  %v977 = vsub.f32 %v57, %v942
  %v978 = vand.u32 2147483647, %v977
  %v979 = vsub.f32 %v57, %v969
  %v980 = vand.u32 2147483647, %v979
  %v981 = vadd.f32 %v978, %v980
  %v982 = vsub.f32 %v57, %v974
  %v983 = vand.u32 2147483647, %v982
  %v984 = vadd.f32 %v981, %v983
  %v985 = vmul.f32 %v984, %v287
  %v986 = vadd.f32 %v633, %v985
  %987 = vst [vmem:[#allocation1] ss:$4 sm:$0xff] %v427
  %v988 = vld.sshfl [vmem:[#allocation1] sm:$0xff pattern:$0x73625140]
  %989 = vrot.lane.b32.xlu0 %v988, 112
  %v990 = vpop.permute.xlu0 %989
  %v993 = vsel %vm300, %v976, 0
  %995 = vmatpush.msra.mxu0 0.0
  %996 = vmatpush.msra.mxu0 0.0
  %997 = vmatpush.msra.mxu0 0.0
  %998 = vmatpush.msra.mxu0 0.0
  %999 = vmatpush.msra.mxu0 0.0
  %1000 = vmatpush.msra.mxu0 0.0
  %1001 = vmatpush.msra.mxu0 0.0
  %1002 = vmatpush.msra.mxu0 0.0
  %1003 = vmatpush.msra.mxu0 0.0
  %1004 = vmatpush.msra.mxu0 0.0
  %1005 = vmatpush.msra.mxu0 0.0
  %1006 = vmatpush.msra.mxu0 0.0
  %1007 = vmatpush.msra.mxu0 0.0
  %1008 = vmatpush.msra.mxu0 0.0
  %1009 = vmatpush.msra.mxu0 %v540
  %1010 = vmatpush.msra.mxu0 %v539
  %1011 = vmatmul.f32.gmra.mxu0 %v993
  %v1012 = vpop.f32.mrf.mxu0
  %v1013 = vadd.f32 %v990, %v1012
  %1014 = vdwg.mxu0
  %1015 = vmatpush.msra.mxu0 0.0
  %1016 = vmatpush.msra.mxu0 0.0
  %1017 = vmatpush.msra.mxu0 0.0
  %1018 = vmatpush.msra.mxu0 0.0
  %1019 = vmatpush.msra.mxu0 0.0
  %1020 = vmatpush.msra.mxu0 0.0
  %1021 = vmatpush.msra.mxu0 0.0
  %1022 = vmatpush.msra.mxu0 0.0
  %1023 = vmatpush.msra.mxu0 0.0
  %1024 = vmatpush.msra.mxu0 0.0
  %1025 = vmatpush.msra.mxu0 0.0
  %1026 = vmatpush.msra.mxu0 0.0
  %1027 = vmatpush.msra.mxu0 %v547
  %1028 = vmatpush.msra.mxu0 %v546
  %1029 = vmatpush.msra.mxu0 %v545
  %1030 = vmatpush.msra.mxu0 %v544
  %1031 = vmatmul.f32.gmra.mxu0 %v922
  %v1032 = vpop.f32.mrf.mxu0
  %v1033 = vadd.f32 %v663, %v1032
  %1034 = vdwg.mxu0
  %v1035 = vadd.f32 %v1013, %v1033
  %v1036 = vxor.u32 %v1035, 2147483648
  %v1037 = vmul.f32 %v1036, 1.442695
  %v1038 = vpow.pop %v1037
  %v1039 = vadd.f32 %v1038, 1.0
  %v1040 = vrcp.pop %v1039
  %v1041 = vmul.f32 %v1039, %v1040
  %v1042 = vsub.f32 1.0, %v1041
  %v1043 = vmul.f32 %v1040, %v1042
  %v1044 = vadd.f32 %v1040, %v1043
  %vm1045 = vweird.f32 %v1039
  %vm1046 = vweird.f32 %v1040
  %vm1047 = vmor %vm1045, %vm1046
  %v1048 = vsel %vm1047, %v1040, %v1044
  %v1049 = vand.u32 2147483647, %v1039
  %vm1050 = vcmp.eq.f32.partialorder %v1049, 8.507059e+37
  %v1051 = vand.u32 %v1039, 2147483648
  %v1052 = vor.u32 1.1754944e-38, %v1051
  %v1053 = vsel %vm1050, %v1052, %v1048
  %v1054 = vmul.f32 1.0, %v1053
  %1056 = vrot.lane.b32.xlu0 %v1033, 64
  %v1057 = vpop.permute.xlu0 %1056
  %v1059 = vmul.f32 %v1054, %v1057
  %1061 = vrot.lane.b32.xlu0 %v1059, 64
  %v1062 = vpop.permute.xlu0 %1061
  %v1064 = vadd.f32 %v1013, %v1062
  %v1065 = vtanh.pop %v1064
  %v1066 = vsub.f32 1.0, %v1054
  %1068 = vrot.lane.b32.xlu0 %v1065, 96
  %v1069 = vpop.permute.xlu0 %1068
  %v1071 = vmul.f32 %v1066, %v1069
  %v1072 = vmul.f32 %v1054, %v918
  %v1073 = vadd.f32 %v1071, %v1072
  %1074 = vst [vmem:[#allocation1] ss:$4 sm:$0xff] %v344
  %v1075 = vld.sshfl [vmem:[#allocation1] sm:$0xff pattern:$0x73625140]
  %1076 = vrot.lane.b32.xlu0 %v1075, 96
  %v1077 = vpop.permute.xlu0 %1076
  %v1079 = vmul.f32 %v912, %v1077
  %1081 = vrot.lane.b32.xlu0 %v1079, 96
  %v1082 = vpop.permute.xlu0 %1081
  %v1083 = vsel %vm565, %v1082, 0
  %1085 = vmatpush.msra.mxu0 0.0
  %1086 = vmatpush.msra.mxu0 0.0
  %1087 = vmatpush.msra.mxu0 0.0
  %1088 = vmatpush.msra.mxu0 0.0
  %1089 = vmatpush.msra.mxu0 0.0
  %1090 = vmatpush.msra.mxu0 0.0
  %1091 = vmatpush.msra.mxu0 0.0
  %1092 = vmatpush.msra.mxu0 0.0
  %1093 = vmatpush.msra.mxu0 0.0
  %1094 = vmatpush.msra.mxu0 0.0
  %1095 = vmatpush.msra.mxu0 0.0
  %1096 = vmatpush.msra.mxu0 0.0
  %1097 = vmatpush.msra.mxu0 %v527
  %1098 = vmatpush.msra.mxu0 %v526
  %1099 = vmatpush.msra.mxu0 %v525
  %1100 = vmatpush.msra.mxu0 %v524
  %1101 = vmatmul.f32.gmra.mxu0 %v1083
  %v1102 = vpop.f32.mrf.mxu0
  %v1103 = vadd.f32 %v737, %v1102
  %1104 = vdwg.mxu0
  %v1105 = vmul.f32 %v70, %v62
  %v1106 = vsub.f32 1.0, %v70
  %v1107 = vmul.f32 %v1106, %v1103
  %v1108 = vadd.f32 %v1105, %v1107
  %v1110 = vsel %vm300, %v1108, 0
  %1112 = vmatpush.msra.mxu0 0.0
  %1113 = vmatpush.msra.mxu0 0.0
  %1114 = vmatpush.msra.mxu0 0.0
  %1115 = vmatpush.msra.mxu0 0.0
  %1116 = vmatpush.msra.mxu0 0.0
  %1117 = vmatpush.msra.mxu0 0.0
  %1118 = vmatpush.msra.mxu0 0.0
  %1119 = vmatpush.msra.mxu0 0.0
  %1120 = vmatpush.msra.mxu0 0.0
  %1121 = vmatpush.msra.mxu0 0.0
  %1122 = vmatpush.msra.mxu0 0.0
  %1123 = vmatpush.msra.mxu0 0.0
  %1124 = vmatpush.msra.mxu0 0.0
  %1125 = vmatpush.msra.mxu0 0.0
  %1126 = vmatpush.msra.mxu0 %v535
  %1127 = vmatpush.msra.mxu0 %v534
  %1128 = vmatmul.f32.gmra.mxu0 %v1110
  %v1129 = vpop.f32.mrf.mxu0
  %v1130 = vadd.f32 %v771, %v1129
  %1131 = vdwg.mxu0
  %v1132 = vmul.f32 %v503, %v1130
  %v1133 = vsub.f32 1.0, %v503
  %v1134 = vmul.f32 %v1133, %v1103
  %v1135 = vadd.f32 %v1132, %v1134
  %v1136 = vmul.f32 %v1106, %v1135
  %v1137 = vadd.f32 %v1105, %v1136
  %v1138 = vsub.f32 %v62, %v1103
  %v1139 = vand.u32 2147483647, %v1138
  %v1140 = vsub.f32 %v62, %v1130
  %v1141 = vand.u32 2147483647, %v1140
  %v1142 = vadd.f32 %v1139, %v1141
  %v1143 = vsub.f32 %v62, %v1135
  %v1144 = vand.u32 2147483647, %v1143
  %v1145 = vadd.f32 %v1142, %v1144
  %v1146 = vmul.f32 %v1145, %v292
  %v1147 = vadd.f32 %v811, %v1146
  %1148 = vst [vmem:[#allocation1] ss:$4 sm:$0xff] %v517
  %v1149 = vld.sshfl [vmem:[#allocation1] sm:$0xff pattern:$0x73625140]
  %1150 = vrot.lane.b32.xlu0 %v1149, 112
  %v1151 = vpop.permute.xlu0 %1150
  %v1154 = vsel %vm300, %v1137, 0
  %1156 = vmatpush.msra.mxu0 0.0
  %1157 = vmatpush.msra.mxu0 0.0
  %1158 = vmatpush.msra.mxu0 0.0
  %1159 = vmatpush.msra.mxu0 0.0
  %1160 = vmatpush.msra.mxu0 0.0
  %1161 = vmatpush.msra.mxu0 0.0
  %1162 = vmatpush.msra.mxu0 0.0
  %1163 = vmatpush.msra.mxu0 0.0
  %1164 = vmatpush.msra.mxu0 0.0
  %1165 = vmatpush.msra.mxu0 0.0
  %1166 = vmatpush.msra.mxu0 0.0
  %1167 = vmatpush.msra.mxu0 0.0
  %1168 = vmatpush.msra.mxu0 0.0
  %1169 = vmatpush.msra.mxu0 0.0
  %1170 = vmatpush.msra.mxu0 %v543
  %1171 = vmatpush.msra.mxu0 %v542
  %1172 = vmatmul.f32.gmra.mxu0 %v1154
  %v1173 = vpop.f32.mrf.mxu0
  %v1174 = vadd.f32 %v1151, %v1173
  %1175 = vdwg.mxu0
  %1176 = vmatpush.msra.mxu0 0.0
  %1177 = vmatpush.msra.mxu0 0.0
  %1178 = vmatpush.msra.mxu0 0.0
  %1179 = vmatpush.msra.mxu0 0.0
  %1180 = vmatpush.msra.mxu0 0.0
  %1181 = vmatpush.msra.mxu0 0.0
  %1182 = vmatpush.msra.mxu0 0.0
  %1183 = vmatpush.msra.mxu0 0.0
  %1184 = vmatpush.msra.mxu0 0.0
  %1185 = vmatpush.msra.mxu0 0.0
  %1186 = vmatpush.msra.mxu0 0.0
  %1187 = vmatpush.msra.mxu0 0.0
  %1188 = vmatpush.msra.mxu0 %v552
  %1189 = vmatpush.msra.mxu0 %v551
  %1190 = vmatpush.msra.mxu0 %v550
  %1191 = vmatpush.msra.mxu0 %v549
  %1192 = vmatmul.f32.gmra.mxu0 %v1083
  %v1193 = vpop.f32.mrf.mxu0
  %v1194 = vadd.f32 %v841, %v1193
  %1195 = vdwg.mxu0
  %v1196 = vadd.f32 %v1174, %v1194
  %v1197 = vxor.u32 %v1196, 2147483648
  %v1198 = vmul.f32 %v1197, 1.442695
  %v1199 = vpow.pop %v1198
  %v1200 = vadd.f32 %v1199, 1.0
  %v1201 = vrcp.pop %v1200
  %v1202 = vmul.f32 %v1200, %v1201
  %v1203 = vsub.f32 1.0, %v1202
  %v1204 = vmul.f32 %v1201, %v1203
  %v1205 = vadd.f32 %v1201, %v1204
  %vm1206 = vweird.f32 %v1200
  %vm1207 = vweird.f32 %v1201
  %vm1208 = vmor %vm1206, %vm1207
  %v1209 = vsel %vm1208, %v1201, %v1205
  %v1210 = vand.u32 2147483647, %v1200
  %vm1211 = vcmp.eq.f32.partialorder %v1210, 8.507059e+37
  %v1212 = vand.u32 %v1200, 2147483648
  %v1213 = vor.u32 1.1754944e-38, %v1212
  %v1214 = vsel %vm1211, %v1213, %v1209
  %v1215 = vmul.f32 1.0, %v1214
  %1217 = vrot.lane.b32.xlu0 %v1194, 64
  %v1218 = vpop.permute.xlu0 %1217
  %v1220 = vmul.f32 %v1215, %v1218
  %1222 = vrot.lane.b32.xlu0 %v1220, 64
  %v1223 = vpop.permute.xlu0 %1222
  %v1225 = vadd.f32 %v1174, %v1223
  %v1226 = vtanh.pop %v1225
  %v1227 = vsub.f32 1.0, %v1215
  %1229 = vrot.lane.b32.xlu0 %v1226, 96
  %v1230 = vpop.permute.xlu0 %1229
  %v1232 = vmul.f32 %v1227, %v1230
  %v1233 = vmul.f32 %v1215, %v1079
  %v1234 = vadd.f32 %v1232, %v1233
  %1235 = vst [vmem:[#allocation1] ss:$4 sm:$0xff] %v341
  %v1236 = vld.sshfl [vmem:[#allocation1] sm:$0xff pattern:$0x73625140]
  %1237 = vrot.lane.b32.xlu0 %v1236, 16
  %v1238 = vpop.permute.xlu0 %1237
  %v1240 = vmul.f32 %v1073, %v1238
  %1242 = vrot.lane.b32.xlu0 %v1240, 96
  %v1243 = vpop.permute.xlu0 %1242
  %v1244 = vsel %vm565, %v1243, 0
  %1246 = vmatpush.msra.mxu0 0.0
  %1247 = vmatpush.msra.mxu0 0.0
  %1248 = vmatpush.msra.mxu0 0.0
  %1249 = vmatpush.msra.mxu0 0.0
  %1250 = vmatpush.msra.mxu0 0.0
  %1251 = vmatpush.msra.mxu0 0.0
  %1252 = vmatpush.msra.mxu0 0.0
  %1253 = vmatpush.msra.mxu0 0.0
  %1254 = vmatpush.msra.mxu0 0.0
  %1255 = vmatpush.msra.mxu0 0.0
  %1256 = vmatpush.msra.mxu0 0.0
  %1257 = vmatpush.msra.mxu0 0.0
  %1258 = vmatpush.msra.mxu0 %v522
  %1259 = vmatpush.msra.mxu0 %v521
  %1260 = vmatpush.msra.mxu0 %v520
  %1261 = vmatpush.msra.mxu0 %v519
  %1262 = vmatmul.f32.gmra.mxu0 %v1244
  %v1263 = vpop.f32.mrf.mxu0
  %v1264 = vadd.f32 %v558, %v1263
  %1265 = vdwg.mxu0
  %v1266 = vmul.f32 %v66, %v58
  %v1267 = vsub.f32 1.0, %v66
  %v1268 = vmul.f32 %v1267, %v1264
  %v1269 = vadd.f32 %v1266, %v1268
  %v1271 = vsel %vm300, %v1269, 0
  %1273 = vmatpush.msra.mxu0 0.0
  %1274 = vmatpush.msra.mxu0 0.0
  %1275 = vmatpush.msra.mxu0 0.0
  %1276 = vmatpush.msra.mxu0 0.0
  %1277 = vmatpush.msra.mxu0 0.0
  %1278 = vmatpush.msra.mxu0 0.0
  %1279 = vmatpush.msra.mxu0 0.0
  %1280 = vmatpush.msra.mxu0 0.0
  %1281 = vmatpush.msra.mxu0 0.0
  %1282 = vmatpush.msra.mxu0 0.0
  %1283 = vmatpush.msra.mxu0 0.0
  %1284 = vmatpush.msra.mxu0 0.0
  %1285 = vmatpush.msra.mxu0 0.0
  %1286 = vmatpush.msra.mxu0 0.0
  %1287 = vmatpush.msra.mxu0 %v532
  %1288 = vmatpush.msra.mxu0 %v531
  %1289 = vmatmul.f32.gmra.mxu0 %v1271
  %v1290 = vpop.f32.mrf.mxu0
  %v1291 = vadd.f32 %v593, %v1290
  %1292 = vdwg.mxu0
  %v1293 = vmul.f32 %v414, %v1291
  %v1294 = vsub.f32 1.0, %v414
  %v1295 = vmul.f32 %v1294, %v1264
  %v1296 = vadd.f32 %v1293, %v1295
  %v1297 = vmul.f32 %v1267, %v1296
  %v1298 = vadd.f32 %v1266, %v1297
  %v1299 = vsub.f32 %v58, %v1264
  %v1300 = vand.u32 2147483647, %v1299
  %v1301 = vsub.f32 %v58, %v1291
  %v1302 = vand.u32 2147483647, %v1301
  %v1303 = vadd.f32 %v1300, %v1302
  %v1304 = vsub.f32 %v58, %v1296
  %v1305 = vand.u32 2147483647, %v1304
  %v1306 = vadd.f32 %v1303, %v1305
  %v1307 = vmul.f32 %v1306, %v288
  %v1308 = vadd.f32 %v986, %v1307
  %1309 = vst [vmem:[#allocation1] ss:$4 sm:$0xff] %v428
  %v1310 = vld.sshfl [vmem:[#allocation1] sm:$0xff pattern:$0x73625140]
  %1311 = vrot.lane.b32.xlu0 %v1310, 112
  %v1312 = vpop.permute.xlu0 %1311
  %v1315 = vsel %vm300, %v1298, 0
  %1317 = vmatpush.msra.mxu0 0.0
  %1318 = vmatpush.msra.mxu0 0.0
  %1319 = vmatpush.msra.mxu0 0.0
  %1320 = vmatpush.msra.mxu0 0.0
  %1321 = vmatpush.msra.mxu0 0.0
  %1322 = vmatpush.msra.mxu0 0.0
  %1323 = vmatpush.msra.mxu0 0.0
  %1324 = vmatpush.msra.mxu0 0.0
  %1325 = vmatpush.msra.mxu0 0.0
  %1326 = vmatpush.msra.mxu0 0.0
  %1327 = vmatpush.msra.mxu0 0.0
  %1328 = vmatpush.msra.mxu0 0.0
  %1329 = vmatpush.msra.mxu0 0.0
  %1330 = vmatpush.msra.mxu0 0.0
  %1331 = vmatpush.msra.mxu0 %v540
  %1332 = vmatpush.msra.mxu0 %v539
  %1333 = vmatmul.f32.gmra.mxu0 %v1315
  %v1334 = vpop.f32.mrf.mxu0
  %v1335 = vadd.f32 %v1312, %v1334
  %1336 = vdwg.mxu0
  %1337 = vmatpush.msra.mxu0 0.0
  %1338 = vmatpush.msra.mxu0 0.0
  %1339 = vmatpush.msra.mxu0 0.0
  %1340 = vmatpush.msra.mxu0 0.0
  %1341 = vmatpush.msra.mxu0 0.0
  %1342 = vmatpush.msra.mxu0 0.0
  %1343 = vmatpush.msra.mxu0 0.0
  %1344 = vmatpush.msra.mxu0 0.0
  %1345 = vmatpush.msra.mxu0 0.0
  %1346 = vmatpush.msra.mxu0 0.0
  %1347 = vmatpush.msra.mxu0 0.0
  %1348 = vmatpush.msra.mxu0 0.0
  %1349 = vmatpush.msra.mxu0 %v547
  %1350 = vmatpush.msra.mxu0 %v546
  %1351 = vmatpush.msra.mxu0 %v545
  %1352 = vmatpush.msra.mxu0 %v544
  %1353 = vmatmul.f32.gmra.mxu0 %v1244
  %v1354 = vpop.f32.mrf.mxu0
  %v1355 = vadd.f32 %v663, %v1354
  %1356 = vdwg.mxu0
  %v1357 = vadd.f32 %v1335, %v1355
  %v1358 = vxor.u32 %v1357, 2147483648
  %v1359 = vmul.f32 %v1358, 1.442695
  %v1360 = vpow.pop %v1359
  %v1361 = vadd.f32 %v1360, 1.0
  %v1362 = vrcp.pop %v1361
  %v1363 = vmul.f32 %v1361, %v1362
  %v1364 = vsub.f32 1.0, %v1363
  %v1365 = vmul.f32 %v1362, %v1364
  %v1366 = vadd.f32 %v1362, %v1365
  %vm1367 = vweird.f32 %v1361
  %vm1368 = vweird.f32 %v1362
  %vm1369 = vmor %vm1367, %vm1368
  %v1370 = vsel %vm1369, %v1362, %v1366
  %v1371 = vand.u32 2147483647, %v1361
  %vm1372 = vcmp.eq.f32.partialorder %v1371, 8.507059e+37
  %v1373 = vand.u32 %v1361, 2147483648
  %v1374 = vor.u32 1.1754944e-38, %v1373
  %v1375 = vsel %vm1372, %v1374, %v1370
  %v1376 = vmul.f32 1.0, %v1375
  %1378 = vrot.lane.b32.xlu0 %v1355, 64
  %v1379 = vpop.permute.xlu0 %1378
  %v1381 = vmul.f32 %v1376, %v1379
  %1383 = vrot.lane.b32.xlu0 %v1381, 64
  %v1384 = vpop.permute.xlu0 %1383
  %v1386 = vadd.f32 %v1335, %v1384
  %v1387 = vtanh.pop %v1386
  %v1388 = vsub.f32 1.0, %v1376
  %1390 = vrot.lane.b32.xlu0 %v1387, 96
  %v1391 = vpop.permute.xlu0 %1390
  %v1393 = vmul.f32 %v1388, %v1391
  %v1394 = vmul.f32 %v1376, %v1240
  %v1395 = vadd.f32 %v1393, %v1394
  %1396 = vst [vmem:[#allocation1] ss:$4 sm:$0xff] %v343
  %v1397 = vld.sshfl [vmem:[#allocation1] sm:$0xff pattern:$0x73625140]
  %1398 = vrot.lane.b32.xlu0 %v1397, 96
  %v1399 = vpop.permute.xlu0 %1398
  %v1401 = vmul.f32 %v1234, %v1399
  %1403 = vrot.lane.b32.xlu0 %v1401, 96
  %v1404 = vpop.permute.xlu0 %1403
  %v1405 = vsel %vm565, %v1404, 0
  %1407 = vmatpush.msra.mxu0 0.0
  %1408 = vmatpush.msra.mxu0 0.0
  %1409 = vmatpush.msra.mxu0 0.0
  %1410 = vmatpush.msra.mxu0 0.0
  %1411 = vmatpush.msra.mxu0 0.0
  %1412 = vmatpush.msra.mxu0 0.0
  %1413 = vmatpush.msra.mxu0 0.0
  %1414 = vmatpush.msra.mxu0 0.0
  %1415 = vmatpush.msra.mxu0 0.0
  %1416 = vmatpush.msra.mxu0 0.0
  %1417 = vmatpush.msra.mxu0 0.0
  %1418 = vmatpush.msra.mxu0 0.0
  %1419 = vmatpush.msra.mxu0 %v527
  %1420 = vmatpush.msra.mxu0 %v526
  %1421 = vmatpush.msra.mxu0 %v525
  %1422 = vmatpush.msra.mxu0 %v524
  %1423 = vmatmul.f32.gmra.mxu0 %v1405
  %v1424 = vpop.f32.mrf.mxu0
  %v1425 = vadd.f32 %v737, %v1424
  %1426 = vdwg.mxu0
  %v1427 = vmul.f32 %v69, %v61
  %v1428 = vsub.f32 1.0, %v69
  %v1429 = vmul.f32 %v1428, %v1425
  %v1430 = vadd.f32 %v1427, %v1429
  %v1432 = vsel %vm300, %v1430, 0
  %1434 = vmatpush.msra.mxu0 0.0
  %1435 = vmatpush.msra.mxu0 0.0
  %1436 = vmatpush.msra.mxu0 0.0
  %1437 = vmatpush.msra.mxu0 0.0
  %1438 = vmatpush.msra.mxu0 0.0
  %1439 = vmatpush.msra.mxu0 0.0
  %1440 = vmatpush.msra.mxu0 0.0
  %1441 = vmatpush.msra.mxu0 0.0
  %1442 = vmatpush.msra.mxu0 0.0
  %1443 = vmatpush.msra.mxu0 0.0
  %1444 = vmatpush.msra.mxu0 0.0
  %1445 = vmatpush.msra.mxu0 0.0
  %1446 = vmatpush.msra.mxu0 0.0
  %1447 = vmatpush.msra.mxu0 0.0
  %1448 = vmatpush.msra.mxu0 %v535
  %1449 = vmatpush.msra.mxu0 %v534
  %1450 = vmatmul.f32.gmra.mxu0 %v1432
  %v1451 = vpop.f32.mrf.mxu0
  %v1452 = vadd.f32 %v771, %v1451
  %1453 = vdwg.mxu0
  %v1454 = vmul.f32 %v502, %v1452
  %v1455 = vsub.f32 1.0, %v502
  %v1456 = vmul.f32 %v1455, %v1425
  %v1457 = vadd.f32 %v1454, %v1456
  %v1458 = vmul.f32 %v1428, %v1457
  %v1459 = vadd.f32 %v1427, %v1458
  %v1460 = vsub.f32 %v61, %v1425
  %v1461 = vand.u32 2147483647, %v1460
  %v1462 = vsub.f32 %v61, %v1452
  %v1463 = vand.u32 2147483647, %v1462
  %v1464 = vadd.f32 %v1461, %v1463
  %v1465 = vsub.f32 %v61, %v1457
  %v1466 = vand.u32 2147483647, %v1465
  %v1467 = vadd.f32 %v1464, %v1466
  %v1468 = vmul.f32 %v1467, %v291
  %v1469 = vadd.f32 %v1147, %v1468
  %1470 = vst [vmem:[#allocation1] ss:$4 sm:$0xff] %v516
  %v1471 = vld.sshfl [vmem:[#allocation1] sm:$0xff pattern:$0x73625140]
  %1472 = vrot.lane.b32.xlu0 %v1471, 112
  %v1473 = vpop.permute.xlu0 %1472
  %v1476 = vsel %vm300, %v1459, 0
  %1478 = vmatpush.msra.mxu0 0.0
  %1479 = vmatpush.msra.mxu0 0.0
  %1480 = vmatpush.msra.mxu0 0.0
  %1481 = vmatpush.msra.mxu0 0.0
  %1482 = vmatpush.msra.mxu0 0.0
  %1483 = vmatpush.msra.mxu0 0.0
  %1484 = vmatpush.msra.mxu0 0.0
  %1485 = vmatpush.msra.mxu0 0.0
  %1486 = vmatpush.msra.mxu0 0.0
  %1487 = vmatpush.msra.mxu0 0.0
  %1488 = vmatpush.msra.mxu0 0.0
  %1489 = vmatpush.msra.mxu0 0.0
  %1490 = vmatpush.msra.mxu0 0.0
  %1491 = vmatpush.msra.mxu0 0.0
  %1492 = vmatpush.msra.mxu0 %v543
  %1493 = vmatpush.msra.mxu0 %v542
  %1494 = vmatmul.f32.gmra.mxu0 %v1476
  %v1495 = vpop.f32.mrf.mxu0
  %v1496 = vadd.f32 %v1473, %v1495
  %1497 = vdwg.mxu0
  %1498 = vmatpush.msra.mxu0 0.0
  %1499 = vmatpush.msra.mxu0 0.0
  %1500 = vmatpush.msra.mxu0 0.0
  %1501 = vmatpush.msra.mxu0 0.0
  %1502 = vmatpush.msra.mxu0 0.0
  %1503 = vmatpush.msra.mxu0 0.0
  %1504 = vmatpush.msra.mxu0 0.0
  %1505 = vmatpush.msra.mxu0 0.0
  %1506 = vmatpush.msra.mxu0 0.0
  %1507 = vmatpush.msra.mxu0 0.0
  %1508 = vmatpush.msra.mxu0 0.0
  %1509 = vmatpush.msra.mxu0 0.0
  %1510 = vmatpush.msra.mxu0 %v552
  %1511 = vmatpush.msra.mxu0 %v551
  %1512 = vmatpush.msra.mxu0 %v550
  %1513 = vmatpush.msra.mxu0 %v549
  %1514 = vmatmul.f32.gmra.mxu0 %v1405
  %v1515 = vpop.f32.mrf.mxu0
  %v1516 = vadd.f32 %v841, %v1515
  %1517 = vdwg.mxu0
  %v1518 = vadd.f32 %v1496, %v1516
  %v1519 = vxor.u32 %v1518, 2147483648
  %v1520 = vmul.f32 %v1519, 1.442695
  %v1521 = vpow.pop %v1520
  %v1522 = vadd.f32 %v1521, 1.0
  %v1523 = vrcp.pop %v1522
  %v1524 = vmul.f32 %v1522, %v1523
  %v1525 = vsub.f32 1.0, %v1524
  %v1526 = vmul.f32 %v1523, %v1525
  %v1527 = vadd.f32 %v1523, %v1526
  %vm1528 = vweird.f32 %v1522
  %vm1529 = vweird.f32 %v1523
  %vm1530 = vmor %vm1528, %vm1529
  %v1531 = vsel %vm1530, %v1523, %v1527
  %v1532 = vand.u32 2147483647, %v1522
  %vm1533 = vcmp.eq.f32.partialorder %v1532, 8.507059e+37
  %v1534 = vand.u32 %v1522, 2147483648
  %v1535 = vor.u32 1.1754944e-38, %v1534
  %v1536 = vsel %vm1533, %v1535, %v1531
  %v1537 = vmul.f32 1.0, %v1536
  %1539 = vrot.lane.b32.xlu0 %v1516, 64
  %v1540 = vpop.permute.xlu0 %1539
  %v1542 = vmul.f32 %v1537, %v1540
  %1544 = vrot.lane.b32.xlu0 %v1542, 64
  %v1545 = vpop.permute.xlu0 %1544
  %v1547 = vadd.f32 %v1496, %v1545
  %v1548 = vtanh.pop %v1547
  %v1549 = vsub.f32 1.0, %v1537
  %1551 = vrot.lane.b32.xlu0 %v1548, 96
  %v1552 = vpop.permute.xlu0 %1551
  %v1554 = vmul.f32 %v1549, %v1552
  %v1555 = vmul.f32 %v1537, %v1401
  %v1556 = vadd.f32 %v1554, %v1555
  %1557 = vst [vmem:[#allocation1] ss:$4 sm:$0xff] %v342
  %v1558 = vld.sshfl [vmem:[#allocation1] sm:$0xff pattern:$0x73625140]
  %1559 = vrot.lane.b32.xlu0 %v1558, 16
  %v1560 = vpop.permute.xlu0 %1559
  %v1562 = vmul.f32 %v1395, %v1560
  %1564 = vrot.lane.b32.xlu0 %v1562, 96
  %v1565 = vpop.permute.xlu0 %1564
  %v1566 = vsel %vm565, %v1565, 0
  %1568 = vmatpush.msra.mxu0 0.0
  %1569 = vmatpush.msra.mxu0 0.0
  %1570 = vmatpush.msra.mxu0 0.0
  %1571 = vmatpush.msra.mxu0 0.0
  %1572 = vmatpush.msra.mxu0 0.0
  %1573 = vmatpush.msra.mxu0 0.0
  %1574 = vmatpush.msra.mxu0 0.0
  %1575 = vmatpush.msra.mxu0 0.0
  %1576 = vmatpush.msra.mxu0 0.0
  %1577 = vmatpush.msra.mxu0 0.0
  %1578 = vmatpush.msra.mxu0 0.0
  %1579 = vmatpush.msra.mxu0 0.0
  %1580 = vmatpush.msra.mxu0 %v522
  %1581 = vmatpush.msra.mxu0 %v521
  %1582 = vmatpush.msra.mxu0 %v520
  %1583 = vmatpush.msra.mxu0 %v519
  %1584 = vmatmul.f32.gmra.mxu0 %v1566
  %v1585 = vpop.f32.mrf.mxu0
  %v1586 = vadd.f32 %v558, %v1585
  %1587 = vdwg.mxu0
  %v1588 = vmul.f32 %v67, %v59
  %v1589 = vsub.f32 1.0, %v67
  %v1590 = vmul.f32 %v1589, %v1586
  %v1591 = vadd.f32 %v1588, %v1590
  %v1593 = vsel %vm300, %v1591, 0
  %1595 = vmatpush.msra.mxu0 0.0
  %1596 = vmatpush.msra.mxu0 0.0
  %1597 = vmatpush.msra.mxu0 0.0
  %1598 = vmatpush.msra.mxu0 0.0
  %1599 = vmatpush.msra.mxu0 0.0
  %1600 = vmatpush.msra.mxu0 0.0
  %1601 = vmatpush.msra.mxu0 0.0
  %1602 = vmatpush.msra.mxu0 0.0
  %1603 = vmatpush.msra.mxu0 0.0
  %1604 = vmatpush.msra.mxu0 0.0
  %1605 = vmatpush.msra.mxu0 0.0
  %1606 = vmatpush.msra.mxu0 0.0
  %1607 = vmatpush.msra.mxu0 0.0
  %1608 = vmatpush.msra.mxu0 0.0
  %1609 = vmatpush.msra.mxu0 %v532
  %1610 = vmatpush.msra.mxu0 %v531
  %1611 = vmatmul.f32.gmra.mxu0 %v1593
  %v1612 = vpop.f32.mrf.mxu0
  %v1613 = vadd.f32 %v593, %v1612
  %1614 = vdwg.mxu0
  %v1615 = vmul.f32 %v415, %v1613
  %v1616 = vsub.f32 1.0, %v415
  %v1617 = vmul.f32 %v1616, %v1586
  %v1618 = vadd.f32 %v1615, %v1617
  %v1619 = vmul.f32 %v1589, %v1618
  %v1620 = vadd.f32 %v1588, %v1619
  %v1621 = vsub.f32 %v59, %v1586
  %v1622 = vand.u32 2147483647, %v1621
  %v1623 = vsub.f32 %v59, %v1613
  %v1624 = vand.u32 2147483647, %v1623
  %v1625 = vadd.f32 %v1622, %v1624
  %v1626 = vsub.f32 %v59, %v1618
  %v1627 = vand.u32 2147483647, %v1626
  %v1628 = vadd.f32 %v1625, %v1627
  %v1629 = vmul.f32 %v1628, %v289
  %v1630 = vadd.f32 %v1308, %v1629
  %1631 = vst [vmem:[#allocation1] ss:$4 sm:$0xff] %v429
  %v1632 = vld.sshfl [vmem:[#allocation1] sm:$0xff pattern:$0x73625140]
  %1633 = vrot.lane.b32.xlu0 %v1632, 112
  %v1634 = vpop.permute.xlu0 %1633
  %v1637 = vsel %vm300, %v1620, 0
  %1639 = vmatpush.msra.mxu0 0.0
  %1640 = vmatpush.msra.mxu0 0.0
  %1641 = vmatpush.msra.mxu0 0.0
  %1642 = vmatpush.msra.mxu0 0.0
  %1643 = vmatpush.msra.mxu0 0.0
  %1644 = vmatpush.msra.mxu0 0.0
  %1645 = vmatpush.msra.mxu0 0.0
  %1646 = vmatpush.msra.mxu0 0.0
  %1647 = vmatpush.msra.mxu0 0.0
  %1648 = vmatpush.msra.mxu0 0.0
  %1649 = vmatpush.msra.mxu0 0.0
  %1650 = vmatpush.msra.mxu0 0.0
  %1651 = vmatpush.msra.mxu0 0.0
  %1652 = vmatpush.msra.mxu0 0.0
  %1653 = vmatpush.msra.mxu0 %v540
  %1654 = vmatpush.msra.mxu0 %v539
  %1655 = vmatmul.f32.gmra.mxu0 %v1637
  %v1656 = vpop.f32.mrf.mxu0
  %v1657 = vadd.f32 %v1634, %v1656
  %1658 = vdwg.mxu0
  %1659 = vmatpush.msra.mxu0 0.0
  %1660 = vmatpush.msra.mxu0 0.0
  %1661 = vmatpush.msra.mxu0 0.0
  %1662 = vmatpush.msra.mxu0 0.0
  %1663 = vmatpush.msra.mxu0 0.0
  %1664 = vmatpush.msra.mxu0 0.0
  %1665 = vmatpush.msra.mxu0 0.0
  %1666 = vmatpush.msra.mxu0 0.0
  %1667 = vmatpush.msra.mxu0 0.0
  %1668 = vmatpush.msra.mxu0 0.0
  %1669 = vmatpush.msra.mxu0 0.0
  %1670 = vmatpush.msra.mxu0 0.0
  %1671 = vmatpush.msra.mxu0 %v547
  %1672 = vmatpush.msra.mxu0 %v546
  %1673 = vmatpush.msra.mxu0 %v545
  %1674 = vmatpush.msra.mxu0 %v544
  %1675 = vmatmul.f32.gmra.mxu0 %v1566
  %v1676 = vpop.f32.mrf.mxu0
  %v1677 = vadd.f32 %v663, %v1676
  %1678 = vdwg.mxu0
  %v1679 = vadd.f32 %v1657, %v1677
  %v1680 = vxor.u32 %v1679, 2147483648
  %v1681 = vmul.f32 %v1680, 1.442695
  %v1682 = vpow.pop %v1681
  %v1683 = vadd.f32 %v1682, 1.0
  %v1684 = vrcp.pop %v1683
  %v1685 = vmul.f32 %v1683, %v1684
  %v1686 = vsub.f32 1.0, %v1685
  %v1687 = vmul.f32 %v1684, %v1686
  %v1688 = vadd.f32 %v1684, %v1687
  %vm1689 = vweird.f32 %v1683
  %vm1690 = vweird.f32 %v1684
  %vm1691 = vmor %vm1689, %vm1690
  %v1692 = vsel %vm1691, %v1684, %v1688
  %v1693 = vand.u32 2147483647, %v1683
  %vm1694 = vcmp.eq.f32.partialorder %v1693, 8.507059e+37
  %v1695 = vand.u32 %v1683, 2147483648
  %v1696 = vor.u32 1.1754944e-38, %v1695
  %v1697 = vsel %vm1694, %v1696, %v1692
  %v1698 = vmul.f32 1.0, %v1697
  %1700 = vrot.lane.b32.xlu0 %v1677, 64
  %v1701 = vpop.permute.xlu0 %1700
  %v1703 = vmul.f32 %v1698, %v1701
  %1705 = vrot.lane.b32.xlu0 %v1703, 64
  %v1706 = vpop.permute.xlu0 %1705
  %v1708 = vadd.f32 %v1657, %v1706
  %v1709 = vtanh.pop %v1708
  %v1710 = vsub.f32 1.0, %v1698
  %1712 = vrot.lane.b32.xlu0 %v1709, 96
  %v1713 = vpop.permute.xlu0 %1712
  %v1715 = vmul.f32 %v1710, %v1713
  %v1716 = vmul.f32 %v1698, %v1562
  %v1717 = vadd.f32 %v1715, %v1716
  %1718 = vst [vmem:[#allocation1] ss:$4 sm:$0xff] %v337
  %v1719 = vld.sshfl [vmem:[#allocation1] sm:$0xff pattern:$0x73625140]
  %1720 = vrot.lane.b32.xlu0 %v1719, 96
  %v1721 = vpop.permute.xlu0 %1720
  %v1723 = vmul.f32 %v1556, %v1721
  %1725 = vrot.lane.b32.xlu0 %v1723, 96
  %v1726 = vpop.permute.xlu0 %1725
  %v1727 = vsel %vm565, %v1726, 0
  %1729 = vmatpush.msra.mxu0 0.0
  %1730 = vmatpush.msra.mxu0 0.0
  %1731 = vmatpush.msra.mxu0 0.0
  %1732 = vmatpush.msra.mxu0 0.0
  %1733 = vmatpush.msra.mxu0 0.0
  %1734 = vmatpush.msra.mxu0 0.0
  %1735 = vmatpush.msra.mxu0 0.0
  %1736 = vmatpush.msra.mxu0 0.0
  %1737 = vmatpush.msra.mxu0 0.0
  %1738 = vmatpush.msra.mxu0 0.0
  %1739 = vmatpush.msra.mxu0 0.0
  %1740 = vmatpush.msra.mxu0 0.0
  %1741 = vmatpush.msra.mxu0 %v527
  %1742 = vmatpush.msra.mxu0 %v526
  %1743 = vmatpush.msra.mxu0 %v525
  %1744 = vmatpush.msra.mxu0 %v524
  %1745 = vmatmul.f32.gmra.mxu0 %v1727
  %v1746 = vpop.f32.mrf.mxu0
  %v1747 = vadd.f32 %v737, %v1746
  %1748 = vdwg.mxu0
  %v1749 = vmul.f32 %v68, %v60
  %v1750 = vsub.f32 1.0, %v68
  %v1751 = vmul.f32 %v1750, %v1747
  %v1752 = vadd.f32 %v1749, %v1751
  %v1754 = vsel %vm300, %v1752, 0
  %1756 = vmatpush.msra.mxu0 0.0
  %1757 = vmatpush.msra.mxu0 0.0
  %1758 = vmatpush.msra.mxu0 0.0
  %1759 = vmatpush.msra.mxu0 0.0
  %1760 = vmatpush.msra.mxu0 0.0
  %1761 = vmatpush.msra.mxu0 0.0
  %1762 = vmatpush.msra.mxu0 0.0
  %1763 = vmatpush.msra.mxu0 0.0
  %1764 = vmatpush.msra.mxu0 0.0
  %1765 = vmatpush.msra.mxu0 0.0
  %1766 = vmatpush.msra.mxu0 0.0
  %1767 = vmatpush.msra.mxu0 0.0
  %1768 = vmatpush.msra.mxu0 0.0
  %1769 = vmatpush.msra.mxu0 0.0
  %1770 = vmatpush.msra.mxu0 %v535
  %1771 = vmatpush.msra.mxu0 %v534
  %1772 = vmatmul.f32.gmra.mxu0 %v1754
  %v1773 = vpop.f32.mrf.mxu0
  %v1774 = vadd.f32 %v771, %v1773
  %1775 = vdwg.mxu0
  %v1776 = vmul.f32 %v495, %v1774
  %v1777 = vsub.f32 1.0, %v495
  %v1778 = vmul.f32 %v1777, %v1747
  %v1779 = vadd.f32 %v1776, %v1778
  %v1780 = vmul.f32 %v1750, %v1779
  %v1781 = vadd.f32 %v1749, %v1780
  %v1782 = vsub.f32 %v60, %v1747
  %v1783 = vand.u32 2147483647, %v1782
  %v1784 = vsub.f32 %v60, %v1774
  %v1785 = vand.u32 2147483647, %v1784
  %v1786 = vadd.f32 %v1783, %v1785
  %v1787 = vsub.f32 %v60, %v1779
  %v1788 = vand.u32 2147483647, %v1787
  %v1789 = vadd.f32 %v1786, %v1788
  %v1790 = vmul.f32 %v1789, %v290
  %v1791 = vadd.f32 %v1469, %v1790
  %1792 = vst [vmem:[#allocation1] ss:$4 sm:$0xff] %v461
  %v1793 = vld.sshfl [vmem:[#allocation1] sm:$0xff pattern:$0x73625140]
  %1794 = vrot.lane.b32.xlu0 %v1793, 112
  %v1795 = vpop.permute.xlu0 %1794
  %v1798 = vsel %vm300, %v1781, 0
  %1800 = vmatpush.msra.mxu0 0.0
  %1801 = vmatpush.msra.mxu0 0.0
  %1802 = vmatpush.msra.mxu0 0.0
  %1803 = vmatpush.msra.mxu0 0.0
  %1804 = vmatpush.msra.mxu0 0.0
  %1805 = vmatpush.msra.mxu0 0.0
  %1806 = vmatpush.msra.mxu0 0.0
  %1807 = vmatpush.msra.mxu0 0.0
  %1808 = vmatpush.msra.mxu0 0.0
  %1809 = vmatpush.msra.mxu0 0.0
  %1810 = vmatpush.msra.mxu0 0.0
  %1811 = vmatpush.msra.mxu0 0.0
  %1812 = vmatpush.msra.mxu0 0.0
  %1813 = vmatpush.msra.mxu0 0.0
  %1814 = vmatpush.msra.mxu0 %v543
  %1815 = vmatpush.msra.mxu0 %v542
  %1816 = vmatmul.f32.gmra.mxu0 %v1798
  %v1817 = vpop.f32.mrf.mxu0
  %v1818 = vadd.f32 %v1795, %v1817
  %1819 = vdwg.mxu0
  %1820 = vmatpush.msra.mxu0 0.0
  %1821 = vmatpush.msra.mxu0 0.0
  %1822 = vmatpush.msra.mxu0 0.0
  %1823 = vmatpush.msra.mxu0 0.0
  %1824 = vmatpush.msra.mxu0 0.0
  %1825 = vmatpush.msra.mxu0 0.0
  %1826 = vmatpush.msra.mxu0 0.0
  %1827 = vmatpush.msra.mxu0 0.0
  %1828 = vmatpush.msra.mxu0 0.0
  %1829 = vmatpush.msra.mxu0 0.0
  %1830 = vmatpush.msra.mxu0 0.0
  %1831 = vmatpush.msra.mxu0 0.0
  %1832 = vmatpush.msra.mxu0 %v552
  %1833 = vmatpush.msra.mxu0 %v551
  %1834 = vmatpush.msra.mxu0 %v550
  %1835 = vmatpush.msra.mxu0 %v549
  %1836 = vmatmul.f32.gmra.mxu0 %v1727
  %v1837 = vpop.f32.mrf.mxu0
  %v1838 = vadd.f32 %v841, %v1837
  %1839 = vdwg.mxu0
  %v1840 = vadd.f32 %v1818, %v1838
  %v1841 = vxor.u32 %v1840, 2147483648
  %v1842 = vmul.f32 %v1841, 1.442695
  %v1843 = vpow.pop %v1842
  %v1844 = vadd.f32 %v1843, 1.0
  %v1845 = vrcp.pop %v1844
  %v1846 = vmul.f32 %v1844, %v1845
  %v1847 = vsub.f32 1.0, %v1846
  %v1848 = vmul.f32 %v1845, %v1847
  %v1849 = vadd.f32 %v1845, %v1848
  %vm1850 = vweird.f32 %v1844
  %vm1851 = vweird.f32 %v1845
  %vm1852 = vmor %vm1850, %vm1851
  %v1853 = vsel %vm1852, %v1845, %v1849
  %v1854 = vand.u32 2147483647, %v1844
  %vm1855 = vcmp.eq.f32.partialorder %v1854, 8.507059e+37
  %v1856 = vand.u32 %v1844, 2147483648
  %v1857 = vor.u32 1.1754944e-38, %v1856
  %v1858 = vsel %vm1855, %v1857, %v1853
  %v1859 = vmul.f32 1.0, %v1858
  %1861 = vrot.lane.b32.xlu0 %v1838, 64
  %v1862 = vpop.permute.xlu0 %1861
  %v1864 = vmul.f32 %v1859, %v1862
  %1866 = vrot.lane.b32.xlu0 %v1864, 64
  %v1867 = vpop.permute.xlu0 %1866
  %v1869 = vadd.f32 %v1818, %v1867
  %v1870 = vtanh.pop %v1869
  %v1871 = vsub.f32 1.0, %v1859
  %1873 = vrot.lane.b32.xlu0 %v1870, 96
  %v1874 = vpop.permute.xlu0 %1873
  %v1876 = vmul.f32 %v1871, %v1874
  %v1877 = vmul.f32 %v1859, %v1723
  %v1878 = vadd.f32 %v1876, %v1877
  %1879 = vst [vmem:[#allocation1] ss:$4 sm:$0xff] %v337
  %v1880 = vld.sshfl [vmem:[#allocation1] sm:$0xff pattern:$0x73625140]
  %1881 = vrot.lane.b32.xlu0 %v1880, 16
  %v1882 = vpop.permute.xlu0 %1881
  %v1884 = vmul.f32 %v1717, %v1882
  %1886 = vrot.lane.b32.xlu0 %v1884, 96
  %v1887 = vpop.permute.xlu0 %1886
  %v1888 = vsel %vm565, %v1887, 0
  %1890 = vmatpush.msra.mxu0 0.0
  %1891 = vmatpush.msra.mxu0 0.0
  %1892 = vmatpush.msra.mxu0 0.0
  %1893 = vmatpush.msra.mxu0 0.0
  %1894 = vmatpush.msra.mxu0 0.0
  %1895 = vmatpush.msra.mxu0 0.0
  %1896 = vmatpush.msra.mxu0 0.0
  %1897 = vmatpush.msra.mxu0 0.0
  %1898 = vmatpush.msra.mxu0 0.0
  %1899 = vmatpush.msra.mxu0 0.0
  %1900 = vmatpush.msra.mxu0 0.0
  %1901 = vmatpush.msra.mxu0 0.0
  %1902 = vmatpush.msra.mxu0 %v522
  %1903 = vmatpush.msra.mxu0 %v521
  %1904 = vmatpush.msra.mxu0 %v520
  %1905 = vmatpush.msra.mxu0 %v519
  %1906 = vmatmul.f32.gmra.mxu0 %v1888
  %v1907 = vpop.f32.mrf.mxu0
  %v1908 = vadd.f32 %v558, %v1907
  %1909 = vdwg.mxu0
  %v1910 = vmul.f32 %v1750, %v1908
  %v1911 = vadd.f32 %v1749, %v1910
  %v1913 = vsel %vm300, %v1911, 0
  %1915 = vmatpush.msra.mxu0 0.0
  %1916 = vmatpush.msra.mxu0 0.0
  %1917 = vmatpush.msra.mxu0 0.0
  %1918 = vmatpush.msra.mxu0 0.0
  %1919 = vmatpush.msra.mxu0 0.0
  %1920 = vmatpush.msra.mxu0 0.0
  %1921 = vmatpush.msra.mxu0 0.0
  %1922 = vmatpush.msra.mxu0 0.0
  %1923 = vmatpush.msra.mxu0 0.0
  %1924 = vmatpush.msra.mxu0 0.0
  %1925 = vmatpush.msra.mxu0 0.0
  %1926 = vmatpush.msra.mxu0 0.0
  %1927 = vmatpush.msra.mxu0 0.0
  %1928 = vmatpush.msra.mxu0 0.0
  %1929 = vmatpush.msra.mxu0 %v532
  %1930 = vmatpush.msra.mxu0 %v531
  %1931 = vmatmul.f32.gmra.mxu0 %v1913
  %v1932 = vpop.f32.mrf.mxu0
  %v1933 = vadd.f32 %v593, %v1932
  %1934 = vdwg.mxu0
  %v1935 = vmul.f32 %v409, %v1933
  %v1936 = vsub.f32 1.0, %v409
  %v1937 = vmul.f32 %v1936, %v1908
  %v1938 = vadd.f32 %v1935, %v1937
  %v1939 = vmul.f32 %v1750, %v1938
  %v1940 = vadd.f32 %v1749, %v1939
  %v1941 = vsub.f32 %v60, %v1908
  %v1942 = vand.u32 2147483647, %v1941
  %v1943 = vsub.f32 %v60, %v1933
  %v1944 = vand.u32 2147483647, %v1943
  %v1945 = vadd.f32 %v1942, %v1944
  %v1946 = vsub.f32 %v60, %v1938
  %v1947 = vand.u32 2147483647, %v1946
  %v1948 = vadd.f32 %v1945, %v1947
  %v1949 = vmul.f32 %v1948, %v290
  %v1950 = vadd.f32 %v1630, %v1949
  %1951 = vst [vmem:[#allocation1] ss:$4 sm:$0xff] %v380
  %v1952 = vld.sshfl [vmem:[#allocation1] sm:$0xff pattern:$0x73625140]
  %1953 = vrot.lane.b32.xlu0 %v1952, 112
  %v1954 = vpop.permute.xlu0 %1953
  %v1957 = vsel %vm300, %v1940, 0
  %1959 = vmatpush.msra.mxu0 0.0
  %1960 = vmatpush.msra.mxu0 0.0
  %1961 = vmatpush.msra.mxu0 0.0
  %1962 = vmatpush.msra.mxu0 0.0
  %1963 = vmatpush.msra.mxu0 0.0
  %1964 = vmatpush.msra.mxu0 0.0
  %1965 = vmatpush.msra.mxu0 0.0
  %1966 = vmatpush.msra.mxu0 0.0
  %1967 = vmatpush.msra.mxu0 0.0
  %1968 = vmatpush.msra.mxu0 0.0
  %1969 = vmatpush.msra.mxu0 0.0
  %1970 = vmatpush.msra.mxu0 0.0
  %1971 = vmatpush.msra.mxu0 0.0
  %1972 = vmatpush.msra.mxu0 0.0
  %1973 = vmatpush.msra.mxu0 %v540
  %1974 = vmatpush.msra.mxu0 %v539
  %1975 = vmatmul.f32.gmra.mxu0 %v1957
  %v1976 = vpop.f32.mrf.mxu0
  %v1977 = vadd.f32 %v1954, %v1976
  %1978 = vdwg.mxu0
  %1979 = vmatpush.msra.mxu0 0.0
  %1980 = vmatpush.msra.mxu0 0.0
  %1981 = vmatpush.msra.mxu0 0.0
  %1982 = vmatpush.msra.mxu0 0.0
  %1983 = vmatpush.msra.mxu0 0.0
  %1984 = vmatpush.msra.mxu0 0.0
  %1985 = vmatpush.msra.mxu0 0.0
  %1986 = vmatpush.msra.mxu0 0.0
  %1987 = vmatpush.msra.mxu0 0.0
  %1988 = vmatpush.msra.mxu0 0.0
  %1989 = vmatpush.msra.mxu0 0.0
  %1990 = vmatpush.msra.mxu0 0.0
  %1991 = vmatpush.msra.mxu0 %v547
  %1992 = vmatpush.msra.mxu0 %v546
  %1993 = vmatpush.msra.mxu0 %v545
  %1994 = vmatpush.msra.mxu0 %v544
  %1995 = vmatmul.f32.gmra.mxu0 %v1888
  %v1996 = vpop.f32.mrf.mxu0
  %v1997 = vadd.f32 %v663, %v1996
  %1998 = vdwg.mxu0
  %v1999 = vadd.f32 %v1977, %v1997
  %v2000 = vxor.u32 %v1999, 2147483648
  %v2001 = vmul.f32 %v2000, 1.442695
  %v2002 = vpow.pop %v2001
  %v2003 = vadd.f32 %v2002, 1.0
  %v2004 = vrcp.pop %v2003
  %v2005 = vmul.f32 %v2003, %v2004
  %v2006 = vsub.f32 1.0, %v2005
  %v2007 = vmul.f32 %v2004, %v2006
  %v2008 = vadd.f32 %v2004, %v2007
  %vm2009 = vweird.f32 %v2003
  %vm2010 = vweird.f32 %v2004
  %vm2011 = vmor %vm2009, %vm2010
  %v2012 = vsel %vm2011, %v2004, %v2008
  %v2013 = vand.u32 2147483647, %v2003
  %vm2014 = vcmp.eq.f32.partialorder %v2013, 8.507059e+37
  %v2015 = vand.u32 %v2003, 2147483648
  %v2016 = vor.u32 1.1754944e-38, %v2015
  %v2017 = vsel %vm2014, %v2016, %v2012
  %v2018 = vmul.f32 1.0, %v2017
  %2020 = vrot.lane.b32.xlu0 %v1997, 64
  %v2021 = vpop.permute.xlu0 %2020
  %v2023 = vmul.f32 %v2018, %v2021
  %2025 = vrot.lane.b32.xlu0 %v2023, 64
  %v2026 = vpop.permute.xlu0 %2025
  %v2028 = vadd.f32 %v1977, %v2026
  %v2029 = vtanh.pop %v2028
  %v2030 = vsub.f32 1.0, %v2018
  %2032 = vrot.lane.b32.xlu0 %v2029, 96
  %v2033 = vpop.permute.xlu0 %2032
  %v2035 = vmul.f32 %v2030, %v2033
  %v2036 = vmul.f32 %v2018, %v1884
  %v2037 = vadd.f32 %v2035, %v2036
  %2038 = vst [vmem:[#allocation1] ss:$4 sm:$0xff] %v342
  %v2039 = vld.sshfl [vmem:[#allocation1] sm:$0xff pattern:$0x73625140]
  %2040 = vrot.lane.b32.xlu0 %v2039, 96
  %v2041 = vpop.permute.xlu0 %2040
  %v2043 = vmul.f32 %v1878, %v2041
  %2045 = vrot.lane.b32.xlu0 %v2043, 96
  %v2046 = vpop.permute.xlu0 %2045
  %v2047 = vsel %vm565, %v2046, 0
  %2049 = vmatpush.msra.mxu0 0.0
  %2050 = vmatpush.msra.mxu0 0.0
  %2051 = vmatpush.msra.mxu0 0.0
  %2052 = vmatpush.msra.mxu0 0.0
  %2053 = vmatpush.msra.mxu0 0.0
  %2054 = vmatpush.msra.mxu0 0.0
  %2055 = vmatpush.msra.mxu0 0.0
  %2056 = vmatpush.msra.mxu0 0.0
  %2057 = vmatpush.msra.mxu0 0.0
  %2058 = vmatpush.msra.mxu0 0.0
  %2059 = vmatpush.msra.mxu0 0.0
  %2060 = vmatpush.msra.mxu0 0.0
  %2061 = vmatpush.msra.mxu0 %v527
  %2062 = vmatpush.msra.mxu0 %v526
  %2063 = vmatpush.msra.mxu0 %v525
  %2064 = vmatpush.msra.mxu0 %v524
  %2065 = vmatmul.f32.gmra.mxu0 %v2047
  %v2066 = vpop.f32.mrf.mxu0
  %v2067 = vadd.f32 %v737, %v2066
  %2068 = vdwg.mxu0
  %v2069 = vmul.f32 %v1589, %v2067
  %v2070 = vadd.f32 %v1588, %v2069
  %v2072 = vsel %vm300, %v2070, 0
  %2074 = vmatpush.msra.mxu0 0.0
  %2075 = vmatpush.msra.mxu0 0.0
  %2076 = vmatpush.msra.mxu0 0.0
  %2077 = vmatpush.msra.mxu0 0.0
  %2078 = vmatpush.msra.mxu0 0.0
  %2079 = vmatpush.msra.mxu0 0.0
  %2080 = vmatpush.msra.mxu0 0.0
  %2081 = vmatpush.msra.mxu0 0.0
  %2082 = vmatpush.msra.mxu0 0.0
  %2083 = vmatpush.msra.mxu0 0.0
  %2084 = vmatpush.msra.mxu0 0.0
  %2085 = vmatpush.msra.mxu0 0.0
  %2086 = vmatpush.msra.mxu0 0.0
  %2087 = vmatpush.msra.mxu0 0.0
  %2088 = vmatpush.msra.mxu0 %v535
  %2089 = vmatpush.msra.mxu0 %v534
  %2090 = vmatmul.f32.gmra.mxu0 %v2072
  %v2091 = vpop.f32.mrf.mxu0
  %v2092 = vadd.f32 %v771, %v2091
  %2093 = vdwg.mxu0
  %v2094 = vmul.f32 %v501, %v2092
  %v2095 = vsub.f32 1.0, %v501
  %v2096 = vmul.f32 %v2095, %v2067
  %v2097 = vadd.f32 %v2094, %v2096
  %v2098 = vmul.f32 %v1589, %v2097
  %v2099 = vadd.f32 %v1588, %v2098
  %v2100 = vsub.f32 %v59, %v2067
  %v2101 = vand.u32 2147483647, %v2100
  %v2102 = vsub.f32 %v59, %v2092
  %v2103 = vand.u32 2147483647, %v2102
  %v2104 = vadd.f32 %v2101, %v2103
  %v2105 = vsub.f32 %v59, %v2097
  %v2106 = vand.u32 2147483647, %v2105
  %v2107 = vadd.f32 %v2104, %v2106
  %v2108 = vmul.f32 %v2107, %v289
  %v2109 = vadd.f32 %v1791, %v2108
  %2110 = vst [vmem:[#allocation1] ss:$4 sm:$0xff] %v515
  %v2111 = vld.sshfl [vmem:[#allocation1] sm:$0xff pattern:$0x73625140]
  %2112 = vrot.lane.b32.xlu0 %v2111, 112
  %v2113 = vpop.permute.xlu0 %2112
  %v2116 = vsel %vm300, %v2099, 0
  %2118 = vmatpush.msra.mxu0 0.0
  %2119 = vmatpush.msra.mxu0 0.0
  %2120 = vmatpush.msra.mxu0 0.0
  %2121 = vmatpush.msra.mxu0 0.0
  %2122 = vmatpush.msra.mxu0 0.0
  %2123 = vmatpush.msra.mxu0 0.0
  %2124 = vmatpush.msra.mxu0 0.0
  %2125 = vmatpush.msra.mxu0 0.0
  %2126 = vmatpush.msra.mxu0 0.0
  %2127 = vmatpush.msra.mxu0 0.0
  %2128 = vmatpush.msra.mxu0 0.0
  %2129 = vmatpush.msra.mxu0 0.0
  %2130 = vmatpush.msra.mxu0 0.0
  %2131 = vmatpush.msra.mxu0 0.0
  %2132 = vmatpush.msra.mxu0 %v543
  %2133 = vmatpush.msra.mxu0 %v542
  %2134 = vmatmul.f32.gmra.mxu0 %v2116
  %v2135 = vpop.f32.mrf.mxu0
  %v2136 = vadd.f32 %v2113, %v2135
  %2137 = vdwg.mxu0
  %2138 = vmatpush.msra.mxu0 0.0
  %2139 = vmatpush.msra.mxu0 0.0
  %2140 = vmatpush.msra.mxu0 0.0
  %2141 = vmatpush.msra.mxu0 0.0
  %2142 = vmatpush.msra.mxu0 0.0
  %2143 = vmatpush.msra.mxu0 0.0
  %2144 = vmatpush.msra.mxu0 0.0
  %2145 = vmatpush.msra.mxu0 0.0
  %2146 = vmatpush.msra.mxu0 0.0
  %2147 = vmatpush.msra.mxu0 0.0
  %2148 = vmatpush.msra.mxu0 0.0
  %2149 = vmatpush.msra.mxu0 0.0
  %2150 = vmatpush.msra.mxu0 %v552
  %2151 = vmatpush.msra.mxu0 %v551
  %2152 = vmatpush.msra.mxu0 %v550
  %2153 = vmatpush.msra.mxu0 %v549
  %2154 = vmatmul.f32.gmra.mxu0 %v2047
  %v2155 = vpop.f32.mrf.mxu0
  %v2156 = vadd.f32 %v841, %v2155
  %2157 = vdwg.mxu0
  %v2158 = vadd.f32 %v2136, %v2156
  %v2159 = vxor.u32 %v2158, 2147483648
  %v2160 = vmul.f32 %v2159, 1.442695
  %v2161 = vpow.pop %v2160
  %v2162 = vadd.f32 %v2161, 1.0
  %v2163 = vrcp.pop %v2162
  %v2164 = vmul.f32 %v2162, %v2163
  %v2165 = vsub.f32 1.0, %v2164
  %v2166 = vmul.f32 %v2163, %v2165
  %v2167 = vadd.f32 %v2163, %v2166
  %vm2168 = vweird.f32 %v2162
  %vm2169 = vweird.f32 %v2163
  %vm2170 = vmor %vm2168, %vm2169
  %v2171 = vsel %vm2170, %v2163, %v2167
  %v2172 = vand.u32 2147483647, %v2162
  %vm2173 = vcmp.eq.f32.partialorder %v2172, 8.507059e+37
  %v2174 = vand.u32 %v2162, 2147483648
  %v2175 = vor.u32 1.1754944e-38, %v2174
  %v2176 = vsel %vm2173, %v2175, %v2171
  %v2177 = vmul.f32 1.0, %v2176
  %2179 = vrot.lane.b32.xlu0 %v2156, 64
  %v2180 = vpop.permute.xlu0 %2179
  %v2182 = vmul.f32 %v2177, %v2180
  %2184 = vrot.lane.b32.xlu0 %v2182, 64
  %v2185 = vpop.permute.xlu0 %2184
  %v2187 = vadd.f32 %v2136, %v2185
  %v2188 = vtanh.pop %v2187
  %v2189 = vsub.f32 1.0, %v2177
  %2191 = vrot.lane.b32.xlu0 %v2188, 96
  %v2192 = vpop.permute.xlu0 %2191
  %v2194 = vmul.f32 %v2189, %v2192
  %v2195 = vmul.f32 %v2177, %v2043
  %v2196 = vadd.f32 %v2194, %v2195
  %2197 = vst [vmem:[#allocation1] ss:$4 sm:$0xff] %v343
  %v2198 = vld.sshfl [vmem:[#allocation1] sm:$0xff pattern:$0x73625140]
  %2199 = vrot.lane.b32.xlu0 %v2198, 16
  %v2200 = vpop.permute.xlu0 %2199
  %v2202 = vmul.f32 %v2037, %v2200
  %2204 = vrot.lane.b32.xlu0 %v2202, 96
  %v2205 = vpop.permute.xlu0 %2204
  %v2206 = vsel %vm565, %v2205, 0
  %2208 = vmatpush.msra.mxu0 0.0
  %2209 = vmatpush.msra.mxu0 0.0
  %2210 = vmatpush.msra.mxu0 0.0
  %2211 = vmatpush.msra.mxu0 0.0
  %2212 = vmatpush.msra.mxu0 0.0
  %2213 = vmatpush.msra.mxu0 0.0
  %2214 = vmatpush.msra.mxu0 0.0
  %2215 = vmatpush.msra.mxu0 0.0
  %2216 = vmatpush.msra.mxu0 0.0
  %2217 = vmatpush.msra.mxu0 0.0
  %2218 = vmatpush.msra.mxu0 0.0
  %2219 = vmatpush.msra.mxu0 0.0
  %2220 = vmatpush.msra.mxu0 %v522
  %2221 = vmatpush.msra.mxu0 %v521
  %2222 = vmatpush.msra.mxu0 %v520
  %2223 = vmatpush.msra.mxu0 %v519
  %2224 = vmatmul.f32.gmra.mxu0 %v2206
  %v2225 = vpop.f32.mrf.mxu0
  %v2226 = vadd.f32 %v558, %v2225
  %2227 = vdwg.mxu0
  %v2228 = vmul.f32 %v1428, %v2226
  %v2229 = vadd.f32 %v1427, %v2228
  %v2231 = vsel %vm300, %v2229, 0
  %2233 = vmatpush.msra.mxu0 0.0
  %2234 = vmatpush.msra.mxu0 0.0
  %2235 = vmatpush.msra.mxu0 0.0
  %2236 = vmatpush.msra.mxu0 0.0
  %2237 = vmatpush.msra.mxu0 0.0
  %2238 = vmatpush.msra.mxu0 0.0
  %2239 = vmatpush.msra.mxu0 0.0
  %2240 = vmatpush.msra.mxu0 0.0
  %2241 = vmatpush.msra.mxu0 0.0
  %2242 = vmatpush.msra.mxu0 0.0
  %2243 = vmatpush.msra.mxu0 0.0
  %2244 = vmatpush.msra.mxu0 0.0
  %2245 = vmatpush.msra.mxu0 0.0
  %2246 = vmatpush.msra.mxu0 0.0
  %2247 = vmatpush.msra.mxu0 %v532
  %2248 = vmatpush.msra.mxu0 %v531
  %2249 = vmatmul.f32.gmra.mxu0 %v2231
  %v2250 = vpop.f32.mrf.mxu0
  %v2251 = vadd.f32 %v593, %v2250
  %2252 = vdwg.mxu0
  %v2253 = vmul.f32 %v416, %v2251
  %v2254 = vsub.f32 1.0, %v416
  %v2255 = vmul.f32 %v2254, %v2226
  %v2256 = vadd.f32 %v2253, %v2255
  %v2257 = vmul.f32 %v1428, %v2256
  %v2258 = vadd.f32 %v1427, %v2257
  %v2259 = vsub.f32 %v61, %v2226
  %v2260 = vand.u32 2147483647, %v2259
  %v2261 = vsub.f32 %v61, %v2251
  %v2262 = vand.u32 2147483647, %v2261
  %v2263 = vadd.f32 %v2260, %v2262
  %v2264 = vsub.f32 %v61, %v2256
  %v2265 = vand.u32 2147483647, %v2264
  %v2266 = vadd.f32 %v2263, %v2265
  %v2267 = vmul.f32 %v2266, %v291
  %v2268 = vadd.f32 %v1950, %v2267
  %2269 = vst [vmem:[#allocation1] ss:$4 sm:$0xff] %v430
  %v2270 = vld.sshfl [vmem:[#allocation1] sm:$0xff pattern:$0x73625140]
  %2271 = vrot.lane.b32.xlu0 %v2270, 112
  %v2272 = vpop.permute.xlu0 %2271
  %v2275 = vsel %vm300, %v2258, 0
  %2277 = vmatpush.msra.mxu0 0.0
  %2278 = vmatpush.msra.mxu0 0.0
  %2279 = vmatpush.msra.mxu0 0.0
  %2280 = vmatpush.msra.mxu0 0.0
  %2281 = vmatpush.msra.mxu0 0.0
  %2282 = vmatpush.msra.mxu0 0.0
  %2283 = vmatpush.msra.mxu0 0.0
  %2284 = vmatpush.msra.mxu0 0.0
  %2285 = vmatpush.msra.mxu0 0.0
  %2286 = vmatpush.msra.mxu0 0.0
  %2287 = vmatpush.msra.mxu0 0.0
  %2288 = vmatpush.msra.mxu0 0.0
  %2289 = vmatpush.msra.mxu0 0.0
  %2290 = vmatpush.msra.mxu0 0.0
  %2291 = vmatpush.msra.mxu0 %v540
  %2292 = vmatpush.msra.mxu0 %v539
  %2293 = vmatmul.f32.gmra.mxu0 %v2275
  %v2294 = vpop.f32.mrf.mxu0
  %v2295 = vadd.f32 %v2272, %v2294
  %2296 = vdwg.mxu0
  %2297 = vmatpush.msra.mxu0 0.0
  %2298 = vmatpush.msra.mxu0 0.0
  %2299 = vmatpush.msra.mxu0 0.0
  %2300 = vmatpush.msra.mxu0 0.0
  %2301 = vmatpush.msra.mxu0 0.0
  %2302 = vmatpush.msra.mxu0 0.0
  %2303 = vmatpush.msra.mxu0 0.0
  %2304 = vmatpush.msra.mxu0 0.0
  %2305 = vmatpush.msra.mxu0 0.0
  %2306 = vmatpush.msra.mxu0 0.0
  %2307 = vmatpush.msra.mxu0 0.0
  %2308 = vmatpush.msra.mxu0 0.0
  %2309 = vmatpush.msra.mxu0 %v547
  %2310 = vmatpush.msra.mxu0 %v546
  %2311 = vmatpush.msra.mxu0 %v545
  %2312 = vmatpush.msra.mxu0 %v544
  %2313 = vmatmul.f32.gmra.mxu0 %v2206
  %v2314 = vpop.f32.mrf.mxu0
  %v2315 = vadd.f32 %v663, %v2314
  %2316 = vdwg.mxu0
  %v2317 = vadd.f32 %v2295, %v2315
  %v2318 = vxor.u32 %v2317, 2147483648
  %v2319 = vmul.f32 %v2318, 1.442695
  %v2320 = vpow.pop %v2319
  %v2321 = vadd.f32 %v2320, 1.0
  %v2322 = vrcp.pop %v2321
  %v2323 = vmul.f32 %v2321, %v2322
  %v2324 = vsub.f32 1.0, %v2323
  %v2325 = vmul.f32 %v2322, %v2324
  %v2326 = vadd.f32 %v2322, %v2325
  %vm2327 = vweird.f32 %v2321
  %vm2328 = vweird.f32 %v2322
  %vm2329 = vmor %vm2327, %vm2328
  %v2330 = vsel %vm2329, %v2322, %v2326
  %v2331 = vand.u32 2147483647, %v2321
  %vm2332 = vcmp.eq.f32.partialorder %v2331, 8.507059e+37
  %v2333 = vand.u32 %v2321, 2147483648
  %v2334 = vor.u32 1.1754944e-38, %v2333
  %v2335 = vsel %vm2332, %v2334, %v2330
  %v2336 = vmul.f32 1.0, %v2335
  %2338 = vrot.lane.b32.xlu0 %v2315, 64
  %v2339 = vpop.permute.xlu0 %2338
  %v2341 = vmul.f32 %v2336, %v2339
  %2343 = vrot.lane.b32.xlu0 %v2341, 64
  %v2344 = vpop.permute.xlu0 %2343
  %v2346 = vadd.f32 %v2295, %v2344
  %v2347 = vtanh.pop %v2346
  %v2348 = vsub.f32 1.0, %v2336
  %2350 = vrot.lane.b32.xlu0 %v2347, 96
  %v2351 = vpop.permute.xlu0 %2350
  %v2353 = vmul.f32 %v2348, %v2351
  %v2354 = vmul.f32 %v2336, %v2202
  %v2355 = vadd.f32 %v2353, %v2354
  %2356 = vst [vmem:[#allocation1] ss:$4 sm:$0xff] %v341
  %v2357 = vld.sshfl [vmem:[#allocation1] sm:$0xff pattern:$0x73625140]
  %2358 = vrot.lane.b32.xlu0 %v2357, 96
  %v2359 = vpop.permute.xlu0 %2358
  %v2361 = vmul.f32 %v2196, %v2359
  %2363 = vrot.lane.b32.xlu0 %v2361, 96
  %v2364 = vpop.permute.xlu0 %2363
  %v2365 = vsel %vm565, %v2364, 0
  %2367 = vmatpush.msra.mxu0 0.0
  %2368 = vmatpush.msra.mxu0 0.0
  %2369 = vmatpush.msra.mxu0 0.0
  %2370 = vmatpush.msra.mxu0 0.0
  %2371 = vmatpush.msra.mxu0 0.0
  %2372 = vmatpush.msra.mxu0 0.0
  %2373 = vmatpush.msra.mxu0 0.0
  %2374 = vmatpush.msra.mxu0 0.0
  %2375 = vmatpush.msra.mxu0 0.0
  %2376 = vmatpush.msra.mxu0 0.0
  %2377 = vmatpush.msra.mxu0 0.0
  %2378 = vmatpush.msra.mxu0 0.0
  %2379 = vmatpush.msra.mxu0 %v527
  %2380 = vmatpush.msra.mxu0 %v526
  %2381 = vmatpush.msra.mxu0 %v525
  %2382 = vmatpush.msra.mxu0 %v524
  %2383 = vmatmul.f32.gmra.mxu0 %v2365
  %v2384 = vpop.f32.mrf.mxu0
  %v2385 = vadd.f32 %v737, %v2384
  %2386 = vdwg.mxu0
  %v2387 = vmul.f32 %v1267, %v2385
  %v2388 = vadd.f32 %v1266, %v2387
  %v2390 = vsel %vm300, %v2388, 0
  %2392 = vmatpush.msra.mxu0 0.0
  %2393 = vmatpush.msra.mxu0 0.0
  %2394 = vmatpush.msra.mxu0 0.0
  %2395 = vmatpush.msra.mxu0 0.0
  %2396 = vmatpush.msra.mxu0 0.0
  %2397 = vmatpush.msra.mxu0 0.0
  %2398 = vmatpush.msra.mxu0 0.0
  %2399 = vmatpush.msra.mxu0 0.0
  %2400 = vmatpush.msra.mxu0 0.0
  %2401 = vmatpush.msra.mxu0 0.0
  %2402 = vmatpush.msra.mxu0 0.0
  %2403 = vmatpush.msra.mxu0 0.0
  %2404 = vmatpush.msra.mxu0 0.0
  %2405 = vmatpush.msra.mxu0 0.0
  %2406 = vmatpush.msra.mxu0 %v535
  %2407 = vmatpush.msra.mxu0 %v534
  %2408 = vmatmul.f32.gmra.mxu0 %v2390
  %v2409 = vpop.f32.mrf.mxu0
  %v2410 = vadd.f32 %v771, %v2409
  %2411 = vdwg.mxu0
  %v2412 = vmul.f32 %v500, %v2410
  %v2413 = vsub.f32 1.0, %v500
  %v2414 = vmul.f32 %v2413, %v2385
  %v2415 = vadd.f32 %v2412, %v2414
  %v2416 = vmul.f32 %v1267, %v2415
  %v2417 = vadd.f32 %v1266, %v2416
  %v2418 = vsub.f32 %v58, %v2385
  %v2419 = vand.u32 2147483647, %v2418
  %v2420 = vsub.f32 %v58, %v2410
  %v2421 = vand.u32 2147483647, %v2420
  %v2422 = vadd.f32 %v2419, %v2421
  %v2423 = vsub.f32 %v58, %v2415
  %v2424 = vand.u32 2147483647, %v2423
  %v2425 = vadd.f32 %v2422, %v2424
  %v2426 = vmul.f32 %v2425, %v288
  %v2427 = vadd.f32 %v2109, %v2426
  %2428 = vst [vmem:[#allocation1] ss:$4 sm:$0xff] %v514
  %v2429 = vld.sshfl [vmem:[#allocation1] sm:$0xff pattern:$0x73625140]
  %2430 = vrot.lane.b32.xlu0 %v2429, 112
  %v2431 = vpop.permute.xlu0 %2430
  %v2434 = vsel %vm300, %v2417, 0
  %2436 = vmatpush.msra.mxu0 0.0
  %2437 = vmatpush.msra.mxu0 0.0
  %2438 = vmatpush.msra.mxu0 0.0
  %2439 = vmatpush.msra.mxu0 0.0
  %2440 = vmatpush.msra.mxu0 0.0
  %2441 = vmatpush.msra.mxu0 0.0
  %2442 = vmatpush.msra.mxu0 0.0
  %2443 = vmatpush.msra.mxu0 0.0
  %2444 = vmatpush.msra.mxu0 0.0
  %2445 = vmatpush.msra.mxu0 0.0
  %2446 = vmatpush.msra.mxu0 0.0
  %2447 = vmatpush.msra.mxu0 0.0
  %2448 = vmatpush.msra.mxu0 0.0
  %2449 = vmatpush.msra.mxu0 0.0
  %2450 = vmatpush.msra.mxu0 %v543
  %2451 = vmatpush.msra.mxu0 %v542
  %2452 = vmatmul.f32.gmra.mxu0 %v2434
  %v2453 = vpop.f32.mrf.mxu0
  %v2454 = vadd.f32 %v2431, %v2453
  %2455 = vdwg.mxu0
  %2456 = vmatpush.msra.mxu0 0.0
  %2457 = vmatpush.msra.mxu0 0.0
  %2458 = vmatpush.msra.mxu0 0.0
  %2459 = vmatpush.msra.mxu0 0.0
  %2460 = vmatpush.msra.mxu0 0.0
  %2461 = vmatpush.msra.mxu0 0.0
  %2462 = vmatpush.msra.mxu0 0.0
  %2463 = vmatpush.msra.mxu0 0.0
  %2464 = vmatpush.msra.mxu0 0.0
  %2465 = vmatpush.msra.mxu0 0.0
  %2466 = vmatpush.msra.mxu0 0.0
  %2467 = vmatpush.msra.mxu0 0.0
  %2468 = vmatpush.msra.mxu0 %v552
  %2469 = vmatpush.msra.mxu0 %v551
  %2470 = vmatpush.msra.mxu0 %v550
  %2471 = vmatpush.msra.mxu0 %v549
  %2472 = vmatmul.f32.gmra.mxu0 %v2365
  %v2473 = vpop.f32.mrf.mxu0
  %v2474 = vadd.f32 %v841, %v2473
  %2475 = vdwg.mxu0
  %v2476 = vadd.f32 %v2454, %v2474
  %v2477 = vxor.u32 %v2476, 2147483648
  %v2478 = vmul.f32 %v2477, 1.442695
  %v2479 = vpow.pop %v2478
  %v2480 = vadd.f32 %v2479, 1.0
  %v2481 = vrcp.pop %v2480
  %v2482 = vmul.f32 %v2480, %v2481
  %v2483 = vsub.f32 1.0, %v2482
  %v2484 = vmul.f32 %v2481, %v2483
  %v2485 = vadd.f32 %v2481, %v2484
  %vm2486 = vweird.f32 %v2480
  %vm2487 = vweird.f32 %v2481
  %vm2488 = vmor %vm2486, %vm2487
  %v2489 = vsel %vm2488, %v2481, %v2485
  %v2490 = vand.u32 2147483647, %v2480
  %vm2491 = vcmp.eq.f32.partialorder %v2490, 8.507059e+37
  %v2492 = vand.u32 %v2480, 2147483648
  %v2493 = vor.u32 1.1754944e-38, %v2492
  %v2494 = vsel %vm2491, %v2493, %v2489
  %v2495 = vmul.f32 1.0, %v2494
  %2497 = vrot.lane.b32.xlu0 %v2474, 64
  %v2498 = vpop.permute.xlu0 %2497
  %v2500 = vmul.f32 %v2495, %v2498
  %2502 = vrot.lane.b32.xlu0 %v2500, 64
  %v2503 = vpop.permute.xlu0 %2502
  %v2505 = vadd.f32 %v2454, %v2503
  %v2506 = vtanh.pop %v2505
  %v2507 = vsub.f32 1.0, %v2495
  %2509 = vrot.lane.b32.xlu0 %v2506, 96
  %v2510 = vpop.permute.xlu0 %2509
  %v2512 = vmul.f32 %v2507, %v2510
  %v2513 = vmul.f32 %v2495, %v2361
  %v2514 = vadd.f32 %v2512, %v2513
  %2515 = vst [vmem:[#allocation1] ss:$4 sm:$0xff] %v344
  %v2516 = vld.sshfl [vmem:[#allocation1] sm:$0xff pattern:$0x73625140]
  %2517 = vrot.lane.b32.xlu0 %v2516, 16
  %v2518 = vpop.permute.xlu0 %2517
  %v2520 = vmul.f32 %v2355, %v2518
  %2522 = vrot.lane.b32.xlu0 %v2520, 96
  %v2523 = vpop.permute.xlu0 %2522
  %v2524 = vsel %vm565, %v2523, 0
  %2526 = vmatpush.msra.mxu0 0.0
  %2527 = vmatpush.msra.mxu0 0.0
  %2528 = vmatpush.msra.mxu0 0.0
  %2529 = vmatpush.msra.mxu0 0.0
  %2530 = vmatpush.msra.mxu0 0.0
  %2531 = vmatpush.msra.mxu0 0.0
  %2532 = vmatpush.msra.mxu0 0.0
  %2533 = vmatpush.msra.mxu0 0.0
  %2534 = vmatpush.msra.mxu0 0.0
  %2535 = vmatpush.msra.mxu0 0.0
  %2536 = vmatpush.msra.mxu0 0.0
  %2537 = vmatpush.msra.mxu0 0.0
  %2538 = vmatpush.msra.mxu0 %v522
  %2539 = vmatpush.msra.mxu0 %v521
  %2540 = vmatpush.msra.mxu0 %v520
  %2541 = vmatpush.msra.mxu0 %v519
  %2542 = vmatmul.f32.gmra.mxu0 %v2524
  %v2543 = vpop.f32.mrf.mxu0
  %v2544 = vadd.f32 %v558, %v2543
  %2545 = vdwg.mxu0
  %v2546 = vmul.f32 %v1106, %v2544
  %v2547 = vadd.f32 %v1105, %v2546
  %v2549 = vsel %vm300, %v2547, 0
  %2551 = vmatpush.msra.mxu0 0.0
  %2552 = vmatpush.msra.mxu0 0.0
  %2553 = vmatpush.msra.mxu0 0.0
  %2554 = vmatpush.msra.mxu0 0.0
  %2555 = vmatpush.msra.mxu0 0.0
  %2556 = vmatpush.msra.mxu0 0.0
  %2557 = vmatpush.msra.mxu0 0.0
  %2558 = vmatpush.msra.mxu0 0.0
  %2559 = vmatpush.msra.mxu0 0.0
  %2560 = vmatpush.msra.mxu0 0.0
  %2561 = vmatpush.msra.mxu0 0.0
  %2562 = vmatpush.msra.mxu0 0.0
  %2563 = vmatpush.msra.mxu0 0.0
  %2564 = vmatpush.msra.mxu0 0.0
  %2565 = vmatpush.msra.mxu0 %v532
  %2566 = vmatpush.msra.mxu0 %v531
  %2567 = vmatmul.f32.gmra.mxu0 %v2549
  %v2568 = vpop.f32.mrf.mxu0
  %v2569 = vadd.f32 %v593, %v2568
  %2570 = vdwg.mxu0
  %v2571 = vmul.f32 %v417, %v2569
  %v2572 = vsub.f32 1.0, %v417
  %v2573 = vmul.f32 %v2572, %v2544
  %v2574 = vadd.f32 %v2571, %v2573
  %v2575 = vmul.f32 %v1106, %v2574
  %v2576 = vadd.f32 %v1105, %v2575
  %v2577 = vsub.f32 %v62, %v2544
  %v2578 = vand.u32 2147483647, %v2577
  %v2579 = vsub.f32 %v62, %v2569
  %v2580 = vand.u32 2147483647, %v2579
  %v2581 = vadd.f32 %v2578, %v2580
  %v2582 = vsub.f32 %v62, %v2574
  %v2583 = vand.u32 2147483647, %v2582
  %v2584 = vadd.f32 %v2581, %v2583
  %v2585 = vmul.f32 %v2584, %v292
  %v2586 = vadd.f32 %v2268, %v2585
  %2587 = vst [vmem:[#allocation1] ss:$4 sm:$0xff] %v431
  %v2588 = vld.sshfl [vmem:[#allocation1] sm:$0xff pattern:$0x73625140]
  %2589 = vrot.lane.b32.xlu0 %v2588, 112
  %v2590 = vpop.permute.xlu0 %2589
  %v2593 = vsel %vm300, %v2576, 0
  %2595 = vmatpush.msra.mxu0 0.0
  %2596 = vmatpush.msra.mxu0 0.0
  %2597 = vmatpush.msra.mxu0 0.0
  %2598 = vmatpush.msra.mxu0 0.0
  %2599 = vmatpush.msra.mxu0 0.0
  %2600 = vmatpush.msra.mxu0 0.0
  %2601 = vmatpush.msra.mxu0 0.0
  %2602 = vmatpush.msra.mxu0 0.0
  %2603 = vmatpush.msra.mxu0 0.0
  %2604 = vmatpush.msra.mxu0 0.0
  %2605 = vmatpush.msra.mxu0 0.0
  %2606 = vmatpush.msra.mxu0 0.0
  %2607 = vmatpush.msra.mxu0 0.0
  %2608 = vmatpush.msra.mxu0 0.0
  %2609 = vmatpush.msra.mxu0 %v540
  %2610 = vmatpush.msra.mxu0 %v539
  %2611 = vmatmul.f32.gmra.mxu0 %v2593
  %v2612 = vpop.f32.mrf.mxu0
  %v2613 = vadd.f32 %v2590, %v2612
  %2614 = vdwg.mxu0
  %2615 = vmatpush.msra.mxu0 0.0
  %2616 = vmatpush.msra.mxu0 0.0
  %2617 = vmatpush.msra.mxu0 0.0
  %2618 = vmatpush.msra.mxu0 0.0
  %2619 = vmatpush.msra.mxu0 0.0
  %2620 = vmatpush.msra.mxu0 0.0
  %2621 = vmatpush.msra.mxu0 0.0
  %2622 = vmatpush.msra.mxu0 0.0
  %2623 = vmatpush.msra.mxu0 0.0
  %2624 = vmatpush.msra.mxu0 0.0
  %2625 = vmatpush.msra.mxu0 0.0
  %2626 = vmatpush.msra.mxu0 0.0
  %2627 = vmatpush.msra.mxu0 %v547
  %2628 = vmatpush.msra.mxu0 %v546
  %2629 = vmatpush.msra.mxu0 %v545
  %2630 = vmatpush.msra.mxu0 %v544
  %2631 = vmatmul.f32.gmra.mxu0 %v2524
  %v2632 = vpop.f32.mrf.mxu0
  %v2633 = vadd.f32 %v663, %v2632
  %2634 = vdwg.mxu0
  %v2635 = vadd.f32 %v2613, %v2633
  %v2636 = vxor.u32 %v2635, 2147483648
  %v2637 = vmul.f32 %v2636, 1.442695
  %v2638 = vpow.pop %v2637
  %v2639 = vadd.f32 %v2638, 1.0
  %v2640 = vrcp.pop %v2639
  %v2641 = vmul.f32 %v2639, %v2640
  %v2642 = vsub.f32 1.0, %v2641
  %v2643 = vmul.f32 %v2640, %v2642
  %v2644 = vadd.f32 %v2640, %v2643
  %vm2645 = vweird.f32 %v2639
  %vm2646 = vweird.f32 %v2640
  %vm2647 = vmor %vm2645, %vm2646
  %v2648 = vsel %vm2647, %v2640, %v2644
  %v2649 = vand.u32 2147483647, %v2639
  %vm2650 = vcmp.eq.f32.partialorder %v2649, 8.507059e+37
  %v2651 = vand.u32 %v2639, 2147483648
  %v2652 = vor.u32 1.1754944e-38, %v2651
  %v2653 = vsel %vm2650, %v2652, %v2648
  %v2654 = vmul.f32 1.0, %v2653
  %2656 = vrot.lane.b32.xlu0 %v2633, 64
  %v2657 = vpop.permute.xlu0 %2656
  %v2659 = vmul.f32 %v2654, %v2657
  %2661 = vrot.lane.b32.xlu0 %v2659, 64
  %v2662 = vpop.permute.xlu0 %2661
  %v2664 = vadd.f32 %v2613, %v2662
  %v2665 = vtanh.pop %v2664
  %v2666 = vsub.f32 1.0, %v2654
  %2668 = vrot.lane.b32.xlu0 %v2665, 96
  %v2669 = vpop.permute.xlu0 %2668
  %v2671 = vmul.f32 %v2666, %v2669
  %v2672 = vmul.f32 %v2654, %v2520
  %v2673 = vadd.f32 %v2671, %v2672
  %2674 = vst [vmem:[#allocation1] ss:$4 sm:$0xff] %v340
  %v2675 = vld.sshfl [vmem:[#allocation1] sm:$0xff pattern:$0x73625140]
  %2676 = vrot.lane.b32.xlu0 %v2675, 96
  %v2677 = vpop.permute.xlu0 %2676
  %v2679 = vmul.f32 %v2514, %v2677
  %2681 = vrot.lane.b32.xlu0 %v2679, 96
  %v2682 = vpop.permute.xlu0 %2681
  %v2683 = vsel %vm565, %v2682, 0
  %2685 = vmatpush.msra.mxu0 0.0
  %2686 = vmatpush.msra.mxu0 0.0
  %2687 = vmatpush.msra.mxu0 0.0
  %2688 = vmatpush.msra.mxu0 0.0
  %2689 = vmatpush.msra.mxu0 0.0
  %2690 = vmatpush.msra.mxu0 0.0
  %2691 = vmatpush.msra.mxu0 0.0
  %2692 = vmatpush.msra.mxu0 0.0
  %2693 = vmatpush.msra.mxu0 0.0
  %2694 = vmatpush.msra.mxu0 0.0
  %2695 = vmatpush.msra.mxu0 0.0
  %2696 = vmatpush.msra.mxu0 0.0
  %2697 = vmatpush.msra.mxu0 %v527
  %2698 = vmatpush.msra.mxu0 %v526
  %2699 = vmatpush.msra.mxu0 %v525
  %2700 = vmatpush.msra.mxu0 %v524
  %2701 = vmatmul.f32.gmra.mxu0 %v2683
  %v2702 = vpop.f32.mrf.mxu0
  %v2703 = vadd.f32 %v737, %v2702
  %2704 = vdwg.mxu0
  %v2705 = vmul.f32 %v945, %v2703
  %v2706 = vadd.f32 %v944, %v2705
  %v2708 = vsel %vm300, %v2706, 0
  %2710 = vmatpush.msra.mxu0 0.0
  %2711 = vmatpush.msra.mxu0 0.0
  %2712 = vmatpush.msra.mxu0 0.0
  %2713 = vmatpush.msra.mxu0 0.0
  %2714 = vmatpush.msra.mxu0 0.0
  %2715 = vmatpush.msra.mxu0 0.0
  %2716 = vmatpush.msra.mxu0 0.0
  %2717 = vmatpush.msra.mxu0 0.0
  %2718 = vmatpush.msra.mxu0 0.0
  %2719 = vmatpush.msra.mxu0 0.0
  %2720 = vmatpush.msra.mxu0 0.0
  %2721 = vmatpush.msra.mxu0 0.0
  %2722 = vmatpush.msra.mxu0 0.0
  %2723 = vmatpush.msra.mxu0 0.0
  %2724 = vmatpush.msra.mxu0 %v535
  %2725 = vmatpush.msra.mxu0 %v534
  %2726 = vmatmul.f32.gmra.mxu0 %v2708
  %v2727 = vpop.f32.mrf.mxu0
  %v2728 = vadd.f32 %v771, %v2727
  %2729 = vdwg.mxu0
  %v2730 = vmul.f32 %v499, %v2728
  %v2731 = vsub.f32 1.0, %v499
  %v2732 = vmul.f32 %v2731, %v2703
  %v2733 = vadd.f32 %v2730, %v2732
  %v2734 = vmul.f32 %v945, %v2733
  %v2735 = vadd.f32 %v944, %v2734
  %v2736 = vsub.f32 %v57, %v2703
  %v2737 = vand.u32 2147483647, %v2736
  %v2738 = vsub.f32 %v57, %v2728
  %v2739 = vand.u32 2147483647, %v2738
  %v2740 = vadd.f32 %v2737, %v2739
  %v2741 = vsub.f32 %v57, %v2733
  %v2742 = vand.u32 2147483647, %v2741
  %v2743 = vadd.f32 %v2740, %v2742
  %v2744 = vmul.f32 %v2743, %v287
  %v2745 = vadd.f32 %v2427, %v2744
  %2746 = vst [vmem:[#allocation1] ss:$4 sm:$0xff] %v513
  %v2747 = vld.sshfl [vmem:[#allocation1] sm:$0xff pattern:$0x73625140]
  %2748 = vrot.lane.b32.xlu0 %v2747, 112
  %v2749 = vpop.permute.xlu0 %2748
  %v2752 = vsel %vm300, %v2735, 0
  %2754 = vmatpush.msra.mxu0 0.0
  %2755 = vmatpush.msra.mxu0 0.0
  %2756 = vmatpush.msra.mxu0 0.0
  %2757 = vmatpush.msra.mxu0 0.0
  %2758 = vmatpush.msra.mxu0 0.0
  %2759 = vmatpush.msra.mxu0 0.0
  %2760 = vmatpush.msra.mxu0 0.0
  %2761 = vmatpush.msra.mxu0 0.0
  %2762 = vmatpush.msra.mxu0 0.0
  %2763 = vmatpush.msra.mxu0 0.0
  %2764 = vmatpush.msra.mxu0 0.0
  %2765 = vmatpush.msra.mxu0 0.0
  %2766 = vmatpush.msra.mxu0 0.0
  %2767 = vmatpush.msra.mxu0 0.0
  %2768 = vmatpush.msra.mxu0 %v543
  %2769 = vmatpush.msra.mxu0 %v542
  %2770 = vmatmul.f32.gmra.mxu0 %v2752
  %v2771 = vpop.f32.mrf.mxu0
  %v2772 = vadd.f32 %v2749, %v2771
  %2773 = vdwg.mxu0
  %2774 = vmatpush.msra.mxu0 0.0
  %2775 = vmatpush.msra.mxu0 0.0
  %2776 = vmatpush.msra.mxu0 0.0
  %2777 = vmatpush.msra.mxu0 0.0
  %2778 = vmatpush.msra.mxu0 0.0
  %2779 = vmatpush.msra.mxu0 0.0
  %2780 = vmatpush.msra.mxu0 0.0
  %2781 = vmatpush.msra.mxu0 0.0
  %2782 = vmatpush.msra.mxu0 0.0
  %2783 = vmatpush.msra.mxu0 0.0
  %2784 = vmatpush.msra.mxu0 0.0
  %2785 = vmatpush.msra.mxu0 0.0
  %2786 = vmatpush.msra.mxu0 %v552
  %2787 = vmatpush.msra.mxu0 %v551
  %2788 = vmatpush.msra.mxu0 %v550
  %2789 = vmatpush.msra.mxu0 %v549
  %2790 = vmatmul.f32.gmra.mxu0 %v2683
  %v2791 = vpop.f32.mrf.mxu0
  %v2792 = vadd.f32 %v841, %v2791
  %2793 = vdwg.mxu0
  %v2794 = vadd.f32 %v2772, %v2792
  %v2795 = vxor.u32 %v2794, 2147483648
  %v2796 = vmul.f32 %v2795, 1.442695
  %v2797 = vpow.pop %v2796
  %v2798 = vadd.f32 %v2797, 1.0
  %v2799 = vrcp.pop %v2798
  %v2800 = vmul.f32 %v2798, %v2799
  %v2801 = vsub.f32 1.0, %v2800
  %v2802 = vmul.f32 %v2799, %v2801
  %v2803 = vadd.f32 %v2799, %v2802
  %vm2804 = vweird.f32 %v2798
  %vm2805 = vweird.f32 %v2799
  %vm2806 = vmor %vm2804, %vm2805
  %v2807 = vsel %vm2806, %v2799, %v2803
  %v2808 = vand.u32 2147483647, %v2798
  %vm2809 = vcmp.eq.f32.partialorder %v2808, 8.507059e+37
  %v2810 = vand.u32 %v2798, 2147483648
  %v2811 = vor.u32 1.1754944e-38, %v2810
  %v2812 = vsel %vm2809, %v2811, %v2807
  %v2813 = vmul.f32 1.0, %v2812
  %2815 = vrot.lane.b32.xlu0 %v2792, 64
  %v2816 = vpop.permute.xlu0 %2815
  %v2818 = vmul.f32 %v2813, %v2816
  %2820 = vrot.lane.b32.xlu0 %v2818, 64
  %v2821 = vpop.permute.xlu0 %2820
  %v2823 = vadd.f32 %v2772, %v2821
  %v2824 = vtanh.pop %v2823
  %v2825 = vsub.f32 1.0, %v2813
  %2827 = vrot.lane.b32.xlu0 %v2824, 96
  %v2828 = vpop.permute.xlu0 %2827
  %v2830 = vmul.f32 %v2825, %v2828
  %v2831 = vmul.f32 %v2813, %v2679
  %v2832 = vadd.f32 %v2830, %v2831
  %2833 = vst [vmem:[#allocation1] ss:$4 sm:$0xff] %v345
  %v2834 = vld.sshfl [vmem:[#allocation1] sm:$0xff pattern:$0x73625140]
  %2835 = vrot.lane.b32.xlu0 %v2834, 16
  %v2836 = vpop.permute.xlu0 %2835
  %v2838 = vmul.f32 %v2673, %v2836
  %2840 = vrot.lane.b32.xlu0 %v2838, 96
  %v2841 = vpop.permute.xlu0 %2840
  %v2842 = vsel %vm565, %v2841, 0
  %2844 = vmatpush.msra.mxu0 0.0
  %2845 = vmatpush.msra.mxu0 0.0
  %2846 = vmatpush.msra.mxu0 0.0
  %2847 = vmatpush.msra.mxu0 0.0
  %2848 = vmatpush.msra.mxu0 0.0
  %2849 = vmatpush.msra.mxu0 0.0
  %2850 = vmatpush.msra.mxu0 0.0
  %2851 = vmatpush.msra.mxu0 0.0
  %2852 = vmatpush.msra.mxu0 0.0
  %2853 = vmatpush.msra.mxu0 0.0
  %2854 = vmatpush.msra.mxu0 0.0
  %2855 = vmatpush.msra.mxu0 0.0
  %2856 = vmatpush.msra.mxu0 %v522
  %2857 = vmatpush.msra.mxu0 %v521
  %2858 = vmatpush.msra.mxu0 %v520
  %2859 = vmatpush.msra.mxu0 %v519
  %2860 = vmatmul.f32.gmra.mxu0 %v2842
  %v2861 = vpop.f32.mrf.mxu0
  %v2862 = vadd.f32 %v558, %v2861
  %2863 = vdwg.mxu0
  %v2864 = vmul.f32 %v767, %v2862
  %v2865 = vadd.f32 %v766, %v2864
  %v2867 = vsel %vm300, %v2865, 0
  %2869 = vmatpush.msra.mxu0 0.0
  %2870 = vmatpush.msra.mxu0 0.0
  %2871 = vmatpush.msra.mxu0 0.0
  %2872 = vmatpush.msra.mxu0 0.0
  %2873 = vmatpush.msra.mxu0 0.0
  %2874 = vmatpush.msra.mxu0 0.0
  %2875 = vmatpush.msra.mxu0 0.0
  %2876 = vmatpush.msra.mxu0 0.0
  %2877 = vmatpush.msra.mxu0 0.0
  %2878 = vmatpush.msra.mxu0 0.0
  %2879 = vmatpush.msra.mxu0 0.0
  %2880 = vmatpush.msra.mxu0 0.0
  %2881 = vmatpush.msra.mxu0 0.0
  %2882 = vmatpush.msra.mxu0 0.0
  %2883 = vmatpush.msra.mxu0 %v532
  %2884 = vmatpush.msra.mxu0 %v531
  %2885 = vmatmul.f32.gmra.mxu0 %v2867
  %v2886 = vpop.f32.mrf.mxu0
  %v2887 = vadd.f32 %v593, %v2886
  %2888 = vdwg.mxu0
  %v2889 = vmul.f32 %v418, %v2887
  %v2890 = vsub.f32 1.0, %v418
  %v2891 = vmul.f32 %v2890, %v2862
  %v2892 = vadd.f32 %v2889, %v2891
  %v2893 = vmul.f32 %v767, %v2892
  %v2894 = vadd.f32 %v766, %v2893
  %v2895 = vsub.f32 %v63, %v2862
  %v2896 = vand.u32 2147483647, %v2895
  %v2897 = vsub.f32 %v63, %v2887
  %v2898 = vand.u32 2147483647, %v2897
  %v2899 = vadd.f32 %v2896, %v2898
  %v2900 = vsub.f32 %v63, %v2892
  %v2901 = vand.u32 2147483647, %v2900
  %v2902 = vadd.f32 %v2899, %v2901
  %v2903 = vmul.f32 %v2902, %v293
  %v2904 = vadd.f32 %v2586, %v2903
  %2905 = vst [vmem:[#allocation1] ss:$4 sm:$0xff] %v335
  %v2906 = vld.sshfl [vmem:[#allocation1] sm:$0xff pattern:$0x73625140]
  %2907 = vrot.lane.b32.xlu0 %v2906, 96
  %v2908 = vpop.permute.xlu0 %2907
  %v2910 = vmul.f32 %v2832, %v2908
  %2912 = vrot.lane.b32.xlu0 %v2910, 96
  %v2913 = vpop.permute.xlu0 %2912
  %v2914 = vsel %vm565, %v2913, 0
  %2916 = vmatpush.msra.mxu0 0.0
  %2917 = vmatpush.msra.mxu0 0.0
  %2918 = vmatpush.msra.mxu0 0.0
  %2919 = vmatpush.msra.mxu0 0.0
  %2920 = vmatpush.msra.mxu0 0.0
  %2921 = vmatpush.msra.mxu0 0.0
  %2922 = vmatpush.msra.mxu0 0.0
  %2923 = vmatpush.msra.mxu0 0.0
  %2924 = vmatpush.msra.mxu0 0.0
  %2925 = vmatpush.msra.mxu0 0.0
  %2926 = vmatpush.msra.mxu0 0.0
  %2927 = vmatpush.msra.mxu0 0.0
  %2928 = vmatpush.msra.mxu0 %v527
  %2929 = vmatpush.msra.mxu0 %v526
  %2930 = vmatpush.msra.mxu0 %v525
  %2931 = vmatpush.msra.mxu0 %v524
  %2932 = vmatmul.f32.gmra.mxu0 %v2914
  %v2933 = vpop.f32.mrf.mxu0
  %v2934 = vadd.f32 %v737, %v2933
  %2935 = vdwg.mxu0
  %v2936 = vmul.f32 %v589, %v2934
  %v2937 = vadd.f32 %v588, %v2936
  %v2939 = vsel %vm300, %v2937, 0
  %2941 = vmatpush.msra.mxu0 0.0
  %2942 = vmatpush.msra.mxu0 0.0
  %2943 = vmatpush.msra.mxu0 0.0
  %2944 = vmatpush.msra.mxu0 0.0
  %2945 = vmatpush.msra.mxu0 0.0
  %2946 = vmatpush.msra.mxu0 0.0
  %2947 = vmatpush.msra.mxu0 0.0
  %2948 = vmatpush.msra.mxu0 0.0
  %2949 = vmatpush.msra.mxu0 0.0
  %2950 = vmatpush.msra.mxu0 0.0
  %2951 = vmatpush.msra.mxu0 0.0
  %2952 = vmatpush.msra.mxu0 0.0
  %2953 = vmatpush.msra.mxu0 0.0
  %2954 = vmatpush.msra.mxu0 0.0
  %2955 = vmatpush.msra.mxu0 %v535
  %2956 = vmatpush.msra.mxu0 %v534
  %2957 = vmatmul.f32.gmra.mxu0 %v2939
  %v2958 = vpop.f32.mrf.mxu0
  %v2959 = vadd.f32 %v771, %v2958
  %2960 = vdwg.mxu0
  %v2961 = vmul.f32 %v492, %v2959
  %v2962 = vsub.f32 1.0, %v492
  %v2963 = vmul.f32 %v2962, %v2934
  %v2964 = vadd.f32 %v2961, %v2963
  %v2965 = vmul.f32 %v589, %v2964
  %v2966 = vadd.f32 %v588, %v2965
  %v2967 = vsub.f32 %v56, %v2934
  %v2968 = vand.u32 2147483647, %v2967
  %v2969 = vsub.f32 %v56, %v2959
  %v2970 = vand.u32 2147483647, %v2969
  %v2971 = vadd.f32 %v2968, %v2970
  %v2972 = vsub.f32 %v56, %v2964
  %v2973 = vand.u32 2147483647, %v2972
  %v2974 = vadd.f32 %v2971, %v2973
  %v2975 = vmul.f32 %v2974, %v286
  %v2976 = vadd.f32 %v2745, %v2975
  %2978 = vst [vmem:[#allocation1] ss:$4 sm:$0xff] %v974
  %v2979 = vld.sshfl [vmem:[#allocation1] sm:$0xff pattern:$0x73625140]
  %2980 = vrot.lane.b32.xlu0 %v2979, 16
  %v2981 = vpop.permute.xlu0 %2980
  %2984 = vst [vmem:[#allocation1] ss:$4 sm:$0xff] %v1296
  %v2985 = vld.sshfl [vmem:[#allocation1] sm:$0xff pattern:$0x73625140]
  %2986 = vrot.lane.b32.xlu0 %v2985, 32
  %v2987 = vpop.permute.xlu0 %2986
  %2990 = vst [vmem:[#allocation1] ss:$4 sm:$0xff] %v1618
  %v2991 = vld.sshfl [vmem:[#allocation1] sm:$0xff pattern:$0x73625140]
  %2992 = vrot.lane.b32.xlu0 %v2991, 48
  %v2993 = vpop.permute.xlu0 %2992
  %2996 = vst [vmem:[#allocation1] ss:$4 sm:$0xff] %v1938
  %v2997 = vld.sshfl [vmem:[#allocation1] sm:$0xff pattern:$0x73625140]
  %2998 = vrot.lane.b32.xlu0 %v2997, 64
  %v2999 = vpop.permute.xlu0 %2998
  %3002 = vst [vmem:[#allocation1] ss:$4 sm:$0xff] %v2256
  %v3003 = vld.sshfl [vmem:[#allocation1] sm:$0xff pattern:$0x73625140]
  %3004 = vrot.lane.b32.xlu0 %v3003, 80
  %v3005 = vpop.permute.xlu0 %3004
  %3008 = vst [vmem:[#allocation1] ss:$4 sm:$0xff] %v2574
  %v3009 = vld.sshfl [vmem:[#allocation1] sm:$0xff pattern:$0x73625140]
  %3010 = vrot.lane.b32.xlu0 %v3009, 96
  %v3011 = vpop.permute.xlu0 %3010
  %3014 = vst [vmem:[#allocation1] ss:$4 sm:$0xff] %v2892
  %v3015 = vld.sshfl [vmem:[#allocation1] sm:$0xff pattern:$0x73625140]
  %3016 = vrot.lane.b32.xlu0 %v3015, 112
  %v3017 = vpop.permute.xlu0 %3016
  %v3019 = vsel %vm300, %v621, %v2981
  %v3020 = vsel %vm565, %v3019, %v2987
  %vm3021 = vcmask 392192
  %v3022 = vsel %vm3021, %v3020, %v2993
  %vm3023 = vcmask 523264
  %v3024 = vsel %vm3023, %v3022, %v2999
  %vm3025 = vcmask 654336
  %v3026 = vsel %vm3025, %v3024, %v3005
  %vm3027 = vcmask 785408
  %v3028 = vsel %vm3027, %v3026, %v3011
  %vm3029 = vcmask 916480
  %v3030 = vsel %vm3029, %v3028, %v3017
  %3032 = vst [vmem:[#allocation1] ss:$4 sm:$0xff] %v2733
  %v3033 = vld.sshfl [vmem:[#allocation1] sm:$0xff pattern:$0x73625140]
  %3034 = vrot.lane.b32.xlu0 %v3033, 16
  %v3035 = vpop.permute.xlu0 %3034
  %3038 = vst [vmem:[#allocation1] ss:$4 sm:$0xff] %v2415
  %v3039 = vld.sshfl [vmem:[#allocation1] sm:$0xff pattern:$0x73625140]
  %3040 = vrot.lane.b32.xlu0 %v3039, 32
  %v3041 = vpop.permute.xlu0 %3040
  %3044 = vst [vmem:[#allocation1] ss:$4 sm:$0xff] %v2097
  %v3045 = vld.sshfl [vmem:[#allocation1] sm:$0xff pattern:$0x73625140]
  %3046 = vrot.lane.b32.xlu0 %v3045, 48
  %v3047 = vpop.permute.xlu0 %3046
  %3050 = vst [vmem:[#allocation1] ss:$4 sm:$0xff] %v1779
  %v3051 = vld.sshfl [vmem:[#allocation1] sm:$0xff pattern:$0x73625140]
  %3052 = vrot.lane.b32.xlu0 %v3051, 64
  %v3053 = vpop.permute.xlu0 %3052
  %3056 = vst [vmem:[#allocation1] ss:$4 sm:$0xff] %v1457
  %v3057 = vld.sshfl [vmem:[#allocation1] sm:$0xff pattern:$0x73625140]
  %3058 = vrot.lane.b32.xlu0 %v3057, 80
  %v3059 = vpop.permute.xlu0 %3058
  %3062 = vst [vmem:[#allocation1] ss:$4 sm:$0xff] %v1135
  %v3063 = vld.sshfl [vmem:[#allocation1] sm:$0xff pattern:$0x73625140]
  %3064 = vrot.lane.b32.xlu0 %v3063, 96
  %v3065 = vpop.permute.xlu0 %3064
  %3068 = vst [vmem:[#allocation1] ss:$4 sm:$0xff] %v799
  %v3069 = vld.sshfl [vmem:[#allocation1] sm:$0xff pattern:$0x73625140]
  %3070 = vrot.lane.b32.xlu0 %v3069, 112
  %v3071 = vpop.permute.xlu0 %3070
  %v3073 = vsel %vm300, %v2964, %v3035
  %v3074 = vsel %vm565, %v3073, %v3041
  %v3075 = vsel %vm3021, %v3074, %v3047
  %v3076 = vsel %vm3023, %v3075, %v3053
  %v3077 = vsel %vm3025, %v3076, %v3059
  %v3078 = vsel %vm3027, %v3077, %v3065
  %v3079 = vsel %vm3029, %v3078, %v3071
  %3080 = vrot.lane.b32.xlu0 %v976, 16
  %v3081 = vpop.permute.xlu0 %3080
  %3083 = vrot.lane.b32.xlu0 %v1298, 32
  %v3084 = vpop.permute.xlu0 %3083
  %3086 = vrot.lane.b32.xlu0 %v1620, 48
  %v3087 = vpop.permute.xlu0 %3086
  %3089 = vrot.lane.b32.xlu0 %v1940, 64
  %v3090 = vpop.permute.xlu0 %3089
  %3092 = vrot.lane.b32.xlu0 %v2258, 80
  %v3093 = vpop.permute.xlu0 %3092
  %3095 = vrot.lane.b32.xlu0 %v2576, 96
  %v3096 = vpop.permute.xlu0 %3095
  %3099 = vrot.lane.b32.xlu0 %v2894, 112
  %v3100 = vpop.permute.xlu0 %3099
  %v3102 = vsel %vm300, %v623, %v3081
  %v3103 = vsel %vm565, %v3102, %v3084
  %v3104 = vsel %vm3021, %v3103, %v3087
  %v3105 = vsel %vm3023, %v3104, %v3090
  %v3106 = vsel %vm3025, %v3105, %v3093
  %v3107 = vsel %vm3027, %v3106, %v3096
  %v3108 = vsel %vm3029, %v3107, %v3100
  %3109 = vrot.lane.b32.xlu0 %v2735, 16
  %v3110 = vpop.permute.xlu0 %3109
  %3112 = vrot.lane.b32.xlu0 %v2417, 32
  %v3113 = vpop.permute.xlu0 %3112
  %3115 = vrot.lane.b32.xlu0 %v2099, 48
  %v3116 = vpop.permute.xlu0 %3115
  %3118 = vrot.lane.b32.xlu0 %v1781, 64
  %v3119 = vpop.permute.xlu0 %3118
  %3121 = vrot.lane.b32.xlu0 %v1459, 80
  %v3122 = vpop.permute.xlu0 %3121
  %3124 = vrot.lane.b32.xlu0 %v1137, 96
  %v3125 = vpop.permute.xlu0 %3124
  %3127 = vrot.lane.b32.xlu0 %v801, 112
  %v3128 = vpop.permute.xlu0 %3127
  %v3130 = vsel %vm300, %v2966, %v3110
  %v3131 = vsel %vm565, %v3130, %v3113
  %v3132 = vsel %vm3021, %v3131, %v3116
  %v3133 = vsel %vm3023, %v3132, %v3119
  %v3134 = vsel %vm3025, %v3133, %v3122
  %v3135 = vsel %vm3027, %v3134, %v3125
  %v3136 = vsel %vm3029, %v3135, %v3128
  %v3137 = vsub.f32 %v3030, %v3079
  %v3138 = vmul.f32 %v3137, %v3137
  %v3139 = vsel %vm101, %v3138, 0.0
  %3140 = vadd.xlane.f32.xlu0 %v3139
  %v3141 = vpop.xlane.xlu0 %3140
  %v3142 = vrot.slane %v3141, 4
  %v3143 = vadd.f32 %v3141, %v3142
  %v3144 = vrot.slane %v3143, 2
  %v3145 = vadd.f32 %v3143, %v3144
  %v3146 = vrot.slane %v3145, 1
  %v3147 = vadd.f32 %v3145, %v3146
  %s3148 = vtos %v3147
  %s3149 = smul.f32 %s3148, 0.00390625
  %v3150 = vsel %vm76, %v2904, 0.0
  %3151 = vadd.xlane.f32.xlu0 %v3150
  %v3152 = vpop.xlane.xlu0 %3151
  %v3153 = vrot.slane %v3152, 4
  %v3154 = vadd.f32 %v3152, %v3153
  %v3155 = vrot.slane %v3154, 2
  %v3156 = vadd.f32 %v3154, %v3155
  %v3157 = vrot.slane %v3156, 1
  %v3158 = vadd.f32 %v3156, %v3157
  %s3159 = vtos %v3158
  %v3160 = vsel %vm76, %v2976, 0.0
  %3161 = vadd.xlane.f32.xlu0 %v3160
  %v3162 = vpop.xlane.xlu0 %3161
  %v3163 = vrot.slane %v3162, 4
  %v3164 = vadd.f32 %v3162, %v3163
  %v3165 = vrot.slane %v3164, 2
  %v3166 = vadd.f32 %v3164, %v3165
  %v3167 = vrot.slane %v3166, 1
  %v3168 = vadd.f32 %v3166, %v3167
  %s3169 = vtos %v3168
  %s3170 = sadd.f32 %s3159, %s3169
  %s3171 = sadd.f32 %s3170, %s3149
  %v3172 = vadd.f32 %v3030, %v3079
  %v3173 = vmul.f32 %v3172, 0.5
  %3174 = vst [vmem:[%s17] sm:$0x3] %v3173
  %v3175 = vadd.f32 %v3108, %v3136
  %v3176 = vmul.f32 %v3175, 0.5
  %3177 = vst [vmem:[%s18] sm:$0x3] %v3176
  %v3178 = vstv %s3171
  %v3179 = vadd.f32 %v3178, 0.0
  %v3180 = vstv %s3159
  %v3181 = vadd.f32 %v3180, 0.0
  %v3182 = vstv %s3169
  %v3183 = vadd.f32 %v3182, 0.0
  %v3184 = vstv %s3149
  %v3185 = vadd.f32 %v3184, 0.0
  %vm3186 = vcmask 7168
  %v3187 = vsel %vm3186, %v3179, %v3181
  %vm3188 = vcmask 15360
  %v3189 = vsel %vm3188, %v3187, %v3183
  %vm3190 = vcmask 23552
  %v3191 = vsel %vm3190, %v3189, %v3185
  %vm3192 = vcmask 24576
  %3193 = vst.msk [vmem:[%s16] sm:$0x1] %vm3192, %v3191
  // Predicated region
  $region66: #{bimgru_forward.1} parent=0 // pred_check
    _
  $region67: #{bimgru_forward.1} parent=0 // pred_check_branch
    %3195 = sbr.rel (0) target = $region69
  $region68: #{bimgru_forward.1} parent=0 // pred_region
    _
  $region69: #{bimgru_forward.1} parent=0 // pred_fallthru
    _
  // Predicated region
  $region70: #{bimgru_forward.1} parent=0 // pred_check
    _
  $region71: #{bimgru_forward.1} parent=0 // pred_check_branch
    %3197 = sbr.rel (0) target = $region73
  $region72: #{bimgru_forward.1} parent=0 // pred_region
    _
  $region73: #{bimgru_forward.1} parent=0 // pred_fallthru
    _
  // Predicated region
  $region74: #{bimgru_forward.1} parent=0 // pred_check
    _
  $region75: #{bimgru_forward.1} parent=0 // pred_check_branch
    %3199 = sbr.rel (0) target = $region77
  $region76: #{bimgru_forward.1} parent=0 // pred_region
    _
  $region77: #{bimgru_forward.1} parent=0 // pred_fallthru
    _
  // Predicated region
  $region78: #{bimgru_forward.1} parent=0 // pred_check
    _
  $region79: #{bimgru_forward.1} parent=0 // pred_check_branch
    %3201 = sbr.rel (0) target = $region81
  $region80: #{bimgru_forward.1} parent=0 // pred_region
    _
  $region81: #{bimgru_forward.1} parent=0 // pred_fallthru
    _
  // Predicated region
  $region82: #{bimgru_forward.1} parent=0 // pred_check
    _
  $region83: #{bimgru_forward.1} parent=0 // pred_check_branch
    %3203 = sbr.rel (0) target = $region85
  $region84: #{bimgru_forward.1} parent=0 // pred_region
    _
  $region85: #{bimgru_forward.1} parent=0 // pred_fallthru
    _
  // Predicated region
  $region86: #{bimgru_forward.1} parent=0 // pred_check
    _
  $region87: #{bimgru_forward.1} parent=0 // pred_check_branch
    %3205 = sbr.rel (0) target = $region89
  $region88: #{bimgru_forward.1} parent=0 // pred_region
    _
  $region89: #{bimgru_forward.1} parent=0 // pred_fallthru
    _

</llo_original>
